<compile_context>
chip_gen: v7x
topology: tpu7x:2x2x1
jax: 0.10.0
libtpu: 0.0.40
codegen_flags: <defaults>
</compile_context>

<pallas_src>
import jax
import jax.numpy as jnp
from jax.experimental import pallas as pl
from jax.experimental.pallas import tpu as pltpu


def _row_conv(src_ref, w_ref, oh, out_w):
    """One output row of a VALID, stride-1 convolution.

    src_ref: (H_in, W_in, C_in) VMEM ref (NHWC, batch squeezed / scratch).
    w_ref:   (kH, kW, C_in, C_out) VMEM ref.
    oh:      dynamic output-row index.
    Returns (out_w, C_out) float32 accumulator.
    """
    kh, kw = w_ref.shape[0], w_ref.shape[1]
    acc = jnp.zeros((out_w, w_ref.shape[3]), jnp.float32)
    for dh in range(kh):                      # static, tiny unroll (<= 5)
        for dw in range(kw):
            row = src_ref[oh + dh, pl.ds(dw, out_w), :].astype(jnp.float32)
            acc = acc + jax.lax.dot_general(
                row, w_ref[dh, dw],
                dimension_numbers=(((1,), (0,)), ((), ())),
                preferred_element_type=jnp.float32)
    return acc


def _tfblock_kernel(x_ref, w1_ref, s1_ref, b1_ref,
                    w2_ref, s2_ref, b2_ref, w3_ref,
                    o_ref, h1_ref, h2_ref):
    neg = jnp.float32(0.2)

    # Zero the padded intermediate buffers every step (their borders are the
    # implicit full-padding of the stride-1 transposed convolutions).
    h1_ref[...] = jnp.zeros_like(h1_ref)
    h2_ref[...] = jnp.zeros_like(h2_ref)

    # ---------------- Stage 1: encoder Conv2d(4,2) + BN1 + LeakyReLU -------
    H1 = x_ref.shape[0] - w1_ref.shape[0] + 1
    W1 = x_ref.shape[1] - w1_ref.shape[1] + 1
    p1h = w2_ref.shape[0] - 1
    p1w = w2_ref.shape[1] - 1

    def stage1_row(oh, carry):
        acc = _row_conv(x_ref, w1_ref, oh, W1)
        y = acc * s1_ref[...] + b1_ref[...]
        y = jnp.where(y >= 0.0, y, neg * y)
        h1_ref[oh + p1h, pl.ds(p1w, W1), :] = y
        return carry

    jax.lax.fori_loop(0, H1, stage1_row, 0)

    # ------------- Stage 2: decoder ConvTranspose(3,3) + BN2 + LeakyReLU ---
    H2 = h1_ref.shape[0] - w2_ref.shape[0] + 1
    W2 = h1_ref.shape[1] - w2_ref.shape[1] + 1
    p2h = w3_ref.shape[0] - 1
    p2w = w3_ref.shape[1] - 1

    def stage2_row(oh, carry):
        acc = _row_conv(h1_ref, w2_ref, oh, W2)
        y = acc * s2_ref[...] + b2_ref[...]
        y = jnp.where(y >= 0.0, y, neg * y)
        h2_ref[oh + p2h, pl.ds(p2w, W2), :] = y
        return carry

    jax.lax.fori_loop(0, H2, stage2_row, 0)

    # ------------- Stage 3: decoder1 ConvTranspose(5,5) + Sigmoid ----------
    H3 = o_ref.shape[0]
    W3 = o_ref.shape[1]

    def stage3_row(oh, carry):
        acc = _row_conv(h2_ref, w3_ref, oh, W3)
        y = 1.0 / (1.0 + jnp.exp(-acc))
        o_ref[oh, :, :] = y.astype(o_ref.dtype)
        return carry

    jax.lax.fori_loop(0, H3, stage3_row, 0)


def tfblock_v3_forward(x_nchw, params):
    """Forward pass of TFblock_v3 (inference-mode BN). x_nchw: (B,Cin,H,W)."""
    w1 = params["enc_w"]     # (Cmid, Cin, 4, 2)   Conv2d OIHW
    w2 = params["dec_w"]     # (Cmid, Chalf, 3, 3) ConvTranspose2d IOHW
    w3 = params["dec1_w"]    # (Chalf, Cin, 5, 5)  ConvTranspose2d IOHW
    eps = jnp.float32(1e-5)

    # Fold BatchNorm (eval mode) to per-channel scale / bias.
    s1 = params["bn1_gamma"] / jnp.sqrt(params["bn1_var"] + eps)
    b1 = params["bn1_beta"] - params["bn1_mean"] * s1
    s2 = params["bn2_gamma"] / jnp.sqrt(params["bn2_var"] + eps)
    b2 = params["bn2_beta"] - params["bn2_mean"] * s2

    # Conv weight -> HWIO.  ConvTranspose weight -> spatially flipped HWIO so
    # that the stride-1/pad-0 transposed conv becomes a VALID convolution
    # over an input zero-padded by (k-1) on each side.
    w1_h = jnp.transpose(w1, (2, 3, 1, 0))                    # (4,2,Cin,Cmid)
    w2_h = jnp.transpose(w2[:, :, ::-1, ::-1], (2, 3, 0, 1))  # (3,3,Cmid,Chalf)
    w3_h = jnp.transpose(w3[:, :, ::-1, ::-1], (2, 3, 0, 1))  # (5,5,Chalf,Cin)

    B, Cin, H, W = x_nchw.shape
    Cmid = w1.shape[0]
    Chalf = w2.shape[1]
    kh1, kw1 = w1.shape[2], w1.shape[3]
    kh2, kw2 = w2.shape[2], w2.shape[3]
    kh3, kw3 = w3.shape[2], w3.shape[3]

    H1, W1 = H - kh1 + 1, W - kw1 + 1            # encoder output
    H2, W2 = H1 + kh2 - 1, W1 + kw2 - 1          # decoder output
    H3, W3 = H2 + kh3 - 1, W2 + kw3 - 1          # decoder1 output

    x_nhwc = jnp.transpose(x_nchw, (0, 2, 3, 1)).astype(jnp.float32)

    out_nhwc = pl.pallas_call(
        _tfblock_kernel,
        out_shape=jax.ShapeDtypeStruct((B, H3, W3, Cin), jnp.float32),
        grid_spec=pltpu.PrefetchScalarGridSpec(
            num_scalar_prefetch=0,
            grid=(B,),
            in_specs=[
                pl.BlockSpec((None, H, W, Cin), lambda b: (b, 0, 0, 0)),
                pl.BlockSpec((kh1, kw1, Cin, Cmid), lambda b: (0, 0, 0, 0)),
                pl.BlockSpec((1, Cmid), lambda b: (0, 0)),
                pl.BlockSpec((1, Cmid), lambda b: (0, 0)),
                pl.BlockSpec((kh2, kw2, Cmid, Chalf), lambda b: (0, 0, 0, 0)),
                pl.BlockSpec((1, Chalf), lambda b: (0, 0)),
                pl.BlockSpec((1, Chalf), lambda b: (0, 0)),
                pl.BlockSpec((kh3, kw3, Chalf, Cin), lambda b: (0, 0, 0, 0)),
            ],
            out_specs=pl.BlockSpec((None, H3, W3, Cin), lambda b: (b, 0, 0, 0)),
            scratch_shapes=[
                # zero-padded intermediates kept entirely in VMEM
                pltpu.VMEM((H1 + 2 * (kh2 - 1), W1 + 2 * (kw2 - 1), Cmid),
                           jnp.float32),
                pltpu.VMEM((H2 + 2 * (kh3 - 1), W2 + 2 * (kw3 - 1), Chalf),
                           jnp.float32),
            ],
        ),
        compiler_params=pltpu.CompilerParams(
            dimension_semantics=("parallel",)),
    )(x_nhwc,
      w1_h.astype(jnp.float32),
      s1.reshape(1, Cmid).astype(jnp.float32),
      b1.reshape(1, Cmid).astype(jnp.float32),
      w2_h.astype(jnp.float32),
      s2.reshape(1, Chalf).astype(jnp.float32),
      b2.reshape(1, Chalf).astype(jnp.float32),
      w3_h.astype(jnp.float32))

    return jnp.transpose(out_nhwc, (0, 3, 1, 2))  # back to NCHW


# ---------------------------- pure-JAX reference ----------------------------
def _tfblock_v3_ref(x, params):
    eps = 1e-5

    def bn(y, g, b, m, v):
        return ((y - m[None, :, None, None])
                / jnp.sqrt(v[None, :, None, None] + eps)
                * g[None, :, None, None] + b[None, :, None, None])

    def lrelu(y):
        return jnp.where(y >= 0, y, 0.2 * y)

    def conv_transpose(y, w_pt):
        # stride-1 / pad-0 ConvTranspose2d == full correlation with the
        # spatially flipped kernel (in/out channels swapped).
        kh, kw = w_pt.shape[2], w_pt.shape[3]
        w_conv = jnp.transpose(w_pt[:, :, ::-1, ::-1], (1, 0, 2, 3))  # OIHW
        return jax.lax.conv_general_dilated(
            y, w_conv, (1, 1), [(kh - 1, kh - 1), (kw - 1, kw - 1)],
            dimension_numbers=("NCHW", "OIHW", "NCHW"),
            precision=jax.lax.Precision.HIGHEST)

    y = jax.lax.conv_general_dilated(
        x, params["enc_w"], (1, 1), "VALID",
        dimension_numbers=("NCHW", "OIHW", "NCHW"),
        precision=jax.lax.Precision.HIGHEST)
    y = lrelu(bn(y, params["bn1_gamma"], params["bn1_beta"],
                 params["bn1_mean"], params["bn1_var"]))
    y = conv_transpose(y, params["dec_w"])
    y = lrelu(bn(y, params["bn2_gamma"], params["bn2_beta"],
                 params["bn2_mean"], params["bn2_var"]))
    y = conv_transpose(y, params["dec1_w"])
    return jax.nn.sigmoid(y)


if __name__ == "__main__":
    key = jax.random.PRNGKey(0)
    keys = jax.random.split(key, 12)

    # Small shapes consistent with the module (scaled-down dim_in/dim_inter).
    B, Cin, H, W = 2, 32, 6, 6
    Cmid = 64
    Chalf = (Cin + Cmid) // 2   # (dim_in + dim_inter) // 2

    def rnd(k, shape, scale=0.05):
        return scale * jax.random.normal(k, shape, dtype=jnp.float32)

    params = {
        "enc_w":     rnd(keys[0], (Cmid, Cin, 4, 2)),
        "bn1_gamma": 1.0 + rnd(keys[1], (Cmid,)),
        "bn1_beta":  rnd(keys[2], (Cmid,)),
        "bn1_mean":  rnd(keys[3], (Cmid,)),
        "bn1_var":   jnp.abs(1.0 + rnd(keys[4], (Cmid,))),
        "dec_w":     rnd(keys[5], (Cmid, Chalf, 3, 3)),
        "bn2_gamma": 1.0 + rnd(keys[6], (Chalf,)),
        "bn2_beta":  rnd(keys[7], (Chalf,)),
        "bn2_mean":  rnd(keys[8], (Chalf,)),
        "bn2_var":   jnp.abs(1.0 + rnd(keys[9], (Chalf,))),
        "dec1_w":    rnd(keys[10], (Chalf, Cin, 5, 5)),
    }
    x = jax.random.normal(keys[11], (B, Cin, H, W), dtype=jnp.float32)

    y = jax.block_until_ready(jax.jit(tfblock_v3_forward)(x, params))
    y_ref = jax.block_until_ready(_tfblock_v3_ref(x, params))

    assert y.shape == (B, Cin, H + 3, W + 5), y.shape
    max_err = float(jnp.max(jnp.abs(y - y_ref)))
    assert jnp.allclose(y, y_ref, rtol=1e-3, atol=1e-3), max_err

    print("KERNEL_OK")
</pallas_src>

<mosaic_0001>
module attributes {stable_mosaic.version = 11 : i64} {
  func.func @_tfblock_kernel(%arg0: i32, %arg1: memref<1x6x6x32xf32, #tpu.memory_space<vmem>>, %arg2: memref<4x2x32x64xf32, #tpu.memory_space<vmem>>, %arg3: memref<1x64xf32, #tpu.memory_space<vmem>>, %arg4: memref<1x64xf32, #tpu.memory_space<vmem>>, %arg5: memref<3x3x64x48xf32, #tpu.memory_space<vmem>>, %arg6: memref<1x48xf32, #tpu.memory_space<vmem>>, %arg7: memref<1x48xf32, #tpu.memory_space<vmem>>, %arg8: memref<5x5x48x32xf32, #tpu.memory_space<vmem>>, %arg9: memref<1x9x11x32xf32, #tpu.memory_space<vmem>>, %arg10: memref<7x9x64xf32, #tpu.memory_space<vmem>>, %arg11: memref<13x15x48xf32, #tpu.memory_space<vmem>>) attributes {dimension_semantics = [#tpu.dimension_semantics<parallel>], iteration_bounds = array<i64: 2>, scalar_prefetch = 0 : i64, scratch_operands = 2 : i64, tpu.core_type = #tpu.core_type<tc>, window_params = [{transform_indices = @transform_0, window_bounds = array<i64: 1, 6, 6, 32>}, {pipeline_mode = #tpu.pipeline_mode<synchronous>, transform_indices = @transform_1, window_bounds = array<i64: 4, 2, 32, 64>}, {pipeline_mode = #tpu.pipeline_mode<synchronous>, transform_indices = @transform_2, window_bounds = array<i64: 1, 64>}, {pipeline_mode = #tpu.pipeline_mode<synchronous>, transform_indices = @transform_3, window_bounds = array<i64: 1, 64>}, {pipeline_mode = #tpu.pipeline_mode<synchronous>, transform_indices = @transform_4, window_bounds = array<i64: 3, 3, 64, 48>}, {pipeline_mode = #tpu.pipeline_mode<synchronous>, transform_indices = @transform_5, window_bounds = array<i64: 1, 48>}, {pipeline_mode = #tpu.pipeline_mode<synchronous>, transform_indices = @transform_6, window_bounds = array<i64: 1, 48>}, {pipeline_mode = #tpu.pipeline_mode<synchronous>, transform_indices = @transform_7, window_bounds = array<i64: 5, 5, 48, 32>}, {transform_indices = @transform_8, window_bounds = array<i64: 1, 9, 11, 32>}]} {
    %cst = arith.constant 0.000000e+00 : f32
    %0 = vector.broadcast %cst : f32 to vector<7x9x64xf32>
    %c0 = arith.constant 0 : index
    %c0_0 = arith.constant 0 : index
    %c0_1 = arith.constant 0 : index
    %1 = vector.load %arg10[%c0, %c0_0, %c0_1] : memref<7x9x64xf32, #tpu.memory_space<vmem>>, vector<7x9x64xf32>
    tpu.vector_store %arg10[%c0, %c0_0, %c0_1], %0 {strides = array<i32>} : memref<7x9x64xf32, #tpu.memory_space<vmem>>, vector<7x9x64xf32>,
    %cst_2 = arith.constant 0.000000e+00 : f32
    %2 = vector.broadcast %cst_2 : f32 to vector<13x15x48xf32>
    %c0_3 = arith.constant 0 : index
    %c0_4 = arith.constant 0 : index
    %c0_5 = arith.constant 0 : index
    %3 = vector.load %arg11[%c0_3, %c0_4, %c0_5] : memref<13x15x48xf32, #tpu.memory_space<vmem>>, vector<13x15x48xf32>
    tpu.vector_store %arg11[%c0_3, %c0_4, %c0_5], %2 {strides = array<i32>} : memref<13x15x48xf32, #tpu.memory_space<vmem>>, vector<13x15x48xf32>,
    %cst_6 = arith.constant 2.000000e-01 : f32
    %c0_i32 = arith.constant 0 : i32
    %c3_i32 = arith.constant 3 : i32
    %4 = arith.addi %c0_i32, %c3_i32 : i32
    %c1_i32 = arith.constant 1 : i32
    scf.for %arg12 = %c0_i32 to %4 step %c1_i32  : i32 {
      %cst_15 = arith.constant 0.000000e+00 : f32
      %7 = vector.broadcast %cst_15 : f32 to vector<5x64xf32>
      %c0_i32_16 = arith.constant 0 : i32
      %8 = arith.addi %arg12, %c0_i32_16 : i32
      %c0_17 = arith.constant 0 : index
      %9 = arith.index_cast %8 : i32 to index
      %c0_18 = arith.constant 0 : index
      %c0_19 = arith.constant 0 : index
      %10 = vector.load %arg1[%c0_17, %9, %c0_18, %c0_19] : memref<1x6x6x32xf32, #tpu.memory_space<vmem>>, vector<1x1x5x32xf32>
      %11 = vector.shape_cast %10 : vector<1x1x5x32xf32> to vector<5x32xf32>
      %c0_20 = arith.constant 0 : index
      %c0_21 = arith.constant 0 : index
      %c0_22 = arith.constant 0 : index
      %c0_23 = arith.constant 0 : index
      %12 = vector.load %arg2[%c0_20, %c0_21, %c0_22, %c0_23] : memref<4x2x32x64xf32, #tpu.memory_space<vmem>>, vector<1x1x32x64xf32>
      %13 = vector.shape_cast %12 : vector<1x1x32x64xf32> to vector<32x64xf32>
      %cst_24 = arith.constant dense<0.000000e+00> : vector<5x64xf32>
      %14 = tpu.matmul %11, %13, %cst_24 {dimension_numbers = #tpu.dot_dimension_numbers<[1], [0], [0], [1], [0, 0, 1, 1], [], []>} : vector<5x32xf32>, vector<32x64xf32>, vector<5x64xf32> -> vector<5x64xf32>
      %15 = arith.addf %7, %14 : vector<5x64xf32>
      %c0_i32_25 = arith.constant 0 : i32
      %16 = arith.addi %arg12, %c0_i32_25 : i32
      %c0_26 = arith.constant 0 : index
      %17 = arith.index_cast %16 : i32 to index
      %c1 = arith.constant 1 : index
      %c0_27 = arith.constant 0 : index
      %18 = vector.load %arg1[%c0_26, %17, %c1, %c0_27] : memref<1x6x6x32xf32, #tpu.memory_space<vmem>>, vector<1x1x5x32xf32>
      %19 = vector.shape_cast %18 : vector<1x1x5x32xf32> to vector<5x32xf32>
      %c0_28 = arith.constant 0 : index
      %c1_29 = arith.constant 1 : index
      %c0_30 = arith.constant 0 : index
      %c0_31 = arith.constant 0 : index
      %20 = vector.load %arg2[%c0_28, %c1_29, %c0_30, %c0_31] : memref<4x2x32x64xf32, #tpu.memory_space<vmem>>, vector<1x1x32x64xf32>
      %21 = vector.shape_cast %20 : vector<1x1x32x64xf32> to vector<32x64xf32>
      %cst_32 = arith.constant dense<0.000000e+00> : vector<5x64xf32>
      %22 = tpu.matmul %19, %21, %cst_32 {dimension_numbers = #tpu.dot_dimension_numbers<[1], [0], [0], [1], [0, 0, 1, 1], [], []>} : vector<5x32xf32>, vector<32x64xf32>, vector<5x64xf32> -> vector<5x64xf32>
      %23 = arith.addf %15, %22 : vector<5x64xf32>
      %c1_i32_33 = arith.constant 1 : i32
      %24 = arith.addi %arg12, %c1_i32_33 : i32
      %c0_34 = arith.constant 0 : index
      %25 = arith.index_cast %24 : i32 to index
      %c0_35 = arith.constant 0 : index
      %c0_36 = arith.constant 0 : index
      %26 = vector.load %arg1[%c0_34, %25, %c0_35, %c0_36] : memref<1x6x6x32xf32, #tpu.memory_space<vmem>>, vector<1x1x5x32xf32>
      %27 = vector.shape_cast %26 : vector<1x1x5x32xf32> to vector<5x32xf32>
      %c1_37 = arith.constant 1 : index
      %c0_38 = arith.constant 0 : index
      %c0_39 = arith.constant 0 : index
      %c0_40 = arith.constant 0 : index
      %28 = vector.load %arg2[%c1_37, %c0_38, %c0_39, %c0_40] : memref<4x2x32x64xf32, #tpu.memory_space<vmem>>, vector<1x1x32x64xf32>
      %29 = vector.shape_cast %28 : vector<1x1x32x64xf32> to vector<32x64xf32>
      %cst_41 = arith.constant dense<0.000000e+00> : vector<5x64xf32>
      %30 = tpu.matmul %27, %29, %cst_41 {dimension_numbers = #tpu.dot_dimension_numbers<[1], [0], [0], [1], [0, 0, 1, 1], [], []>} : vector<5x32xf32>, vector<32x64xf32>, vector<5x64xf32> -> vector<5x64xf32>
      %31 = arith.addf %23, %30 : vector<5x64xf32>
      %c1_i32_42 = arith.constant 1 : i32
      %32 = arith.addi %arg12, %c1_i32_42 : i32
      %c0_43 = arith.constant 0 : index
      %33 = arith.index_cast %32 : i32 to index
      %c1_44 = arith.constant 1 : index
      %c0_45 = arith.constant 0 : index
      %34 = vector.load %arg1[%c0_43, %33, %c1_44, %c0_45] : memref<1x6x6x32xf32, #tpu.memory_space<vmem>>, vector<1x1x5x32xf32>
      %35 = vector.shape_cast %34 : vector<1x1x5x32xf32> to vector<5x32xf32>
      %c1_46 = arith.constant 1 : index
      %c1_47 = arith.constant 1 : index
      %c0_48 = arith.constant 0 : index
      %c0_49 = arith.constant 0 : index
      %36 = vector.load %arg2[%c1_46, %c1_47, %c0_48, %c0_49] : memref<4x2x32x64xf32, #tpu.memory_space<vmem>>, vector<1x1x32x64xf32>
      %37 = vector.shape_cast %36 : vector<1x1x32x64xf32> to vector<32x64xf32>
      %cst_50 = arith.constant dense<0.000000e+00> : vector<5x64xf32>
      %38 = tpu.matmul %35, %37, %cst_50 {dimension_numbers = #tpu.dot_dimension_numbers<[1], [0], [0], [1], [0, 0, 1, 1], [], []>} : vector<5x32xf32>, vector<32x64xf32>, vector<5x64xf32> -> vector<5x64xf32>
      %39 = arith.addf %31, %38 : vector<5x64xf32>
      %c2_i32 = arith.constant 2 : i32
      %40 = arith.addi %arg12, %c2_i32 : i32
      %c0_51 = arith.constant 0 : index
      %41 = arith.index_cast %40 : i32 to index
      %c0_52 = arith.constant 0 : index
      %c0_53 = arith.constant 0 : index
      %42 = vector.load %arg1[%c0_51, %41, %c0_52, %c0_53] : memref<1x6x6x32xf32, #tpu.memory_space<vmem>>, vector<1x1x5x32xf32>
      %43 = vector.shape_cast %42 : vector<1x1x5x32xf32> to vector<5x32xf32>
      %c2 = arith.constant 2 : index
      %c0_54 = arith.constant 0 : index
      %c0_55 = arith.constant 0 : index
      %c0_56 = arith.constant 0 : index
      %44 = vector.load %arg2[%c2, %c0_54, %c0_55, %c0_56] : memref<4x2x32x64xf32, #tpu.memory_space<vmem>>, vector<1x1x32x64xf32>
      %45 = vector.shape_cast %44 : vector<1x1x32x64xf32> to vector<32x64xf32>
      %cst_57 = arith.constant dense<0.000000e+00> : vector<5x64xf32>
      %46 = tpu.matmul %43, %45, %cst_57 {dimension_numbers = #tpu.dot_dimension_numbers<[1], [0], [0], [1], [0, 0, 1, 1], [], []>} : vector<5x32xf32>, vector<32x64xf32>, vector<5x64xf32> -> vector<5x64xf32>
      %47 = arith.addf %39, %46 : vector<5x64xf32>
      %c2_i32_58 = arith.constant 2 : i32
      %48 = arith.addi %arg12, %c2_i32_58 : i32
      %c0_59 = arith.constant 0 : index
      %49 = arith.index_cast %48 : i32 to index
      %c1_60 = arith.constant 1 : index
      %c0_61 = arith.constant 0 : index
      %50 = vector.load %arg1[%c0_59, %49, %c1_60, %c0_61] : memref<1x6x6x32xf32, #tpu.memory_space<vmem>>, vector<1x1x5x32xf32>
      %51 = vector.shape_cast %50 : vector<1x1x5x32xf32> to vector<5x32xf32>
      %c2_62 = arith.constant 2 : index
      %c1_63 = arith.constant 1 : index
      %c0_64 = arith.constant 0 : index
      %c0_65 = arith.constant 0 : index
      %52 = vector.load %arg2[%c2_62, %c1_63, %c0_64, %c0_65] : memref<4x2x32x64xf32, #tpu.memory_space<vmem>>, vector<1x1x32x64xf32>
      %53 = vector.shape_cast %52 : vector<1x1x32x64xf32> to vector<32x64xf32>
      %cst_66 = arith.constant dense<0.000000e+00> : vector<5x64xf32>
      %54 = tpu.matmul %51, %53, %cst_66 {dimension_numbers = #tpu.dot_dimension_numbers<[1], [0], [0], [1], [0, 0, 1, 1], [], []>} : vector<5x32xf32>, vector<32x64xf32>, vector<5x64xf32> -> vector<5x64xf32>
      %55 = arith.addf %47, %54 : vector<5x64xf32>
      %c3_i32_67 = arith.constant 3 : i32
      %56 = arith.addi %arg12, %c3_i32_67 : i32
      %c0_68 = arith.constant 0 : index
      %57 = arith.index_cast %56 : i32 to index
      %c0_69 = arith.constant 0 : index
      %c0_70 = arith.constant 0 : index
      %58 = vector.load %arg1[%c0_68, %57, %c0_69, %c0_70] : memref<1x6x6x32xf32, #tpu.memory_space<vmem>>, vector<1x1x5x32xf32>
      %59 = vector.shape_cast %58 : vector<1x1x5x32xf32> to vector<5x32xf32>
      %c3 = arith.constant 3 : index
      %c0_71 = arith.constant 0 : index
      %c0_72 = arith.constant 0 : index
      %c0_73 = arith.constant 0 : index
      %60 = vector.load %arg2[%c3, %c0_71, %c0_72, %c0_73] : memref<4x2x32x64xf32, #tpu.memory_space<vmem>>, vector<1x1x32x64xf32>
      %61 = vector.shape_cast %60 : vector<1x1x32x64xf32> to vector<32x64xf32>
      %cst_74 = arith.constant dense<0.000000e+00> : vector<5x64xf32>
      %62 = tpu.matmul %59, %61, %cst_74 {dimension_numbers = #tpu.dot_dimension_numbers<[1], [0], [0], [1], [0, 0, 1, 1], [], []>} : vector<5x32xf32>, vector<32x64xf32>, vector<5x64xf32> -> vector<5x64xf32>
      %63 = arith.addf %55, %62 : vector<5x64xf32>
      %c3_i32_75 = arith.constant 3 : i32
      %64 = arith.addi %arg12, %c3_i32_75 : i32
      %c0_76 = arith.constant 0 : index
      %65 = arith.index_cast %64 : i32 to index
      %c1_77 = arith.constant 1 : index
      %c0_78 = arith.constant 0 : index
      %66 = vector.load %arg1[%c0_76, %65, %c1_77, %c0_78] : memref<1x6x6x32xf32, #tpu.memory_space<vmem>>, vector<1x1x5x32xf32>
      %67 = vector.shape_cast %66 : vector<1x1x5x32xf32> to vector<5x32xf32>
      %c3_79 = arith.constant 3 : index
      %c1_80 = arith.constant 1 : index
      %c0_81 = arith.constant 0 : index
      %c0_82 = arith.constant 0 : index
      %68 = vector.load %arg2[%c3_79, %c1_80, %c0_81, %c0_82] : memref<4x2x32x64xf32, #tpu.memory_space<vmem>>, vector<1x1x32x64xf32>
      %69 = vector.shape_cast %68 : vector<1x1x32x64xf32> to vector<32x64xf32>
      %cst_83 = arith.constant dense<0.000000e+00> : vector<5x64xf32>
      %70 = tpu.matmul %67, %69, %cst_83 {dimension_numbers = #tpu.dot_dimension_numbers<[1], [0], [0], [1], [0, 0, 1, 1], [], []>} : vector<5x32xf32>, vector<32x64xf32>, vector<5x64xf32> -> vector<5x64xf32>
      %71 = arith.addf %63, %70 : vector<5x64xf32>
      %c0_84 = arith.constant 0 : index
      %c0_85 = arith.constant 0 : index
      %72 = vector.load %arg3[%c0_84, %c0_85] : memref<1x64xf32, #tpu.memory_space<vmem>>, vector<1x64xf32>
      %73 = vector.broadcast %72 : vector<1x64xf32> to vector<5x64xf32>
      %74 = arith.mulf %71, %73 : vector<5x64xf32>
      %c0_86 = arith.constant 0 : index
      %c0_87 = arith.constant 0 : index
      %75 = vector.load %arg4[%c0_86, %c0_87] : memref<1x64xf32, #tpu.memory_space<vmem>>, vector<1x64xf32>
      %76 = vector.broadcast %75 : vector<1x64xf32> to vector<5x64xf32>
      %77 = arith.addf %74, %76 : vector<5x64xf32>
      %cst_88 = arith.constant 0.000000e+00 : f32
      %78 = vector.broadcast %cst_88 : f32 to vector<5x64xf32>
      %79 = arith.cmpf oge, %77, %78 : vector<5x64xf32>
      %80 = vector.broadcast %cst_6 : f32 to vector<5x64xf32>
      %81 = arith.mulf %80, %77 : vector<5x64xf32>
      %82 = arith.select %79, %77, %81 : vector<5x64xi1>, vector<5x64xf32>
      %c2_i32_89 = arith.constant 2 : i32
      %83 = arith.addi %arg12, %c2_i32_89 : i32
      %84 = arith.index_cast %83 : i32 to index
      %c2_90 = arith.constant 2 : index
      %c0_91 = arith.constant 0 : index
      %85 = vector.load %arg10[%84, %c2_90, %c0_91] : memref<7x9x64xf32, #tpu.memory_space<vmem>>, vector<1x5x64xf32>
      %86 = vector.shape_cast %85 : vector<1x5x64xf32> to vector<5x64xf32>
      %87 = vector.shape_cast %82 : vector<5x64xf32> to vector<1x5x64xf32>
      tpu.vector_store %arg10[%84, %c2_90, %c0_91], %87 {strides = array<i32>} : memref<7x9x64xf32, #tpu.memory_space<vmem>>, vector<1x5x64xf32>,
    }
    %c3_i32_7 = arith.constant 3 : i32
    %cst_8 = arith.constant 2.000000e-01 : f32
    %c0_i32_9 = arith.constant 0 : i32
    %c5_i32 = arith.constant 5 : i32
    %5 = arith.addi %c0_i32_9, %c5_i32 : i32
    %c1_i32_10 = arith.constant 1 : i32
    scf.for %arg12 = %c0_i32_9 to %5 step %c1_i32_10  : i32 {
      %cst_15 = arith.constant 0.000000e+00 : f32
      %7 = vector.broadcast %cst_15 : f32 to vector<7x48xf32>
      %c0_i32_16 = arith.constant 0 : i32
      %8 = arith.addi %arg12, %c0_i32_16 : i32
      %9 = arith.index_cast %8 : i32 to index
      %c0_17 = arith.constant 0 : index
      %c0_18 = arith.constant 0 : index
      %10 = vector.load %arg10[%9, %c0_17, %c0_18] : memref<7x9x64xf32, #tpu.memory_space<vmem>>, vector<1x7x64xf32>
      %11 = vector.shape_cast %10 : vector<1x7x64xf32> to vector<7x64xf32>
      %c0_19 = arith.constant 0 : index
      %c0_20 = arith.constant 0 : index
      %c0_21 = arith.constant 0 : index
      %c0_22 = arith.constant 0 : index
      %12 = vector.load %arg5[%c0_19, %c0_20, %c0_21, %c0_22] : memref<3x3x64x48xf32, #tpu.memory_space<vmem>>, vector<1x1x64x48xf32>
      %13 = vector.shape_cast %12 : vector<1x1x64x48xf32> to vector<64x48xf32>
      %cst_23 = arith.constant dense<0.000000e+00> : vector<7x48xf32>
      %14 = tpu.matmul %11, %13, %cst_23 {dimension_numbers = #tpu.dot_dimension_numbers<[1], [0], [0], [1], [0, 0, 1, 1], [], []>} : vector<7x64xf32>, vector<64x48xf32>, vector<7x48xf32> -> vector<7x48xf32>
      %15 = arith.addf %7, %14 : vector<7x48xf32>
      %c0_i32_24 = arith.constant 0 : i32
      %16 = arith.addi %arg12, %c0_i32_24 : i32
      %17 = arith.index_cast %16 : i32 to index
      %c1 = arith.constant 1 : index
      %c0_25 = arith.constant 0 : index
      %18 = vector.load %arg10[%17, %c1, %c0_25] : memref<7x9x64xf32, #tpu.memory_space<vmem>>, vector<1x7x64xf32>
      %19 = vector.shape_cast %18 : vector<1x7x64xf32> to vector<7x64xf32>
      %c0_26 = arith.constant 0 : index
      %c1_27 = arith.constant 1 : index
      %c0_28 = arith.constant 0 : index
      %c0_29 = arith.constant 0 : index
      %20 = vector.load %arg5[%c0_26, %c1_27, %c0_28, %c0_29] : memref<3x3x64x48xf32, #tpu.memory_space<vmem>>, vector<1x1x64x48xf32>
      %21 = vector.shape_cast %20 : vector<1x1x64x48xf32> to vector<64x48xf32>
      %cst_30 = arith.constant dense<0.000000e+00> : vector<7x48xf32>
      %22 = tpu.matmul %19, %21, %cst_30 {dimension_numbers = #tpu.dot_dimension_numbers<[1], [0], [0], [1], [0, 0, 1, 1], [], []>} : vector<7x64xf32>, vector<64x48xf32>, vector<7x48xf32> -> vector<7x48xf32>
      %23 = arith.addf %15, %22 : vector<7x48xf32>
      %c0_i32_31 = arith.constant 0 : i32
      %24 = arith.addi %arg12, %c0_i32_31 : i32
      %25 = arith.index_cast %24 : i32 to index
      %c2 = arith.constant 2 : index
      %c0_32 = arith.constant 0 : index
      %26 = vector.load %arg10[%25, %c2, %c0_32] : memref<7x9x64xf32, #tpu.memory_space<vmem>>, vector<1x7x64xf32>
      %27 = vector.shape_cast %26 : vector<1x7x64xf32> to vector<7x64xf32>
      %c0_33 = arith.constant 0 : index
      %c2_34 = arith.constant 2 : index
      %c0_35 = arith.constant 0 : index
      %c0_36 = arith.constant 0 : index
      %28 = vector.load %arg5[%c0_33, %c2_34, %c0_35, %c0_36] : memref<3x3x64x48xf32, #tpu.memory_space<vmem>>, vector<1x1x64x48xf32>
      %29 = vector.shape_cast %28 : vector<1x1x64x48xf32> to vector<64x48xf32>
      %cst_37 = arith.constant dense<0.000000e+00> : vector<7x48xf32>
      %30 = tpu.matmul %27, %29, %cst_37 {dimension_numbers = #tpu.dot_dimension_numbers<[1], [0], [0], [1], [0, 0, 1, 1], [], []>} : vector<7x64xf32>, vector<64x48xf32>, vector<7x48xf32> -> vector<7x48xf32>
      %31 = arith.addf %23, %30 : vector<7x48xf32>
      %c1_i32_38 = arith.constant 1 : i32
      %32 = arith.addi %arg12, %c1_i32_38 : i32
      %33 = arith.index_cast %32 : i32 to index
      %c0_39 = arith.constant 0 : index
      %c0_40 = arith.constant 0 : index
      %34 = vector.load %arg10[%33, %c0_39, %c0_40] : memref<7x9x64xf32, #tpu.memory_space<vmem>>, vector<1x7x64xf32>
      %35 = vector.shape_cast %34 : vector<1x7x64xf32> to vector<7x64xf32>
      %c1_41 = arith.constant 1 : index
      %c0_42 = arith.constant 0 : index
      %c0_43 = arith.constant 0 : index
      %c0_44 = arith.constant 0 : index
      %36 = vector.load %arg5[%c1_41, %c0_42, %c0_43, %c0_44] : memref<3x3x64x48xf32, #tpu.memory_space<vmem>>, vector<1x1x64x48xf32>
      %37 = vector.shape_cast %36 : vector<1x1x64x48xf32> to vector<64x48xf32>
      %cst_45 = arith.constant dense<0.000000e+00> : vector<7x48xf32>
      %38 = tpu.matmul %35, %37, %cst_45 {dimension_numbers = #tpu.dot_dimension_numbers<[1], [0], [0], [1], [0, 0, 1, 1], [], []>} : vector<7x64xf32>, vector<64x48xf32>, vector<7x48xf32> -> vector<7x48xf32>
      %39 = arith.addf %31, %38 : vector<7x48xf32>
      %c1_i32_46 = arith.constant 1 : i32
      %40 = arith.addi %arg12, %c1_i32_46 : i32
      %41 = arith.index_cast %40 : i32 to index
      %c1_47 = arith.constant 1 : index
      %c0_48 = arith.constant 0 : index
      %42 = vector.load %arg10[%41, %c1_47, %c0_48] : memref<7x9x64xf32, #tpu.memory_space<vmem>>, vector<1x7x64xf32>
      %43 = vector.shape_cast %42 : vector<1x7x64xf32> to vector<7x64xf32>
      %c1_49 = arith.constant 1 : index
      %c1_50 = arith.constant 1 : index
      %c0_51 = arith.constant 0 : index
      %c0_52 = arith.constant 0 : index
      %44 = vector.load %arg5[%c1_49, %c1_50, %c0_51, %c0_52] : memref<3x3x64x48xf32, #tpu.memory_space<vmem>>, vector<1x1x64x48xf32>
      %45 = vector.shape_cast %44 : vector<1x1x64x48xf32> to vector<64x48xf32>
      %cst_53 = arith.constant dense<0.000000e+00> : vector<7x48xf32>
      %46 = tpu.matmul %43, %45, %cst_53 {dimension_numbers = #tpu.dot_dimension_numbers<[1], [0], [0], [1], [0, 0, 1, 1], [], []>} : vector<7x64xf32>, vector<64x48xf32>, vector<7x48xf32> -> vector<7x48xf32>
      %47 = arith.addf %39, %46 : vector<7x48xf32>
      %c1_i32_54 = arith.constant 1 : i32
      %48 = arith.addi %arg12, %c1_i32_54 : i32
      %49 = arith.index_cast %48 : i32 to index
      %c2_55 = arith.constant 2 : index
      %c0_56 = arith.constant 0 : index
      %50 = vector.load %arg10[%49, %c2_55, %c0_56] : memref<7x9x64xf32, #tpu.memory_space<vmem>>, vector<1x7x64xf32>
      %51 = vector.shape_cast %50 : vector<1x7x64xf32> to vector<7x64xf32>
      %c1_57 = arith.constant 1 : index
      %c2_58 = arith.constant 2 : index
      %c0_59 = arith.constant 0 : index
      %c0_60 = arith.constant 0 : index
      %52 = vector.load %arg5[%c1_57, %c2_58, %c0_59, %c0_60] : memref<3x3x64x48xf32, #tpu.memory_space<vmem>>, vector<1x1x64x48xf32>
      %53 = vector.shape_cast %52 : vector<1x1x64x48xf32> to vector<64x48xf32>
      %cst_61 = arith.constant dense<0.000000e+00> : vector<7x48xf32>
      %54 = tpu.matmul %51, %53, %cst_61 {dimension_numbers = #tpu.dot_dimension_numbers<[1], [0], [0], [1], [0, 0, 1, 1], [], []>} : vector<7x64xf32>, vector<64x48xf32>, vector<7x48xf32> -> vector<7x48xf32>
      %55 = arith.addf %47, %54 : vector<7x48xf32>
      %c2_i32 = arith.constant 2 : i32
      %56 = arith.addi %arg12, %c2_i32 : i32
      %57 = arith.index_cast %56 : i32 to index
      %c0_62 = arith.constant 0 : index
      %c0_63 = arith.constant 0 : index
      %58 = vector.load %arg10[%57, %c0_62, %c0_63] : memref<7x9x64xf32, #tpu.memory_space<vmem>>, vector<1x7x64xf32>
      %59 = vector.shape_cast %58 : vector<1x7x64xf32> to vector<7x64xf32>
      %c2_64 = arith.constant 2 : index
      %c0_65 = arith.constant 0 : index
      %c0_66 = arith.constant 0 : index
      %c0_67 = arith.constant 0 : index
      %60 = vector.load %arg5[%c2_64, %c0_65, %c0_66, %c0_67] : memref<3x3x64x48xf32, #tpu.memory_space<vmem>>, vector<1x1x64x48xf32>
      %61 = vector.shape_cast %60 : vector<1x1x64x48xf32> to vector<64x48xf32>
      %cst_68 = arith.constant dense<0.000000e+00> : vector<7x48xf32>
      %62 = tpu.matmul %59, %61, %cst_68 {dimension_numbers = #tpu.dot_dimension_numbers<[1], [0], [0], [1], [0, 0, 1, 1], [], []>} : vector<7x64xf32>, vector<64x48xf32>, vector<7x48xf32> -> vector<7x48xf32>
      %63 = arith.addf %55, %62 : vector<7x48xf32>
      %c2_i32_69 = arith.constant 2 : i32
      %64 = arith.addi %arg12, %c2_i32_69 : i32
      %65 = arith.index_cast %64 : i32 to index
      %c1_70 = arith.constant 1 : index
      %c0_71 = arith.constant 0 : index
      %66 = vector.load %arg10[%65, %c1_70, %c0_71] : memref<7x9x64xf32, #tpu.memory_space<vmem>>, vector<1x7x64xf32>
      %67 = vector.shape_cast %66 : vector<1x7x64xf32> to vector<7x64xf32>
      %c2_72 = arith.constant 2 : index
      %c1_73 = arith.constant 1 : index
      %c0_74 = arith.constant 0 : index
      %c0_75 = arith.constant 0 : index
      %68 = vector.load %arg5[%c2_72, %c1_73, %c0_74, %c0_75] : memref<3x3x64x48xf32, #tpu.memory_space<vmem>>, vector<1x1x64x48xf32>
      %69 = vector.shape_cast %68 : vector<1x1x64x48xf32> to vector<64x48xf32>
      %cst_76 = arith.constant dense<0.000000e+00> : vector<7x48xf32>
      %70 = tpu.matmul %67, %69, %cst_76 {dimension_numbers = #tpu.dot_dimension_numbers<[1], [0], [0], [1], [0, 0, 1, 1], [], []>} : vector<7x64xf32>, vector<64x48xf32>, vector<7x48xf32> -> vector<7x48xf32>
      %71 = arith.addf %63, %70 : vector<7x48xf32>
      %c2_i32_77 = arith.constant 2 : i32
      %72 = arith.addi %arg12, %c2_i32_77 : i32
      %73 = arith.index_cast %72 : i32 to index
      %c2_78 = arith.constant 2 : index
      %c0_79 = arith.constant 0 : index
      %74 = vector.load %arg10[%73, %c2_78, %c0_79] : memref<7x9x64xf32, #tpu.memory_space<vmem>>, vector<1x7x64xf32>
      %75 = vector.shape_cast %74 : vector<1x7x64xf32> to vector<7x64xf32>
      %c2_80 = arith.constant 2 : index
      %c2_81 = arith.constant 2 : index
      %c0_82 = arith.constant 0 : index
      %c0_83 = arith.constant 0 : index
      %76 = vector.load %arg5[%c2_80, %c2_81, %c0_82, %c0_83] : memref<3x3x64x48xf32, #tpu.memory_space<vmem>>, vector<1x1x64x48xf32>
      %77 = vector.shape_cast %76 : vector<1x1x64x48xf32> to vector<64x48xf32>
      %cst_84 = arith.constant dense<0.000000e+00> : vector<7x48xf32>
      %78 = tpu.matmul %75, %77, %cst_84 {dimension_numbers = #tpu.dot_dimension_numbers<[1], [0], [0], [1], [0, 0, 1, 1], [], []>} : vector<7x64xf32>, vector<64x48xf32>, vector<7x48xf32> -> vector<7x48xf32>
      %79 = arith.addf %71, %78 : vector<7x48xf32>
      %c0_85 = arith.constant 0 : index
      %c0_86 = arith.constant 0 : index
      %80 = vector.load %arg6[%c0_85, %c0_86] : memref<1x48xf32, #tpu.memory_space<vmem>>, vector<1x48xf32>
      %81 = vector.broadcast %80 : vector<1x48xf32> to vector<7x48xf32>
      %82 = arith.mulf %79, %81 : vector<7x48xf32>
      %c0_87 = arith.constant 0 : index
      %c0_88 = arith.constant 0 : index
      %83 = vector.load %arg7[%c0_87, %c0_88] : memref<1x48xf32, #tpu.memory_space<vmem>>, vector<1x48xf32>
      %84 = vector.broadcast %83 : vector<1x48xf32> to vector<7x48xf32>
      %85 = arith.addf %82, %84 : vector<7x48xf32>
      %cst_89 = arith.constant 0.000000e+00 : f32
      %86 = vector.broadcast %cst_89 : f32 to vector<7x48xf32>
      %87 = arith.cmpf oge, %85, %86 : vector<7x48xf32>
      %88 = vector.broadcast %cst_8 : f32 to vector<7x48xf32>
      %89 = arith.mulf %88, %85 : vector<7x48xf32>
      %90 = arith.select %87, %85, %89 : vector<7x48xi1>, vector<7x48xf32>
      %c4_i32 = arith.constant 4 : i32
      %91 = arith.addi %arg12, %c4_i32 : i32
      %92 = arith.index_cast %91 : i32 to index
      %c4 = arith.constant 4 : index
      %c0_90 = arith.constant 0 : index
      %93 = vector.load %arg11[%92, %c4, %c0_90] : memref<13x15x48xf32, #tpu.memory_space<vmem>>, vector<1x7x48xf32>
      %94 = vector.shape_cast %93 : vector<1x7x48xf32> to vector<7x48xf32>
      %95 = vector.shape_cast %90 : vector<7x48xf32> to vector<1x7x48xf32>
      tpu.vector_store %arg11[%92, %c4, %c0_90], %95 {strides = array<i32>} : memref<13x15x48xf32, #tpu.memory_space<vmem>>, vector<1x7x48xf32>,
    }
    %c5_i32_11 = arith.constant 5 : i32
    %c0_i32_12 = arith.constant 0 : i32
    %c9_i32 = arith.constant 9 : i32
    %6 = arith.addi %c0_i32_12, %c9_i32 : i32
    %c1_i32_13 = arith.constant 1 : i32
    scf.for %arg12 = %c0_i32_12 to %6 step %c1_i32_13  : i32 {
      %cst_15 = arith.constant 0.000000e+00 : f32
      %7 = vector.broadcast %cst_15 : f32 to vector<11x32xf32>
      %c0_i32_16 = arith.constant 0 : i32
      %8 = arith.addi %arg12, %c0_i32_16 : i32
      %9 = arith.index_cast %8 : i32 to index
      %c0_17 = arith.constant 0 : index
      %c0_18 = arith.constant 0 : index
      %10 = vector.load %arg11[%9, %c0_17, %c0_18] : memref<13x15x48xf32, #tpu.memory_space<vmem>>, vector<1x11x48xf32>
      %11 = vector.shape_cast %10 : vector<1x11x48xf32> to vector<11x48xf32>
      %c0_19 = arith.constant 0 : index
      %c0_20 = arith.constant 0 : index
      %c0_21 = arith.constant 0 : index
      %c0_22 = arith.constant 0 : index
      %12 = vector.load %arg8[%c0_19, %c0_20, %c0_21, %c0_22] : memref<5x5x48x32xf32, #tpu.memory_space<vmem>>, vector<1x1x48x32xf32>
      %13 = vector.shape_cast %12 : vector<1x1x48x32xf32> to vector<48x32xf32>
      %cst_23 = arith.constant dense<0.000000e+00> : vector<11x32xf32>
      %14 = tpu.matmul %11, %13, %cst_23 {dimension_numbers = #tpu.dot_dimension_numbers<[1], [0], [0], [1], [0, 0, 1, 1], [], []>} : vector<11x48xf32>, vector<48x32xf32>, vector<11x32xf32> -> vector<11x32xf32>
      %15 = arith.addf %7, %14 : vector<11x32xf32>
      %c0_i32_24 = arith.constant 0 : i32
      %16 = arith.addi %arg12, %c0_i32_24 : i32
      %17 = arith.index_cast %16 : i32 to index
      %c1 = arith.constant 1 : index
      %c0_25 = arith.constant 0 : index
      %18 = vector.load %arg11[%17, %c1, %c0_25] : memref<13x15x48xf32, #tpu.memory_space<vmem>>, vector<1x11x48xf32>
      %19 = vector.shape_cast %18 : vector<1x11x48xf32> to vector<11x48xf32>
      %c0_26 = arith.constant 0 : index
      %c1_27 = arith.constant 1 : index
      %c0_28 = arith.constant 0 : index
      %c0_29 = arith.constant 0 : index
      %20 = vector.load %arg8[%c0_26, %c1_27, %c0_28, %c0_29] : memref<5x5x48x32xf32, #tpu.memory_space<vmem>>, vector<1x1x48x32xf32>
      %21 = vector.shape_cast %20 : vector<1x1x48x32xf32> to vector<48x32xf32>
      %cst_30 = arith.constant dense<0.000000e+00> : vector<11x32xf32>
      %22 = tpu.matmul %19, %21, %cst_30 {dimension_numbers = #tpu.dot_dimension_numbers<[1], [0], [0], [1], [0, 0, 1, 1], [], []>} : vector<11x48xf32>, vector<48x32xf32>, vector<11x32xf32> -> vector<11x32xf32>
      %23 = arith.addf %15, %22 : vector<11x32xf32>
      %c0_i32_31 = arith.constant 0 : i32
      %24 = arith.addi %arg12, %c0_i32_31 : i32
      %25 = arith.index_cast %24 : i32 to index
      %c2 = arith.constant 2 : index
      %c0_32 = arith.constant 0 : index
      %26 = vector.load %arg11[%25, %c2, %c0_32] : memref<13x15x48xf32, #tpu.memory_space<vmem>>, vector<1x11x48xf32>
      %27 = vector.shape_cast %26 : vector<1x11x48xf32> to vector<11x48xf32>
      %c0_33 = arith.constant 0 : index
      %c2_34 = arith.constant 2 : index
      %c0_35 = arith.constant 0 : index
      %c0_36 = arith.constant 0 : index
      %28 = vector.load %arg8[%c0_33, %c2_34, %c0_35, %c0_36] : memref<5x5x48x32xf32, #tpu.memory_space<vmem>>, vector<1x1x48x32xf32>
      %29 = vector.shape_cast %28 : vector<1x1x48x32xf32> to vector<48x32xf32>
      %cst_37 = arith.constant dense<0.000000e+00> : vector<11x32xf32>
      %30 = tpu.matmul %27, %29, %cst_37 {dimension_numbers = #tpu.dot_dimension_numbers<[1], [0], [0], [1], [0, 0, 1, 1], [], []>} : vector<11x48xf32>, vector<48x32xf32>, vector<11x32xf32> -> vector<11x32xf32>
      %31 = arith.addf %23, %30 : vector<11x32xf32>
      %c0_i32_38 = arith.constant 0 : i32
      %32 = arith.addi %arg12, %c0_i32_38 : i32
      %33 = arith.index_cast %32 : i32 to index
      %c3 = arith.constant 3 : index
      %c0_39 = arith.constant 0 : index
      %34 = vector.load %arg11[%33, %c3, %c0_39] : memref<13x15x48xf32, #tpu.memory_space<vmem>>, vector<1x11x48xf32>
      %35 = vector.shape_cast %34 : vector<1x11x48xf32> to vector<11x48xf32>
      %c0_40 = arith.constant 0 : index
      %c3_41 = arith.constant 3 : index
      %c0_42 = arith.constant 0 : index
      %c0_43 = arith.constant 0 : index
      %36 = vector.load %arg8[%c0_40, %c3_41, %c0_42, %c0_43] : memref<5x5x48x32xf32, #tpu.memory_space<vmem>>, vector<1x1x48x32xf32>
      %37 = vector.shape_cast %36 : vector<1x1x48x32xf32> to vector<48x32xf32>
      %cst_44 = arith.constant dense<0.000000e+00> : vector<11x32xf32>
      %38 = tpu.matmul %35, %37, %cst_44 {dimension_numbers = #tpu.dot_dimension_numbers<[1], [0], [0], [1], [0, 0, 1, 1], [], []>} : vector<11x48xf32>, vector<48x32xf32>, vector<11x32xf32> -> vector<11x32xf32>
      %39 = arith.addf %31, %38 : vector<11x32xf32>
      %c0_i32_45 = arith.constant 0 : i32
      %40 = arith.addi %arg12, %c0_i32_45 : i32
      %41 = arith.index_cast %40 : i32 to index
      %c4 = arith.constant 4 : index
      %c0_46 = arith.constant 0 : index
      %42 = vector.load %arg11[%41, %c4, %c0_46] : memref<13x15x48xf32, #tpu.memory_space<vmem>>, vector<1x11x48xf32>
      %43 = vector.shape_cast %42 : vector<1x11x48xf32> to vector<11x48xf32>
      %c0_47 = arith.constant 0 : index
      %c4_48 = arith.constant 4 : index
      %c0_49 = arith.constant 0 : index
      %c0_50 = arith.constant 0 : index
      %44 = vector.load %arg8[%c0_47, %c4_48, %c0_49, %c0_50] : memref<5x5x48x32xf32, #tpu.memory_space<vmem>>, vector<1x1x48x32xf32>
      %45 = vector.shape_cast %44 : vector<1x1x48x32xf32> to vector<48x32xf32>
      %cst_51 = arith.constant dense<0.000000e+00> : vector<11x32xf32>
      %46 = tpu.matmul %43, %45, %cst_51 {dimension_numbers = #tpu.dot_dimension_numbers<[1], [0], [0], [1], [0, 0, 1, 1], [], []>} : vector<11x48xf32>, vector<48x32xf32>, vector<11x32xf32> -> vector<11x32xf32>
      %47 = arith.addf %39, %46 : vector<11x32xf32>
      %c1_i32_52 = arith.constant 1 : i32
      %48 = arith.addi %arg12, %c1_i32_52 : i32
      %49 = arith.index_cast %48 : i32 to index
      %c0_53 = arith.constant 0 : index
      %c0_54 = arith.constant 0 : index
      %50 = vector.load %arg11[%49, %c0_53, %c0_54] : memref<13x15x48xf32, #tpu.memory_space<vmem>>, vector<1x11x48xf32>
      %51 = vector.shape_cast %50 : vector<1x11x48xf32> to vector<11x48xf32>
      %c1_55 = arith.constant 1 : index
      %c0_56 = arith.constant 0 : index
      %c0_57 = arith.constant 0 : index
      %c0_58 = arith.constant 0 : index
      %52 = vector.load %arg8[%c1_55, %c0_56, %c0_57, %c0_58] : memref<5x5x48x32xf32, #tpu.memory_space<vmem>>, vector<1x1x48x32xf32>
      %53 = vector.shape_cast %52 : vector<1x1x48x32xf32> to vector<48x32xf32>
      %cst_59 = arith.constant dense<0.000000e+00> : vector<11x32xf32>
      %54 = tpu.matmul %51, %53, %cst_59 {dimension_numbers = #tpu.dot_dimension_numbers<[1], [0], [0], [1], [0, 0, 1, 1], [], []>} : vector<11x48xf32>, vector<48x32xf32>, vector<11x32xf32> -> vector<11x32xf32>
      %55 = arith.addf %47, %54 : vector<11x32xf32>
      %c1_i32_60 = arith.constant 1 : i32
      %56 = arith.addi %arg12, %c1_i32_60 : i32
      %57 = arith.index_cast %56 : i32 to index
      %c1_61 = arith.constant 1 : index
      %c0_62 = arith.constant 0 : index
      %58 = vector.load %arg11[%57, %c1_61, %c0_62] : memref<13x15x48xf32, #tpu.memory_space<vmem>>, vector<1x11x48xf32>
      %59 = vector.shape_cast %58 : vector<1x11x48xf32> to vector<11x48xf32>
      %c1_63 = arith.constant 1 : index
      %c1_64 = arith.constant 1 : index
      %c0_65 = arith.constant 0 : index
      %c0_66 = arith.constant 0 : index
      %60 = vector.load %arg8[%c1_63, %c1_64, %c0_65, %c0_66] : memref<5x5x48x32xf32, #tpu.memory_space<vmem>>, vector<1x1x48x32xf32>
      %61 = vector.shape_cast %60 : vector<1x1x48x32xf32> to vector<48x32xf32>
      %cst_67 = arith.constant dense<0.000000e+00> : vector<11x32xf32>
      %62 = tpu.matmul %59, %61, %cst_67 {dimension_numbers = #tpu.dot_dimension_numbers<[1], [0], [0], [1], [0, 0, 1, 1], [], []>} : vector<11x48xf32>, vector<48x32xf32>, vector<11x32xf32> -> vector<11x32xf32>
      %63 = arith.addf %55, %62 : vector<11x32xf32>
      %c1_i32_68 = arith.constant 1 : i32
      %64 = arith.addi %arg12, %c1_i32_68 : i32
      %65 = arith.index_cast %64 : i32 to index
      %c2_69 = arith.constant 2 : index
      %c0_70 = arith.constant 0 : index
      %66 = vector.load %arg11[%65, %c2_69, %c0_70] : memref<13x15x48xf32, #tpu.memory_space<vmem>>, vector<1x11x48xf32>
      %67 = vector.shape_cast %66 : vector<1x11x48xf32> to vector<11x48xf32>
      %c1_71 = arith.constant 1 : index
      %c2_72 = arith.constant 2 : index
      %c0_73 = arith.constant 0 : index
      %c0_74 = arith.constant 0 : index
      %68 = vector.load %arg8[%c1_71, %c2_72, %c0_73, %c0_74] : memref<5x5x48x32xf32, #tpu.memory_space<vmem>>, vector<1x1x48x32xf32>
      %69 = vector.shape_cast %68 : vector<1x1x48x32xf32> to vector<48x32xf32>
      %cst_75 = arith.constant dense<0.000000e+00> : vector<11x32xf32>
      %70 = tpu.matmul %67, %69, %cst_75 {dimension_numbers = #tpu.dot_dimension_numbers<[1], [0], [0], [1], [0, 0, 1, 1], [], []>} : vector<11x48xf32>, vector<48x32xf32>, vector<11x32xf32> -> vector<11x32xf32>
      %71 = arith.addf %63, %70 : vector<11x32xf32>
      %c1_i32_76 = arith.constant 1 : i32
      %72 = arith.addi %arg12, %c1_i32_76 : i32
      %73 = arith.index_cast %72 : i32 to index
      %c3_77 = arith.constant 3 : index
      %c0_78 = arith.constant 0 : index
      %74 = vector.load %arg11[%73, %c3_77, %c0_78] : memref<13x15x48xf32, #tpu.memory_space<vmem>>, vector<1x11x48xf32>
      %75 = vector.shape_cast %74 : vector<1x11x48xf32> to vector<11x48xf32>
      %c1_79 = arith.constant 1 : index
      %c3_80 = arith.constant 3 : index
      %c0_81 = arith.constant 0 : index
      %c0_82 = arith.constant 0 : index
      %76 = vector.load %arg8[%c1_79, %c3_80, %c0_81, %c0_82] : memref<5x5x48x32xf32, #tpu.memory_space<vmem>>, vector<1x1x48x32xf32>
      %77 = vector.shape_cast %76 : vector<1x1x48x32xf32> to vector<48x32xf32>
      %cst_83 = arith.constant dense<0.000000e+00> : vector<11x32xf32>
      %78 = tpu.matmul %75, %77, %cst_83 {dimension_numbers = #tpu.dot_dimension_numbers<[1], [0], [0], [1], [0, 0, 1, 1], [], []>} : vector<11x48xf32>, vector<48x32xf32>, vector<11x32xf32> -> vector<11x32xf32>
      %79 = arith.addf %71, %78 : vector<11x32xf32>
      %c1_i32_84 = arith.constant 1 : i32
      %80 = arith.addi %arg12, %c1_i32_84 : i32
      %81 = arith.index_cast %80 : i32 to index
      %c4_85 = arith.constant 4 : index
      %c0_86 = arith.constant 0 : index
      %82 = vector.load %arg11[%81, %c4_85, %c0_86] : memref<13x15x48xf32, #tpu.memory_space<vmem>>, vector<1x11x48xf32>
      %83 = vector.shape_cast %82 : vector<1x11x48xf32> to vector<11x48xf32>
      %c1_87 = arith.constant 1 : index
      %c4_88 = arith.constant 4 : index
      %c0_89 = arith.constant 0 : index
      %c0_90 = arith.constant 0 : index
      %84 = vector.load %arg8[%c1_87, %c4_88, %c0_89, %c0_90] : memref<5x5x48x32xf32, #tpu.memory_space<vmem>>, vector<1x1x48x32xf32>
      %85 = vector.shape_cast %84 : vector<1x1x48x32xf32> to vector<48x32xf32>
      %cst_91 = arith.constant dense<0.000000e+00> : vector<11x32xf32>
      %86 = tpu.matmul %83, %85, %cst_91 {dimension_numbers = #tpu.dot_dimension_numbers<[1], [0], [0], [1], [0, 0, 1, 1], [], []>} : vector<11x48xf32>, vector<48x32xf32>, vector<11x32xf32> -> vector<11x32xf32>
      %87 = arith.addf %79, %86 : vector<11x32xf32>
      %c2_i32 = arith.constant 2 : i32
      %88 = arith.addi %arg12, %c2_i32 : i32
      %89 = arith.index_cast %88 : i32 to index
      %c0_92 = arith.constant 0 : index
      %c0_93 = arith.constant 0 : index
      %90 = vector.load %arg11[%89, %c0_92, %c0_93] : memref<13x15x48xf32, #tpu.memory_space<vmem>>, vector<1x11x48xf32>
      %91 = vector.shape_cast %90 : vector<1x11x48xf32> to vector<11x48xf32>
      %c2_94 = arith.constant 2 : index
      %c0_95 = arith.constant 0 : index
      %c0_96 = arith.constant 0 : index
      %c0_97 = arith.constant 0 : index
      %92 = vector.load %arg8[%c2_94, %c0_95, %c0_96, %c0_97] : memref<5x5x48x32xf32, #tpu.memory_space<vmem>>, vector<1x1x48x32xf32>
      %93 = vector.shape_cast %92 : vector<1x1x48x32xf32> to vector<48x32xf32>
      %cst_98 = arith.constant dense<0.000000e+00> : vector<11x32xf32>
      %94 = tpu.matmul %91, %93, %cst_98 {dimension_numbers = #tpu.dot_dimension_numbers<[1], [0], [0], [1], [0, 0, 1, 1], [], []>} : vector<11x48xf32>, vector<48x32xf32>, vector<11x32xf32> -> vector<11x32xf32>
      %95 = arith.addf %87, %94 : vector<11x32xf32>
      %c2_i32_99 = arith.constant 2 : i32
      %96 = arith.addi %arg12, %c2_i32_99 : i32
      %97 = arith.index_cast %96 : i32 to index
      %c1_100 = arith.constant 1 : index
      %c0_101 = arith.constant 0 : index
      %98 = vector.load %arg11[%97, %c1_100, %c0_101] : memref<13x15x48xf32, #tpu.memory_space<vmem>>, vector<1x11x48xf32>
      %99 = vector.shape_cast %98 : vector<1x11x48xf32> to vector<11x48xf32>
      %c2_102 = arith.constant 2 : index
      %c1_103 = arith.constant 1 : index
      %c0_104 = arith.constant 0 : index
      %c0_105 = arith.constant 0 : index
      %100 = vector.load %arg8[%c2_102, %c1_103, %c0_104, %c0_105] : memref<5x5x48x32xf32, #tpu.memory_space<vmem>>, vector<1x1x48x32xf32>
      %101 = vector.shape_cast %100 : vector<1x1x48x32xf32> to vector<48x32xf32>
      %cst_106 = arith.constant dense<0.000000e+00> : vector<11x32xf32>
      %102 = tpu.matmul %99, %101, %cst_106 {dimension_numbers = #tpu.dot_dimension_numbers<[1], [0], [0], [1], [0, 0, 1, 1], [], []>} : vector<11x48xf32>, vector<48x32xf32>, vector<11x32xf32> -> vector<11x32xf32>
      %103 = arith.addf %95, %102 : vector<11x32xf32>
      %c2_i32_107 = arith.constant 2 : i32
      %104 = arith.addi %arg12, %c2_i32_107 : i32
      %105 = arith.index_cast %104 : i32 to index
      %c2_108 = arith.constant 2 : index
      %c0_109 = arith.constant 0 : index
      %106 = vector.load %arg11[%105, %c2_108, %c0_109] : memref<13x15x48xf32, #tpu.memory_space<vmem>>, vector<1x11x48xf32>
      %107 = vector.shape_cast %106 : vector<1x11x48xf32> to vector<11x48xf32>
      %c2_110 = arith.constant 2 : index
      %c2_111 = arith.constant 2 : index
      %c0_112 = arith.constant 0 : index
      %c0_113 = arith.constant 0 : index
      %108 = vector.load %arg8[%c2_110, %c2_111, %c0_112, %c0_113] : memref<5x5x48x32xf32, #tpu.memory_space<vmem>>, vector<1x1x48x32xf32>
      %109 = vector.shape_cast %108 : vector<1x1x48x32xf32> to vector<48x32xf32>
      %cst_114 = arith.constant dense<0.000000e+00> : vector<11x32xf32>
      %110 = tpu.matmul %107, %109, %cst_114 {dimension_numbers = #tpu.dot_dimension_numbers<[1], [0], [0], [1], [0, 0, 1, 1], [], []>} : vector<11x48xf32>, vector<48x32xf32>, vector<11x32xf32> -> vector<11x32xf32>
      %111 = arith.addf %103, %110 : vector<11x32xf32>
      %c2_i32_115 = arith.constant 2 : i32
      %112 = arith.addi %arg12, %c2_i32_115 : i32
      %113 = arith.index_cast %112 : i32 to index
      %c3_116 = arith.constant 3 : index
      %c0_117 = arith.constant 0 : index
      %114 = vector.load %arg11[%113, %c3_116, %c0_117] : memref<13x15x48xf32, #tpu.memory_space<vmem>>, vector<1x11x48xf32>
      %115 = vector.shape_cast %114 : vector<1x11x48xf32> to vector<11x48xf32>
      %c2_118 = arith.constant 2 : index
      %c3_119 = arith.constant 3 : index
      %c0_120 = arith.constant 0 : index
      %c0_121 = arith.constant 0 : index
      %116 = vector.load %arg8[%c2_118, %c3_119, %c0_120, %c0_121] : memref<5x5x48x32xf32, #tpu.memory_space<vmem>>, vector<1x1x48x32xf32>
      %117 = vector.shape_cast %116 : vector<1x1x48x32xf32> to vector<48x32xf32>
      %cst_122 = arith.constant dense<0.000000e+00> : vector<11x32xf32>
      %118 = tpu.matmul %115, %117, %cst_122 {dimension_numbers = #tpu.dot_dimension_numbers<[1], [0], [0], [1], [0, 0, 1, 1], [], []>} : vector<11x48xf32>, vector<48x32xf32>, vector<11x32xf32> -> vector<11x32xf32>
      %119 = arith.addf %111, %118 : vector<11x32xf32>
      %c2_i32_123 = arith.constant 2 : i32
      %120 = arith.addi %arg12, %c2_i32_123 : i32
      %121 = arith.index_cast %120 : i32 to index
      %c4_124 = arith.constant 4 : index
      %c0_125 = arith.constant 0 : index
      %122 = vector.load %arg11[%121, %c4_124, %c0_125] : memref<13x15x48xf32, #tpu.memory_space<vmem>>, vector<1x11x48xf32>
      %123 = vector.shape_cast %122 : vector<1x11x48xf32> to vector<11x48xf32>
      %c2_126 = arith.constant 2 : index
      %c4_127 = arith.constant 4 : index
      %c0_128 = arith.constant 0 : index
      %c0_129 = arith.constant 0 : index
      %124 = vector.load %arg8[%c2_126, %c4_127, %c0_128, %c0_129] : memref<5x5x48x32xf32, #tpu.memory_space<vmem>>, vector<1x1x48x32xf32>
      %125 = vector.shape_cast %124 : vector<1x1x48x32xf32> to vector<48x32xf32>
      %cst_130 = arith.constant dense<0.000000e+00> : vector<11x32xf32>
      %126 = tpu.matmul %123, %125, %cst_130 {dimension_numbers = #tpu.dot_dimension_numbers<[1], [0], [0], [1], [0, 0, 1, 1], [], []>} : vector<11x48xf32>, vector<48x32xf32>, vector<11x32xf32> -> vector<11x32xf32>
      %127 = arith.addf %119, %126 : vector<11x32xf32>
      %c3_i32_131 = arith.constant 3 : i32
      %128 = arith.addi %arg12, %c3_i32_131 : i32
      %129 = arith.index_cast %128 : i32 to index
      %c0_132 = arith.constant 0 : index
      %c0_133 = arith.constant 0 : index
      %130 = vector.load %arg11[%129, %c0_132, %c0_133] : memref<13x15x48xf32, #tpu.memory_space<vmem>>, vector<1x11x48xf32>
      %131 = vector.shape_cast %130 : vector<1x11x48xf32> to vector<11x48xf32>
      %c3_134 = arith.constant 3 : index
      %c0_135 = arith.constant 0 : index
      %c0_136 = arith.constant 0 : index
      %c0_137 = arith.constant 0 : index
      %132 = vector.load %arg8[%c3_134, %c0_135, %c0_136, %c0_137] : memref<5x5x48x32xf32, #tpu.memory_space<vmem>>, vector<1x1x48x32xf32>
      %133 = vector.shape_cast %132 : vector<1x1x48x32xf32> to vector<48x32xf32>
      %cst_138 = arith.constant dense<0.000000e+00> : vector<11x32xf32>
      %134 = tpu.matmul %131, %133, %cst_138 {dimension_numbers = #tpu.dot_dimension_numbers<[1], [0], [0], [1], [0, 0, 1, 1], [], []>} : vector<11x48xf32>, vector<48x32xf32>, vector<11x32xf32> -> vector<11x32xf32>
      %135 = arith.addf %127, %134 : vector<11x32xf32>
      %c3_i32_139 = arith.constant 3 : i32
      %136 = arith.addi %arg12, %c3_i32_139 : i32
      %137 = arith.index_cast %136 : i32 to index
      %c1_140 = arith.constant 1 : index
      %c0_141 = arith.constant 0 : index
      %138 = vector.load %arg11[%137, %c1_140, %c0_141] : memref<13x15x48xf32, #tpu.memory_space<vmem>>, vector<1x11x48xf32>
      %139 = vector.shape_cast %138 : vector<1x11x48xf32> to vector<11x48xf32>
      %c3_142 = arith.constant 3 : index
      %c1_143 = arith.constant 1 : index
      %c0_144 = arith.constant 0 : index
      %c0_145 = arith.constant 0 : index
      %140 = vector.load %arg8[%c3_142, %c1_143, %c0_144, %c0_145] : memref<5x5x48x32xf32, #tpu.memory_space<vmem>>, vector<1x1x48x32xf32>
      %141 = vector.shape_cast %140 : vector<1x1x48x32xf32> to vector<48x32xf32>
      %cst_146 = arith.constant dense<0.000000e+00> : vector<11x32xf32>
      %142 = tpu.matmul %139, %141, %cst_146 {dimension_numbers = #tpu.dot_dimension_numbers<[1], [0], [0], [1], [0, 0, 1, 1], [], []>} : vector<11x48xf32>, vector<48x32xf32>, vector<11x32xf32> -> vector<11x32xf32>
      %143 = arith.addf %135, %142 : vector<11x32xf32>
      %c3_i32_147 = arith.constant 3 : i32
      %144 = arith.addi %arg12, %c3_i32_147 : i32
      %145 = arith.index_cast %144 : i32 to index
      %c2_148 = arith.constant 2 : index
      %c0_149 = arith.constant 0 : index
      %146 = vector.load %arg11[%145, %c2_148, %c0_149] : memref<13x15x48xf32, #tpu.memory_space<vmem>>, vector<1x11x48xf32>
      %147 = vector.shape_cast %146 : vector<1x11x48xf32> to vector<11x48xf32>
      %c3_150 = arith.constant 3 : index
      %c2_151 = arith.constant 2 : index
      %c0_152 = arith.constant 0 : index
      %c0_153 = arith.constant 0 : index
      %148 = vector.load %arg8[%c3_150, %c2_151, %c0_152, %c0_153] : memref<5x5x48x32xf32, #tpu.memory_space<vmem>>, vector<1x1x48x32xf32>
      %149 = vector.shape_cast %148 : vector<1x1x48x32xf32> to vector<48x32xf32>
      %cst_154 = arith.constant dense<0.000000e+00> : vector<11x32xf32>
      %150 = tpu.matmul %147, %149, %cst_154 {dimension_numbers = #tpu.dot_dimension_numbers<[1], [0], [0], [1], [0, 0, 1, 1], [], []>} : vector<11x48xf32>, vector<48x32xf32>, vector<11x32xf32> -> vector<11x32xf32>
      %151 = arith.addf %143, %150 : vector<11x32xf32>
      %c3_i32_155 = arith.constant 3 : i32
      %152 = arith.addi %arg12, %c3_i32_155 : i32
      %153 = arith.index_cast %152 : i32 to index
      %c3_156 = arith.constant 3 : index
      %c0_157 = arith.constant 0 : index
      %154 = vector.load %arg11[%153, %c3_156, %c0_157] : memref<13x15x48xf32, #tpu.memory_space<vmem>>, vector<1x11x48xf32>
      %155 = vector.shape_cast %154 : vector<1x11x48xf32> to vector<11x48xf32>
      %c3_158 = arith.constant 3 : index
      %c3_159 = arith.constant 3 : index
      %c0_160 = arith.constant 0 : index
      %c0_161 = arith.constant 0 : index
      %156 = vector.load %arg8[%c3_158, %c3_159, %c0_160, %c0_161] : memref<5x5x48x32xf32, #tpu.memory_space<vmem>>, vector<1x1x48x32xf32>
      %157 = vector.shape_cast %156 : vector<1x1x48x32xf32> to vector<48x32xf32>
      %cst_162 = arith.constant dense<0.000000e+00> : vector<11x32xf32>
      %158 = tpu.matmul %155, %157, %cst_162 {dimension_numbers = #tpu.dot_dimension_numbers<[1], [0], [0], [1], [0, 0, 1, 1], [], []>} : vector<11x48xf32>, vector<48x32xf32>, vector<11x32xf32> -> vector<11x32xf32>
      %159 = arith.addf %151, %158 : vector<11x32xf32>
      %c3_i32_163 = arith.constant 3 : i32
      %160 = arith.addi %arg12, %c3_i32_163 : i32
      %161 = arith.index_cast %160 : i32 to index
      %c4_164 = arith.constant 4 : index
      %c0_165 = arith.constant 0 : index
      %162 = vector.load %arg11[%161, %c4_164, %c0_165] : memref<13x15x48xf32, #tpu.memory_space<vmem>>, vector<1x11x48xf32>
      %163 = vector.shape_cast %162 : vector<1x11x48xf32> to vector<11x48xf32>
      %c3_166 = arith.constant 3 : index
      %c4_167 = arith.constant 4 : index
      %c0_168 = arith.constant 0 : index
      %c0_169 = arith.constant 0 : index
      %164 = vector.load %arg8[%c3_166, %c4_167, %c0_168, %c0_169] : memref<5x5x48x32xf32, #tpu.memory_space<vmem>>, vector<1x1x48x32xf32>
      %165 = vector.shape_cast %164 : vector<1x1x48x32xf32> to vector<48x32xf32>
      %cst_170 = arith.constant dense<0.000000e+00> : vector<11x32xf32>
      %166 = tpu.matmul %163, %165, %cst_170 {dimension_numbers = #tpu.dot_dimension_numbers<[1], [0], [0], [1], [0, 0, 1, 1], [], []>} : vector<11x48xf32>, vector<48x32xf32>, vector<11x32xf32> -> vector<11x32xf32>
      %167 = arith.addf %159, %166 : vector<11x32xf32>
      %c4_i32 = arith.constant 4 : i32
      %168 = arith.addi %arg12, %c4_i32 : i32
      %169 = arith.index_cast %168 : i32 to index
      %c0_171 = arith.constant 0 : index
      %c0_172 = arith.constant 0 : index
      %170 = vector.load %arg11[%169, %c0_171, %c0_172] : memref<13x15x48xf32, #tpu.memory_space<vmem>>, vector<1x11x48xf32>
      %171 = vector.shape_cast %170 : vector<1x11x48xf32> to vector<11x48xf32>
      %c4_173 = arith.constant 4 : index
      %c0_174 = arith.constant 0 : index
      %c0_175 = arith.constant 0 : index
      %c0_176 = arith.constant 0 : index
      %172 = vector.load %arg8[%c4_173, %c0_174, %c0_175, %c0_176] : memref<5x5x48x32xf32, #tpu.memory_space<vmem>>, vector<1x1x48x32xf32>
      %173 = vector.shape_cast %172 : vector<1x1x48x32xf32> to vector<48x32xf32>
      %cst_177 = arith.constant dense<0.000000e+00> : vector<11x32xf32>
      %174 = tpu.matmul %171, %173, %cst_177 {dimension_numbers = #tpu.dot_dimension_numbers<[1], [0], [0], [1], [0, 0, 1, 1], [], []>} : vector<11x48xf32>, vector<48x32xf32>, vector<11x32xf32> -> vector<11x32xf32>
      %175 = arith.addf %167, %174 : vector<11x32xf32>
      %c4_i32_178 = arith.constant 4 : i32
      %176 = arith.addi %arg12, %c4_i32_178 : i32
      %177 = arith.index_cast %176 : i32 to index
      %c1_179 = arith.constant 1 : index
      %c0_180 = arith.constant 0 : index
      %178 = vector.load %arg11[%177, %c1_179, %c0_180] : memref<13x15x48xf32, #tpu.memory_space<vmem>>, vector<1x11x48xf32>
      %179 = vector.shape_cast %178 : vector<1x11x48xf32> to vector<11x48xf32>
      %c4_181 = arith.constant 4 : index
      %c1_182 = arith.constant 1 : index
      %c0_183 = arith.constant 0 : index
      %c0_184 = arith.constant 0 : index
      %180 = vector.load %arg8[%c4_181, %c1_182, %c0_183, %c0_184] : memref<5x5x48x32xf32, #tpu.memory_space<vmem>>, vector<1x1x48x32xf32>
      %181 = vector.shape_cast %180 : vector<1x1x48x32xf32> to vector<48x32xf32>
      %cst_185 = arith.constant dense<0.000000e+00> : vector<11x32xf32>
      %182 = tpu.matmul %179, %181, %cst_185 {dimension_numbers = #tpu.dot_dimension_numbers<[1], [0], [0], [1], [0, 0, 1, 1], [], []>} : vector<11x48xf32>, vector<48x32xf32>, vector<11x32xf32> -> vector<11x32xf32>
      %183 = arith.addf %175, %182 : vector<11x32xf32>
      %c4_i32_186 = arith.constant 4 : i32
      %184 = arith.addi %arg12, %c4_i32_186 : i32
      %185 = arith.index_cast %184 : i32 to index
      %c2_187 = arith.constant 2 : index
      %c0_188 = arith.constant 0 : index
      %186 = vector.load %arg11[%185, %c2_187, %c0_188] : memref<13x15x48xf32, #tpu.memory_space<vmem>>, vector<1x11x48xf32>
      %187 = vector.shape_cast %186 : vector<1x11x48xf32> to vector<11x48xf32>
      %c4_189 = arith.constant 4 : index
      %c2_190 = arith.constant 2 : index
      %c0_191 = arith.constant 0 : index
      %c0_192 = arith.constant 0 : index
      %188 = vector.load %arg8[%c4_189, %c2_190, %c0_191, %c0_192] : memref<5x5x48x32xf32, #tpu.memory_space<vmem>>, vector<1x1x48x32xf32>
      %189 = vector.shape_cast %188 : vector<1x1x48x32xf32> to vector<48x32xf32>
      %cst_193 = arith.constant dense<0.000000e+00> : vector<11x32xf32>
      %190 = tpu.matmul %187, %189, %cst_193 {dimension_numbers = #tpu.dot_dimension_numbers<[1], [0], [0], [1], [0, 0, 1, 1], [], []>} : vector<11x48xf32>, vector<48x32xf32>, vector<11x32xf32> -> vector<11x32xf32>
      %191 = arith.addf %183, %190 : vector<11x32xf32>
      %c4_i32_194 = arith.constant 4 : i32
      %192 = arith.addi %arg12, %c4_i32_194 : i32
      %193 = arith.index_cast %192 : i32 to index
      %c3_195 = arith.constant 3 : index
      %c0_196 = arith.constant 0 : index
      %194 = vector.load %arg11[%193, %c3_195, %c0_196] : memref<13x15x48xf32, #tpu.memory_space<vmem>>, vector<1x11x48xf32>
      %195 = vector.shape_cast %194 : vector<1x11x48xf32> to vector<11x48xf32>
      %c4_197 = arith.constant 4 : index
      %c3_198 = arith.constant 3 : index
      %c0_199 = arith.constant 0 : index
      %c0_200 = arith.constant 0 : index
      %196 = vector.load %arg8[%c4_197, %c3_198, %c0_199, %c0_200] : memref<5x5x48x32xf32, #tpu.memory_space<vmem>>, vector<1x1x48x32xf32>
      %197 = vector.shape_cast %196 : vector<1x1x48x32xf32> to vector<48x32xf32>
      %cst_201 = arith.constant dense<0.000000e+00> : vector<11x32xf32>
      %198 = tpu.matmul %195, %197, %cst_201 {dimension_numbers = #tpu.dot_dimension_numbers<[1], [0], [0], [1], [0, 0, 1, 1], [], []>} : vector<11x48xf32>, vector<48x32xf32>, vector<11x32xf32> -> vector<11x32xf32>
      %199 = arith.addf %191, %198 : vector<11x32xf32>
      %c4_i32_202 = arith.constant 4 : i32
      %200 = arith.addi %arg12, %c4_i32_202 : i32
      %201 = arith.index_cast %200 : i32 to index
      %c4_203 = arith.constant 4 : index
      %c0_204 = arith.constant 0 : index
      %202 = vector.load %arg11[%201, %c4_203, %c0_204] : memref<13x15x48xf32, #tpu.memory_space<vmem>>, vector<1x11x48xf32>
      %203 = vector.shape_cast %202 : vector<1x11x48xf32> to vector<11x48xf32>
      %c4_205 = arith.constant 4 : index
      %c4_206 = arith.constant 4 : index
      %c0_207 = arith.constant 0 : index
      %c0_208 = arith.constant 0 : index
      %204 = vector.load %arg8[%c4_205, %c4_206, %c0_207, %c0_208] : memref<5x5x48x32xf32, #tpu.memory_space<vmem>>, vector<1x1x48x32xf32>
      %205 = vector.shape_cast %204 : vector<1x1x48x32xf32> to vector<48x32xf32>
      %cst_209 = arith.constant dense<0.000000e+00> : vector<11x32xf32>
      %206 = tpu.matmul %203, %205, %cst_209 {dimension_numbers = #tpu.dot_dimension_numbers<[1], [0], [0], [1], [0, 0, 1, 1], [], []>} : vector<11x48xf32>, vector<48x32xf32>, vector<11x32xf32> -> vector<11x32xf32>
      %207 = arith.addf %199, %206 : vector<11x32xf32>
      %cst_210 = arith.constant 0.000000e+00 : f32
      %208 = vector.broadcast %cst_210 : f32 to vector<11x32xf32>
      %209 = arith.subf %208, %207 : vector<11x32xf32>
      %210 = math.exp %209 : vector<11x32xf32>
      %cst_211 = arith.constant 1.000000e+00 : f32
      %211 = vector.broadcast %cst_211 : f32 to vector<11x32xf32>
      %212 = arith.addf %211, %210 : vector<11x32xf32>
      %cst_212 = arith.constant 1.000000e+00 : f32
      %213 = vector.broadcast %cst_212 : f32 to vector<11x32xf32>
      %214 = arith.divf %213, %212 : vector<11x32xf32>
      %c0_213 = arith.constant 0 : index
      %215 = arith.index_cast %arg12 : i32 to index
      %c0_214 = arith.constant 0 : index
      %c0_215 = arith.constant 0 : index
      %216 = vector.load %arg9[%c0_213, %215, %c0_214, %c0_215] : memref<1x9x11x32xf32, #tpu.memory_space<vmem>>, vector<1x1x11x32xf32>
      %217 = vector.shape_cast %216 : vector<1x1x11x32xf32> to vector<11x32xf32>
      %218 = vector.shape_cast %214 : vector<11x32xf32> to vector<1x1x11x32xf32>
      tpu.vector_store %arg9[%c0_213, %215, %c0_214, %c0_215], %218 {strides = array<i32>} : memref<1x9x11x32xf32, #tpu.memory_space<vmem>>, vector<1x1x11x32xf32>,
    }
    %c9_i32_14 = arith.constant 9 : i32
    return
  }
  func.func @transform_0(%arg0: i32) -> (i32, i32, i32, i32) {
    %c0_i32 = arith.constant 0 : i32
    %c0_i32_0 = arith.constant 0 : i32
    %c0_i32_1 = arith.constant 0 : i32
    %c0_i32_2 = arith.constant 0 : i32
    return %arg0, %c0_i32, %c0_i32_0, %c0_i32_1 : i32, i32, i32, i32
  }
  func.func @transform_1(%arg0: i32) -> (i32, i32, i32, i32) {
    %c0_i32 = arith.constant 0 : i32
    %c0_i32_0 = arith.constant 0 : i32
    %c0_i32_1 = arith.constant 0 : i32
    %c0_i32_2 = arith.constant 0 : i32
    %c0_i32_3 = arith.constant 0 : i32
    return %c0_i32, %c0_i32_0, %c0_i32_1, %c0_i32_2 : i32, i32, i32, i32
  }
  func.func @transform_2(%arg0: i32) -> (i32, i32) {
    %c0_i32 = arith.constant 0 : i32
    %c0_i32_0 = arith.constant 0 : i32
    %c0_i32_1 = arith.constant 0 : i32
    return %c0_i32, %c0_i32_0 : i32, i32
  }
  func.func @transform_3(%arg0: i32) -> (i32, i32) {
    %c0_i32 = arith.constant 0 : i32
    %c0_i32_0 = arith.constant 0 : i32
    %c0_i32_1 = arith.constant 0 : i32
    return %c0_i32, %c0_i32_0 : i32, i32
  }
  func.func @transform_4(%arg0: i32) -> (i32, i32, i32, i32) {
    %c0_i32 = arith.constant 0 : i32
    %c0_i32_0 = arith.constant 0 : i32
    %c0_i32_1 = arith.constant 0 : i32
    %c0_i32_2 = arith.constant 0 : i32
    %c0_i32_3 = arith.constant 0 : i32
    return %c0_i32, %c0_i32_0, %c0_i32_1, %c0_i32_2 : i32, i32, i32, i32
  }
  func.func @transform_5(%arg0: i32) -> (i32, i32) {
    %c0_i32 = arith.constant 0 : i32
    %c0_i32_0 = arith.constant 0 : i32
    %c0_i32_1 = arith.constant 0 : i32
    return %c0_i32, %c0_i32_0 : i32, i32
  }
  func.func @transform_6(%arg0: i32) -> (i32, i32) {
    %c0_i32 = arith.constant 0 : i32
    %c0_i32_0 = arith.constant 0 : i32
    %c0_i32_1 = arith.constant 0 : i32
    return %c0_i32, %c0_i32_0 : i32, i32
  }
  func.func @transform_7(%arg0: i32) -> (i32, i32, i32, i32) {
    %c0_i32 = arith.constant 0 : i32
    %c0_i32_0 = arith.constant 0 : i32
    %c0_i32_1 = arith.constant 0 : i32
    %c0_i32_2 = arith.constant 0 : i32
    %c0_i32_3 = arith.constant 0 : i32
    return %c0_i32, %c0_i32_0, %c0_i32_1, %c0_i32_2 : i32, i32, i32, i32
  }
  func.func @transform_8(%arg0: i32) -> (i32, i32, i32, i32) {
    %c0_i32 = arith.constant 0 : i32
    %c0_i32_0 = arith.constant 0 : i32
    %c0_i32_1 = arith.constant 0 : i32
    %c0_i32_2 = arith.constant 0 : i32
    return %arg0, %c0_i32, %c0_i32_0, %c0_i32_1 : i32, i32, i32, i32
  }
}

</mosaic_0001>

<llo_original>
// kernel: tfblock_v3_forward.1
$region0: #{tfblock_v3_forward.1}
  #allocation0 [shape = 'u32[]', space=smem, size = 0x4, offset = 0x4, fixed_abs, tag = 'smem constant byte address 0x4 - core index']
  #allocation1 [shape = 'u32[144,128]{1,0:T(1,128)}', space=vmem, size = 0x12000, scoped, tag = 'internal scratch']
  #allocation2 [shape = 'f32[7,9,64]{2,1,0:T(8,128)}', space=vmem, size = 0xe000, scoped, tag = 'scratch operand']
  #allocation3 [shape = 'f32[13,15,48]{2,1,0:T(8,128)}', space=vmem, size = 0x1a000, scoped, tag = 'scratch operand']
  %s0 = inlined_call_operand.vmem [shape: f32[2,6,6,32], index: 0, kind: input, shape index: {}]
  %s1 = inlined_call_operand.vmem [shape: f32[4,2,32,64], index: 1, kind: input, shape index: {}]
  %s2 = inlined_call_operand.vmem [shape: f32[1,64], index: 2, kind: input, shape index: {}]
  %s3 = inlined_call_operand.vmem [shape: f32[1,64], index: 3, kind: input, shape index: {}]
  %s4 = inlined_call_operand.vmem [shape: f32[3,3,64,48], index: 4, kind: input, shape index: {}]
  %s5 = inlined_call_operand.vmem [shape: f32[1,48], index: 5, kind: input, shape index: {}]
  %s6 = inlined_call_operand.vmem [shape: f32[1,48], index: 6, kind: input, shape index: {}]
  %s7 = inlined_call_operand.vmem [shape: f32[5,5,48,32], index: 7, kind: input, shape index: {}]
  %s8 = inlined_call_operand.vmem [shape: f32[2,9,11,32], index: 8, kind: output, shape index: {}]
  %s9 = sld [smem:[#allocation0]]
  $region86: #{tfblock_v3_forward.1} parent=0
    _
  %s11 = ssub.s32 1, %s9
  %s12 = scalar_select 0, %s11, %s9
  loop: start=0, step=1, limit=4
  $region2: #{tfblock_v3_forward.1} parent=0 // loop_pre_header
    _
  $region3: #{tfblock_v3_forward.1} parent=0 // loop_header
    %s14 = sphi 0, %s18
    %p15 = scmp.ge.s32.totalorder %s14, 4
    %s24 = sphi 0, %s26
    %s27 = sphi 0, %s24
    %s28 = sphi 0, %s27
    %s44 = sphi 0, %s28
    %s48 = sphi 0, %s48
    %s50 = sphi 0, %s48
    %s51 = sphi 0, %s50
    %s65 = sphi 0, %s51
    %s69 = sphi 0, %s69
    %s71 = sphi 0, %s69
    %s72 = sphi 0, %s71
    %s86 = sphi 0, %s72
    %s90 = sphi 0, %s90
    %s92 = sphi 0, %s90
    %s93 = sphi 0, %s92
    %s107 = sphi 0, %s93
    %s111 = sphi 0, %s111
    %s113 = sphi 0, %s111
    %s114 = sphi 0, %s113
    %s128 = sphi 0, %s114
    %s132 = sphi 0, %s132
    %s134 = sphi 0, %s132
    %s135 = sphi 0, %s134
    %s149 = sphi 0, %s135
    %s153 = sphi 0, %s153
    %s155 = sphi 0, %s153
    %s156 = sphi 0, %s155
    %s170 = sphi 0, %s156
    %s174 = sphi 0, %s174
    %s176 = sphi 0, %s174
    %s177 = sphi 0, %s176
    %s191 = sphi 0, %s177
    %s197 = sphi 0, %s199
    %s200 = sphi 0, %s197
    %s201 = sphi 0, %s200
    %s217 = sphi 0, %s201
  $region4: #{tfblock_v3_forward.1} parent=0 // loop_header_branch
    %17 = sbr.rel (%p15) target = $region8
  $region5: #{tfblock_v3_forward.1} parent=0 // loop_body
    %s19 = ssub.s32 %s14, 1
    %s20 = ssub.s32 %s14, 2
    %s21 = sadd.s32 %s14, 1
    %s22 = ssub.s32 %s14, %s21
    %p23 = scmp.eq.s32.totalorder %s22, 0
    %s25 = sadd.s32 %s24, 1
    %s26 = scalar_select %p23, %s24, %s25
    %p29 = pneg %p23
    %p30 = scmp.eq.s32.totalorder %s14, 1
    %p31 = por %p29, %p30
    %p32 = scmp.ne.s32.totalorder %s24, %s27
    %p33 = scmp.eq.s32.totalorder %s14, 0
    %p34 = por %p32, %p33
    %p35 = scmp.ne.s32.totalorder %s24, %s27
    %p36 = scmp.eq.s32.totalorder %s19, 1
    %p37 = por %p35, %p36
    %p38 = scmp.ne.s32.totalorder %s27, %s28
    %p39 = scmp.eq.s32.totalorder %s19, 0
    %p40 = por %p38, %p39
    %p41 = scmp.ne.s32.totalorder %s27, %s28
    %p42 = scmp.eq.s32.totalorder %s20, 1
    %p43 = por %p41, %p42
    %p45 = scmp.ne.s32.totalorder %s28, %s44
    %p46 = scmp.eq.s32.totalorder %s20, 0
    %p47 = por %p45, %p46
    %s49 = sadd.s32 %s48, 1
    %p52 = scmp.eq.s32.totalorder %s14, 1
    %p53 = scmp.ne.s32.totalorder %s48, %s50
    %p54 = scmp.eq.s32.totalorder %s14, 0
    %p55 = por %p53, %p54
    %p56 = scmp.ne.s32.totalorder %s48, %s50
    %p57 = scmp.eq.s32.totalorder %s19, 1
    %p58 = por %p56, %p57
    %p59 = scmp.ne.s32.totalorder %s50, %s51
    %p60 = scmp.eq.s32.totalorder %s19, 0
    %p61 = por %p59, %p60
    %p62 = scmp.ne.s32.totalorder %s50, %s51
    %p63 = scmp.eq.s32.totalorder %s20, 1
    %p64 = por %p62, %p63
    %p66 = scmp.ne.s32.totalorder %s51, %s65
    %p67 = scmp.eq.s32.totalorder %s20, 0
    %p68 = por %p66, %p67
    %s70 = sadd.s32 %s69, 1
    %p73 = scmp.eq.s32.totalorder %s14, 1
    %p74 = scmp.ne.s32.totalorder %s69, %s71
    %p75 = scmp.eq.s32.totalorder %s14, 0
    %p76 = por %p74, %p75
    %p77 = scmp.ne.s32.totalorder %s69, %s71
    %p78 = scmp.eq.s32.totalorder %s19, 1
    %p79 = por %p77, %p78
    %p80 = scmp.ne.s32.totalorder %s71, %s72
    %p81 = scmp.eq.s32.totalorder %s19, 0
    %p82 = por %p80, %p81
    %p83 = scmp.ne.s32.totalorder %s71, %s72
    %p84 = scmp.eq.s32.totalorder %s20, 1
    %p85 = por %p83, %p84
    %p87 = scmp.ne.s32.totalorder %s72, %s86
    %p88 = scmp.eq.s32.totalorder %s20, 0
    %p89 = por %p87, %p88
    %s91 = sadd.s32 %s90, 1
    %p94 = scmp.eq.s32.totalorder %s14, 1
    %p95 = scmp.ne.s32.totalorder %s90, %s92
    %p96 = scmp.eq.s32.totalorder %s14, 0
    %p97 = por %p95, %p96
    %p98 = scmp.ne.s32.totalorder %s90, %s92
    %p99 = scmp.eq.s32.totalorder %s19, 1
    %p100 = por %p98, %p99
    %p101 = scmp.ne.s32.totalorder %s92, %s93
    %p102 = scmp.eq.s32.totalorder %s19, 0
    %p103 = por %p101, %p102
    %p104 = scmp.ne.s32.totalorder %s92, %s93
    %p105 = scmp.eq.s32.totalorder %s20, 1
    %p106 = por %p104, %p105
    %p108 = scmp.ne.s32.totalorder %s93, %s107
    %p109 = scmp.eq.s32.totalorder %s20, 0
    %p110 = por %p108, %p109
    %s112 = sadd.s32 %s111, 1
    %p115 = scmp.eq.s32.totalorder %s14, 1
    %p116 = scmp.ne.s32.totalorder %s111, %s113
    %p117 = scmp.eq.s32.totalorder %s14, 0
    %p118 = por %p116, %p117
    %p119 = scmp.ne.s32.totalorder %s111, %s113
    %p120 = scmp.eq.s32.totalorder %s19, 1
    %p121 = por %p119, %p120
    %p122 = scmp.ne.s32.totalorder %s113, %s114
    %p123 = scmp.eq.s32.totalorder %s19, 0
    %p124 = por %p122, %p123
    %p125 = scmp.ne.s32.totalorder %s113, %s114
    %p126 = scmp.eq.s32.totalorder %s20, 1
    %p127 = por %p125, %p126
    %p129 = scmp.ne.s32.totalorder %s114, %s128
    %p130 = scmp.eq.s32.totalorder %s20, 0
    %p131 = por %p129, %p130
    %s133 = sadd.s32 %s132, 1
    %p136 = scmp.eq.s32.totalorder %s14, 1
    %p137 = scmp.ne.s32.totalorder %s132, %s134
    %p138 = scmp.eq.s32.totalorder %s14, 0
    %p139 = por %p137, %p138
    %p140 = scmp.ne.s32.totalorder %s132, %s134
    %p141 = scmp.eq.s32.totalorder %s19, 1
    %p142 = por %p140, %p141
    %p143 = scmp.ne.s32.totalorder %s134, %s135
    %p144 = scmp.eq.s32.totalorder %s19, 0
    %p145 = por %p143, %p144
    %p146 = scmp.ne.s32.totalorder %s134, %s135
    %p147 = scmp.eq.s32.totalorder %s20, 1
    %p148 = por %p146, %p147
    %p150 = scmp.ne.s32.totalorder %s135, %s149
    %p151 = scmp.eq.s32.totalorder %s20, 0
    %p152 = por %p150, %p151
    %s154 = sadd.s32 %s153, 1
    %p157 = scmp.eq.s32.totalorder %s14, 1
    %p158 = scmp.ne.s32.totalorder %s153, %s155
    %p159 = scmp.eq.s32.totalorder %s14, 0
    %p160 = por %p158, %p159
    %p161 = scmp.ne.s32.totalorder %s153, %s155
    %p162 = scmp.eq.s32.totalorder %s19, 1
    %p163 = por %p161, %p162
    %p164 = scmp.ne.s32.totalorder %s155, %s156
    %p165 = scmp.eq.s32.totalorder %s19, 0
    %p166 = por %p164, %p165
    %p167 = scmp.ne.s32.totalorder %s155, %s156
    %p168 = scmp.eq.s32.totalorder %s20, 1
    %p169 = por %p167, %p168
    %p171 = scmp.ne.s32.totalorder %s156, %s170
    %p172 = scmp.eq.s32.totalorder %s20, 0
    %p173 = por %p171, %p172
    %s175 = sadd.s32 %s174, 1
    %p178 = scmp.eq.s32.totalorder %s14, 1
    %p179 = scmp.ne.s32.totalorder %s174, %s176
    %p180 = scmp.eq.s32.totalorder %s14, 0
    %p181 = por %p179, %p180
    %p182 = scmp.ne.s32.totalorder %s174, %s176
    %p183 = scmp.eq.s32.totalorder %s19, 1
    %p184 = por %p182, %p183
    %p185 = scmp.ne.s32.totalorder %s176, %s177
    %p186 = scmp.eq.s32.totalorder %s19, 0
    %p187 = por %p185, %p186
    %p188 = scmp.ne.s32.totalorder %s176, %s177
    %p189 = scmp.eq.s32.totalorder %s20, 1
    %p190 = por %p188, %p189
    %p192 = scmp.ne.s32.totalorder %s177, %s191
    %p193 = scmp.eq.s32.totalorder %s20, 0
    %p194 = por %p192, %p193
    %s195 = ssub.s32 %s14, %s21
    %p196 = scmp.eq.s32.totalorder %s195, 0
    %s198 = sadd.s32 %s197, 1
    %s199 = scalar_select %p196, %s197, %s198
    %p202 = pneg %p196
    %p203 = scmp.eq.s32.totalorder %s14, 1
    %p204 = por %p202, %p203
    %p205 = scmp.ne.s32.totalorder %s197, %s200
    %p206 = scmp.eq.s32.totalorder %s14, 0
    %p207 = por %p205, %p206
    %p208 = scmp.ne.s32.totalorder %s197, %s200
    %p209 = scmp.eq.s32.totalorder %s19, 1
    %p210 = por %p208, %p209
    %p211 = scmp.ne.s32.totalorder %s200, %s201
    %p212 = scmp.eq.s32.totalorder %s19, 0
    %p213 = por %p211, %p212
    %p214 = scmp.ne.s32.totalorder %s200, %s201
    %p215 = scmp.eq.s32.totalorder %s20, 1
    %p216 = por %p214, %p215
    %p218 = scmp.ne.s32.totalorder %s201, %s217
    %p219 = scmp.eq.s32.totalorder %s20, 0
    %p220 = por %p218, %p219
    %p221 = scmp.le.s32.totalorder 1, %s14
    %p222 = scmp.lt.s32.totalorder %s14, 3
    %p223 = pnand %p221, %p222
    %p224 = pneg %p223
    // Predicated region
    $region9: #{tfblock_v3_forward.1} parent=5 // pred_check
      _
    $region10: #{tfblock_v3_forward.1} parent=5 // pred_check_branch
      %226 = sbr.rel (%p223) target = $region12
    $region11: #{tfblock_v3_forward.1} parent=5 // pred_region
      %s227 = ssub.s32 %s14, 1
      // Predicated region
      $region13: #{tfblock_v3_forward.1} parent=11 // pred_check
        %p228 = pneg %p61
      $region14: #{tfblock_v3_forward.1} parent=11 // pred_check_branch
        %230 = sbr.rel (%p228) target = $region16
      $region15: #{tfblock_v3_forward.1} parent=11 // pred_region
        _
      $region16: #{tfblock_v3_forward.1} parent=11 // pred_fallthru
        _
      // Predicated region
      $region17: #{tfblock_v3_forward.1} parent=11 // pred_check
        %p231 = pneg %p82
      $region18: #{tfblock_v3_forward.1} parent=11 // pred_check_branch
        %233 = sbr.rel (%p231) target = $region20
      $region19: #{tfblock_v3_forward.1} parent=11 // pred_region
        _
      $region20: #{tfblock_v3_forward.1} parent=11 // pred_fallthru
        _
      // Predicated region
      $region21: #{tfblock_v3_forward.1} parent=11 // pred_check
        %p234 = pneg %p103
      $region22: #{tfblock_v3_forward.1} parent=11 // pred_check_branch
        %236 = sbr.rel (%p234) target = $region24
      $region23: #{tfblock_v3_forward.1} parent=11 // pred_region
        _
      $region24: #{tfblock_v3_forward.1} parent=11 // pred_fallthru
        _
      // Predicated region
      $region25: #{tfblock_v3_forward.1} parent=11 // pred_check
        %p237 = pneg %p124
      $region26: #{tfblock_v3_forward.1} parent=11 // pred_check_branch
        %239 = sbr.rel (%p237) target = $region28
      $region27: #{tfblock_v3_forward.1} parent=11 // pred_region
        _
      $region28: #{tfblock_v3_forward.1} parent=11 // pred_fallthru
        _
      // Predicated region
      $region29: #{tfblock_v3_forward.1} parent=11 // pred_check
        %p240 = pneg %p145
      $region30: #{tfblock_v3_forward.1} parent=11 // pred_check_branch
        %242 = sbr.rel (%p240) target = $region32
      $region31: #{tfblock_v3_forward.1} parent=11 // pred_region
        _
      $region32: #{tfblock_v3_forward.1} parent=11 // pred_fallthru
        _
      // Predicated region
      $region33: #{tfblock_v3_forward.1} parent=11 // pred_check
        %p243 = pneg %p166
      $region34: #{tfblock_v3_forward.1} parent=11 // pred_check_branch
        %245 = sbr.rel (%p243) target = $region36
      $region35: #{tfblock_v3_forward.1} parent=11 // pred_region
        _
      $region36: #{tfblock_v3_forward.1} parent=11 // pred_fallthru
        _
      // Predicated region
      $region37: #{tfblock_v3_forward.1} parent=11 // pred_check
        %p246 = pneg %p187
      $region38: #{tfblock_v3_forward.1} parent=11 // pred_check_branch
        %248 = sbr.rel (%p246) target = $region40
      $region39: #{tfblock_v3_forward.1} parent=11 // pred_region
        _
      $region40: #{tfblock_v3_forward.1} parent=11 // pred_fallthru
        _
    $region12: #{tfblock_v3_forward.1} parent=5 // pred_fallthru
      _
    %p249 = scmp.lt.s32.totalorder %s14, 2
    // Predicated region
    $region41: #{tfblock_v3_forward.1} parent=5 // pred_check
      %p250 = pneg %p249
    $region42: #{tfblock_v3_forward.1} parent=5 // pred_check_branch
      %252 = sbr.rel (%p250) target = $region44
    $region43: #{tfblock_v3_forward.1} parent=5 // pred_region
      // Predicated region
      $region45: #{tfblock_v3_forward.1} parent=43 // pred_check
        %p253 = pneg %p34
      $region46: #{tfblock_v3_forward.1} parent=43 // pred_check_branch
        %255 = sbr.rel (%p253) target = $region48
      $region47: #{tfblock_v3_forward.1} parent=43 // pred_region
        %p256 = scmp.lt.s32.totalorder %s14, 1
        %s257 = scalar_select %p256, %s14, 1
        %s258 = smul.addr %s257, 6
        %s259 = smul.addr %s258, 8
        %s260 = scalar_lea.vmem %s0, %s259
      $region48: #{tfblock_v3_forward.1} parent=43 // pred_fallthru
        _
    $region44: #{tfblock_v3_forward.1} parent=5 // pred_fallthru
      _
    %p261 = scmp.le.s32.totalorder 1, %s14
    %p262 = scmp.lt.s32.totalorder %s14, 3
    %p263 = pnand %p261, %p262
    %p264 = pneg %p263
    // Predicated region
    $region49: #{tfblock_v3_forward.1} parent=5 // pred_check
      _
    $region50: #{tfblock_v3_forward.1} parent=5 // pred_check_branch
      %266 = sbr.rel (%p263) target = $region52
    $region51: #{tfblock_v3_forward.1} parent=5 // pred_region
      %s267 = ssub.s32 %s14, 1
      %p268 = scmp.lt.s32.totalorder %s19, 1
      %s269 = scalar_select %p268, %s19, 1
      %s270 = smul.addr %s269, 6
      %s271 = smul.addr %s270, 8
      %s272 = scalar_lea.vmem %s0, %s271
      %p273 = pneg %p40
      %p274 = pneg %p37
      %p275 = pneg %p61
      %p276 = pneg %p58
      %p277 = pneg %p82
      %p278 = pneg %p79
      %p279 = pneg %p103
      %p280 = pneg %p100
      %p281 = pneg %p124
      %p282 = pneg %p121
      %p283 = pneg %p145
      %p284 = pneg %p142
      %p285 = pneg %p166
      %p286 = pneg %p163
      %p287 = pneg %p187
      %p288 = pneg %p184
      %p289 = pneg %p213
      %p290 = pneg %p210
      %p291 = scmp.lt.s32.totalorder %s19, 1
      %s292 = scalar_select %p291, %s19, 1
      %s293 = smul.addr %s292, 18
      %s294 = smul.addr %s293, 8
      %s295 = scalar_lea.vmem %s8, %s294
      %p296 = scmp.lt.s32.totalorder %s19, 1
      %s297 = scalar_select %p296, %s19, 1
      %s298 = smul.addr %s297, 6
      %s299 = smul.addr %s298, 8
      %s300 = scalar_lea.vmem %s0, %s299
      %p301 = scmp.lt.s32.totalorder %s19, 1
      %s302 = scalar_select %p301, %s19, 1
      %s303 = smul.addr %s302, 18
      %s304 = smul.addr %s303, 8
      %s305 = scalar_lea.vmem %s8, %s304
      %vm306 = vcmask 523264
      %307 = vst.msk [vmem:[#allocation2] sm:$0xff] %vm306, 0.0
      %vm308 = vcmask 516096
      %309 = vst.msk [vmem:[#allocation2 + $0x8] sm:$0x1] %vm308, 0.0
      %310 = vst.msk [vmem:[#allocation2 + $0x10] sm:$0xff] %vm306, 0.0
      %311 = vst.msk [vmem:[#allocation2 + $0x18] sm:$0x1] %vm308, 0.0
      %312 = vst.msk [vmem:[#allocation2 + $0x20] sm:$0xff] %vm306, 0.0
      %313 = vst.msk [vmem:[#allocation2 + $0x28] sm:$0x1] %vm308, 0.0
      %314 = vst.msk [vmem:[#allocation2 + $0x30] sm:$0xff] %vm306, 0.0
      %315 = vst.msk [vmem:[#allocation2 + $0x38] sm:$0x1] %vm308, 0.0
      %316 = vst.msk [vmem:[#allocation2 + $0x40] sm:$0xff] %vm306, 0.0
      %317 = vst.msk [vmem:[#allocation2 + $0x48] sm:$0x1] %vm308, 0.0
      %318 = vst.msk [vmem:[#allocation2 + $0x50] sm:$0xff] %vm306, 0.0
      %319 = vst.msk [vmem:[#allocation2 + $0x58] sm:$0x1] %vm308, 0.0
      %320 = vst.msk [vmem:[#allocation2 + $0x60] sm:$0xff] %vm306, 0.0
      %321 = vst.msk [vmem:[#allocation2 + $0x68] sm:$0x1] %vm308, 0.0
      %vm322 = vcmask 392192
      %323 = vst.msk [vmem:[#allocation3] sm:$0xff] %vm322, 0.0
      %vm324 = vcmask 391168
      %325 = vst.msk [vmem:[#allocation3 + $0x8] sm:$0x7f] %vm324, 0.0
      %326 = vst.msk [vmem:[#allocation3 + $0x10] sm:$0xff] %vm322, 0.0
      %327 = vst.msk [vmem:[#allocation3 + $0x18] sm:$0x7f] %vm324, 0.0
      %328 = vst.msk [vmem:[#allocation3 + $0x20] sm:$0xff] %vm322, 0.0
      %329 = vst.msk [vmem:[#allocation3 + $0x28] sm:$0x7f] %vm324, 0.0
      %330 = vst.msk [vmem:[#allocation3 + $0x30] sm:$0xff] %vm322, 0.0
      %331 = vst.msk [vmem:[#allocation3 + $0x38] sm:$0x7f] %vm324, 0.0
      %332 = vst.msk [vmem:[#allocation3 + $0x40] sm:$0xff] %vm322, 0.0
      %333 = vst.msk [vmem:[#allocation3 + $0x48] sm:$0x7f] %vm324, 0.0
      %334 = vst.msk [vmem:[#allocation3 + $0x50] sm:$0xff] %vm322, 0.0
      %335 = vst.msk [vmem:[#allocation3 + $0x58] sm:$0x7f] %vm324, 0.0
      %336 = vst.msk [vmem:[#allocation3 + $0x60] sm:$0xff] %vm322, 0.0
      %337 = vst.msk [vmem:[#allocation3 + $0x68] sm:$0x7f] %vm324, 0.0
      %338 = vst.msk [vmem:[#allocation3 + $0x70] sm:$0xff] %vm322, 0.0
      %339 = vst.msk [vmem:[#allocation3 + $0x78] sm:$0x7f] %vm324, 0.0
      %340 = vst.msk [vmem:[#allocation3 + $0x80] sm:$0xff] %vm322, 0.0
      %341 = vst.msk [vmem:[#allocation3 + $0x88] sm:$0x7f] %vm324, 0.0
      %342 = vst.msk [vmem:[#allocation3 + $0x90] sm:$0xff] %vm322, 0.0
      %343 = vst.msk [vmem:[#allocation3 + $0x98] sm:$0x7f] %vm324, 0.0
      %344 = vst.msk [vmem:[#allocation3 + $0xa0] sm:$0xff] %vm322, 0.0
      %345 = vst.msk [vmem:[#allocation3 + $0xa8] sm:$0x7f] %vm324, 0.0
      %346 = vst.msk [vmem:[#allocation3 + $0xb0] sm:$0xff] %vm322, 0.0
      %347 = vst.msk [vmem:[#allocation3 + $0xb8] sm:$0x7f] %vm324, 0.0
      %348 = vst.msk [vmem:[#allocation3 + $0xc0] sm:$0xff] %vm322, 0.0
      %349 = vst.msk [vmem:[#allocation3 + $0xc8] sm:$0x7f] %vm324, 0.0
      loop: start=0, step=1, limit=3
      $region53: #{tfblock_v3_forward.1} parent=51 // loop_pre_header
        _
      $region54: #{tfblock_v3_forward.1} parent=51 // loop_header
        %s351 = sphi 0, %s355
        %p352 = scmp.ge.s32.totalorder %s351, 3
      $region55: #{tfblock_v3_forward.1} parent=51 // loop_header_branch
        %354 = sbr.rel (%p352) target = $region59
      $region56: #{tfblock_v3_forward.1} parent=51 // loop_body
        %s356 = smul.u32 %s351, 8
        %s357 = scalar_lea.vmem %s300, %s356
        %v358 = vld [vmem:[%s357] sm:$0x1f]
        %v359 = vld [vmem:[%s1] sm:$0xff]
        %v360 = vld [vmem:[%s1 + $0x8] sm:$0xff]
        %v361 = vld [vmem:[%s1 + $0x10] sm:$0xff]
        %v362 = vld [vmem:[%s1 + $0x18] sm:$0xff]
        %v363 = vld [vmem:[%s357 + $0x1] sm:$0x1f]
        %s364 = scalar_lea.vmem %s1, 32
        %v365 = vld [vmem:[%s364] sm:$0xff]
        %v366 = vld [vmem:[%s364 + $0x8] sm:$0xff]
        %v367 = vld [vmem:[%s364 + $0x10] sm:$0xff]
        %v368 = vld [vmem:[%s364 + $0x18] sm:$0xff]
        %vm369 = vcmask 261120
        %v371 = vsel %vm369, %v363, 0
        %373 = vmatprep.subr.mxu0 0.0
        %374 = vmatpush1.msra.mxu0 %v365
        %375 = vmatprep.subr.mxu0 0.0
        %376 = vmatpush1.msra.mxu0 %v366
        %377 = vmatprep.subr.mxu0 0.0
        %378 = vmatpush1.msra.mxu0 %v367
        %379 = vmatprep.subr.mxu0 0.0
        %380 = vmatpush1.msra.mxu0 %v368
        %381 = vmatprep.subr.mxu0 0.0
        %382 = vmatpush1.msra.mxu0 0.0
        %383 = vmatprep.subr.mxu0 0.0
        %384 = vmatpush1.msra.mxu0 0.0
        %385 = vmatprep.subr.mxu0 0.0
        %386 = vmatpush1.msra.mxu0 0.0
        %387 = vmatprep.subr.mxu0 0.0
        %388 = vmatpush1.msra.mxu0 0.0
        %389 = vmatprep.subr.mxu0 0.0
        %390 = vmatpush1.msra.mxu0 0.0
        %391 = vmatprep.subr.mxu0 0.0
        %392 = vmatpush1.msra.mxu0 0.0
        %393 = vmatprep.subr.mxu0 0.0
        %394 = vmatpush1.msra.mxu0 0.0
        %395 = vmatprep.subr.mxu0 0.0
        %396 = vmatpush1.msra.mxu0 0.0
        %397 = vmatprep.subr.mxu0 0.0
        %398 = vmatpush1.msra.mxu0 0.0
        %399 = vmatprep.subr.mxu0 0.0
        %400 = vmatpush1.msra.mxu0 0.0
        %401 = vmatprep.subr.mxu0 0.0
        %402 = vmatpush1.msra.mxu0 0.0
        %403 = vmatprep.subr.mxu0 0.0
        %404 = vmatpush1.msra.mxu0 0.0
        %405 = vmatprep.subr.mxu0 0.0
        %406 = vmatpush1.msra.mxu0 0.0
        %407 = vmatprep.subr.mxu0 0.0
        %408 = vmatpush1.msra.mxu0 0.0
        %409 = vmatprep.subr.mxu0 0.0
        %410 = vmatpush1.msra.mxu0 0.0
        %411 = vmatprep.subr.mxu0 0.0
        %412 = vmatpush1.msra.mxu0 0.0
        %413 = vmatprep.subr.mxu0 0.0
        %414 = vmatpush1.msra.mxu0 0.0
        %415 = vmatprep.subr.mxu0 0.0
        %416 = vmatpush1.msra.mxu0 0.0
        %417 = vmatprep.subr.mxu0 0.0
        %418 = vmatpush1.msra.mxu0 0.0
        %419 = vmatprep.subr.mxu0 0.0
        %420 = vmatpush1.msra.mxu0 0.0
        %421 = vmatprep.subr.mxu0 0.0
        %422 = vmatpush1.msra.mxu0 0.0
        %423 = vmatprep.subr.mxu0 0.0
        %424 = vmatpush1.msra.mxu0 0.0
        %425 = vmatprep.subr.mxu0 0.0
        %426 = vmatpush1.msra.mxu0 0.0
        %427 = vmatprep.subr.mxu0 0.0
        %428 = vmatpush1.msra.mxu0 0.0
        %429 = vmatprep.subr.mxu0 0.0
        %430 = vmatpush1.msra.mxu0 0.0
        %431 = vmatprep.subr.mxu0 0.0
        %432 = vmatpush1.msra.mxu0 0.0
        %433 = vmatprep.subr.mxu0 0.0
        %434 = vmatpush1.msra.mxu0 0.0
        %435 = vmatprep.subr.mxu0 0.0
        %436 = vmatpush1.msra.mxu0 0.0
        %437 = vmatprep.mubr.f32.mxu0 0.0
        %438 = vmatmul.mubr.f32.gmra.mrb[0].mxu0 %v371
        %v439 = vpop.f32.mrb[0].mxu0
        %v440 = vadd.f32 0.0, %v439
        %v441 = vpop.f32.mrb[0].mxu0
        %442 = vdwg.mxu0
        %v444 = vsel %vm369, %v358, 0
        %446 = vmatprep.subr.mxu0 0.0
        %447 = vmatpush1.msra.mxu0 %v359
        %448 = vmatprep.subr.mxu0 0.0
        %449 = vmatpush1.msra.mxu0 %v360
        %450 = vmatprep.subr.mxu0 0.0
        %451 = vmatpush1.msra.mxu0 %v361
        %452 = vmatprep.subr.mxu0 0.0
        %453 = vmatpush1.msra.mxu0 %v362
        %454 = vmatprep.subr.mxu0 0.0
        %455 = vmatpush1.msra.mxu0 0.0
        %456 = vmatprep.subr.mxu0 0.0
        %457 = vmatpush1.msra.mxu0 0.0
        %458 = vmatprep.subr.mxu0 0.0
        %459 = vmatpush1.msra.mxu0 0.0
        %460 = vmatprep.subr.mxu0 0.0
        %461 = vmatpush1.msra.mxu0 0.0
        %462 = vmatprep.subr.mxu0 0.0
        %463 = vmatpush1.msra.mxu0 0.0
        %464 = vmatprep.subr.mxu0 0.0
        %465 = vmatpush1.msra.mxu0 0.0
        %466 = vmatprep.subr.mxu0 0.0
        %467 = vmatpush1.msra.mxu0 0.0
        %468 = vmatprep.subr.mxu0 0.0
        %469 = vmatpush1.msra.mxu0 0.0
        %470 = vmatprep.subr.mxu0 0.0
        %471 = vmatpush1.msra.mxu0 0.0
        %472 = vmatprep.subr.mxu0 0.0
        %473 = vmatpush1.msra.mxu0 0.0
        %474 = vmatprep.subr.mxu0 0.0
        %475 = vmatpush1.msra.mxu0 0.0
        %476 = vmatprep.subr.mxu0 0.0
        %477 = vmatpush1.msra.mxu0 0.0
        %478 = vmatprep.subr.mxu0 0.0
        %479 = vmatpush1.msra.mxu0 0.0
        %480 = vmatprep.subr.mxu0 0.0
        %481 = vmatpush1.msra.mxu0 0.0
        %482 = vmatprep.subr.mxu0 0.0
        %483 = vmatpush1.msra.mxu0 0.0
        %484 = vmatprep.subr.mxu0 0.0
        %485 = vmatpush1.msra.mxu0 0.0
        %486 = vmatprep.subr.mxu0 0.0
        %487 = vmatpush1.msra.mxu0 0.0
        %488 = vmatprep.subr.mxu0 0.0
        %489 = vmatpush1.msra.mxu0 0.0
        %490 = vmatprep.subr.mxu0 0.0
        %491 = vmatpush1.msra.mxu0 0.0
        %492 = vmatprep.subr.mxu0 0.0
        %493 = vmatpush1.msra.mxu0 0.0
        %494 = vmatprep.subr.mxu0 0.0
        %495 = vmatpush1.msra.mxu0 0.0
        %496 = vmatprep.subr.mxu0 0.0
        %497 = vmatpush1.msra.mxu0 0.0
        %498 = vmatprep.subr.mxu0 0.0
        %499 = vmatpush1.msra.mxu0 0.0
        %500 = vmatprep.subr.mxu0 0.0
        %501 = vmatpush1.msra.mxu0 0.0
        %502 = vmatprep.subr.mxu0 0.0
        %503 = vmatpush1.msra.mxu0 0.0
        %504 = vmatprep.subr.mxu0 0.0
        %505 = vmatpush1.msra.mxu0 0.0
        %506 = vmatprep.subr.mxu0 0.0
        %507 = vmatpush1.msra.mxu0 0.0
        %508 = vmatprep.subr.mxu0 0.0
        %509 = vmatpush1.msra.mxu0 0.0
        %510 = vmatprep.mubr.f32.mxu0 0.0
        %511 = vmatmul.mubr.f32.gmra.mrb[0].mxu0 %v444
        %v512 = vpop.f32.mrb[0].mxu0
        %v513 = vadd.f32 %v440, %v512
        %v514 = vpop.f32.mrb[0].mxu0
        %515 = vdwg.mxu0
        %s516 = sadd.s32 %s351, 1
        %s517 = smul.u32 %s516, 8
        %s518 = scalar_lea.vmem %s300, %s517
        %v519 = vld [vmem:[%s518] sm:$0x1f]
        %s520 = scalar_lea.vmem %s1, 64
        %v521 = vld [vmem:[%s520] sm:$0xff]
        %v522 = vld [vmem:[%s520 + $0x8] sm:$0xff]
        %v523 = vld [vmem:[%s520 + $0x10] sm:$0xff]
        %v524 = vld [vmem:[%s520 + $0x18] sm:$0xff]
        %v526 = vsel %vm369, %v519, 0
        %528 = vmatprep.subr.mxu0 0.0
        %529 = vmatpush1.msra.mxu0 %v521
        %530 = vmatprep.subr.mxu0 0.0
        %531 = vmatpush1.msra.mxu0 %v522
        %532 = vmatprep.subr.mxu0 0.0
        %533 = vmatpush1.msra.mxu0 %v523
        %534 = vmatprep.subr.mxu0 0.0
        %535 = vmatpush1.msra.mxu0 %v524
        %536 = vmatprep.subr.mxu0 0.0
        %537 = vmatpush1.msra.mxu0 0.0
        %538 = vmatprep.subr.mxu0 0.0
        %539 = vmatpush1.msra.mxu0 0.0
        %540 = vmatprep.subr.mxu0 0.0
        %541 = vmatpush1.msra.mxu0 0.0
        %542 = vmatprep.subr.mxu0 0.0
        %543 = vmatpush1.msra.mxu0 0.0
        %544 = vmatprep.subr.mxu0 0.0
        %545 = vmatpush1.msra.mxu0 0.0
        %546 = vmatprep.subr.mxu0 0.0
        %547 = vmatpush1.msra.mxu0 0.0
        %548 = vmatprep.subr.mxu0 0.0
        %549 = vmatpush1.msra.mxu0 0.0
        %550 = vmatprep.subr.mxu0 0.0
        %551 = vmatpush1.msra.mxu0 0.0
        %552 = vmatprep.subr.mxu0 0.0
        %553 = vmatpush1.msra.mxu0 0.0
        %554 = vmatprep.subr.mxu0 0.0
        %555 = vmatpush1.msra.mxu0 0.0
        %556 = vmatprep.subr.mxu0 0.0
        %557 = vmatpush1.msra.mxu0 0.0
        %558 = vmatprep.subr.mxu0 0.0
        %559 = vmatpush1.msra.mxu0 0.0
        %560 = vmatprep.subr.mxu0 0.0
        %561 = vmatpush1.msra.mxu0 0.0
        %562 = vmatprep.subr.mxu0 0.0
        %563 = vmatpush1.msra.mxu0 0.0
        %564 = vmatprep.subr.mxu0 0.0
        %565 = vmatpush1.msra.mxu0 0.0
        %566 = vmatprep.subr.mxu0 0.0
        %567 = vmatpush1.msra.mxu0 0.0
        %568 = vmatprep.subr.mxu0 0.0
        %569 = vmatpush1.msra.mxu0 0.0
        %570 = vmatprep.subr.mxu0 0.0
        %571 = vmatpush1.msra.mxu0 0.0
        %572 = vmatprep.subr.mxu0 0.0
        %573 = vmatpush1.msra.mxu0 0.0
        %574 = vmatprep.subr.mxu0 0.0
        %575 = vmatpush1.msra.mxu0 0.0
        %576 = vmatprep.subr.mxu0 0.0
        %577 = vmatpush1.msra.mxu0 0.0
        %578 = vmatprep.subr.mxu0 0.0
        %579 = vmatpush1.msra.mxu0 0.0
        %580 = vmatprep.subr.mxu0 0.0
        %581 = vmatpush1.msra.mxu0 0.0
        %582 = vmatprep.subr.mxu0 0.0
        %583 = vmatpush1.msra.mxu0 0.0
        %584 = vmatprep.subr.mxu0 0.0
        %585 = vmatpush1.msra.mxu0 0.0
        %586 = vmatprep.subr.mxu0 0.0
        %587 = vmatpush1.msra.mxu0 0.0
        %588 = vmatprep.subr.mxu0 0.0
        %589 = vmatpush1.msra.mxu0 0.0
        %590 = vmatprep.subr.mxu0 0.0
        %591 = vmatpush1.msra.mxu0 0.0
        %592 = vmatprep.mubr.f32.mxu0 0.0
        %593 = vmatmul.mubr.f32.gmra.mrb[0].mxu0 %v526
        %v594 = vpop.f32.mrb[0].mxu0
        %v595 = vadd.f32 0.0, %v594
        %v596 = vpop.f32.mrb[0].mxu0
        %597 = vdwg.mxu0
        %v598 = vadd.f32 %v513, %v595
        %v599 = vld [vmem:[%s518 + $0x1] sm:$0x1f]
        %s600 = scalar_lea.vmem %s1, 96
        %v601 = vld [vmem:[%s600] sm:$0xff]
        %v602 = vld [vmem:[%s600 + $0x8] sm:$0xff]
        %v603 = vld [vmem:[%s600 + $0x10] sm:$0xff]
        %v604 = vld [vmem:[%s600 + $0x18] sm:$0xff]
        %v606 = vsel %vm369, %v599, 0
        %608 = vmatprep.subr.mxu0 0.0
        %609 = vmatpush1.msra.mxu0 %v601
        %610 = vmatprep.subr.mxu0 0.0
        %611 = vmatpush1.msra.mxu0 %v602
        %612 = vmatprep.subr.mxu0 0.0
        %613 = vmatpush1.msra.mxu0 %v603
        %614 = vmatprep.subr.mxu0 0.0
        %615 = vmatpush1.msra.mxu0 %v604
        %616 = vmatprep.subr.mxu0 0.0
        %617 = vmatpush1.msra.mxu0 0.0
        %618 = vmatprep.subr.mxu0 0.0
        %619 = vmatpush1.msra.mxu0 0.0
        %620 = vmatprep.subr.mxu0 0.0
        %621 = vmatpush1.msra.mxu0 0.0
        %622 = vmatprep.subr.mxu0 0.0
        %623 = vmatpush1.msra.mxu0 0.0
        %624 = vmatprep.subr.mxu0 0.0
        %625 = vmatpush1.msra.mxu0 0.0
        %626 = vmatprep.subr.mxu0 0.0
        %627 = vmatpush1.msra.mxu0 0.0
        %628 = vmatprep.subr.mxu0 0.0
        %629 = vmatpush1.msra.mxu0 0.0
        %630 = vmatprep.subr.mxu0 0.0
        %631 = vmatpush1.msra.mxu0 0.0
        %632 = vmatprep.subr.mxu0 0.0
        %633 = vmatpush1.msra.mxu0 0.0
        %634 = vmatprep.subr.mxu0 0.0
        %635 = vmatpush1.msra.mxu0 0.0
        %636 = vmatprep.subr.mxu0 0.0
        %637 = vmatpush1.msra.mxu0 0.0
        %638 = vmatprep.subr.mxu0 0.0
        %639 = vmatpush1.msra.mxu0 0.0
        %640 = vmatprep.subr.mxu0 0.0
        %641 = vmatpush1.msra.mxu0 0.0
        %642 = vmatprep.subr.mxu0 0.0
        %643 = vmatpush1.msra.mxu0 0.0
        %644 = vmatprep.subr.mxu0 0.0
        %645 = vmatpush1.msra.mxu0 0.0
        %646 = vmatprep.subr.mxu0 0.0
        %647 = vmatpush1.msra.mxu0 0.0
        %648 = vmatprep.subr.mxu0 0.0
        %649 = vmatpush1.msra.mxu0 0.0
        %650 = vmatprep.subr.mxu0 0.0
        %651 = vmatpush1.msra.mxu0 0.0
        %652 = vmatprep.subr.mxu0 0.0
        %653 = vmatpush1.msra.mxu0 0.0
        %654 = vmatprep.subr.mxu0 0.0
        %655 = vmatpush1.msra.mxu0 0.0
        %656 = vmatprep.subr.mxu0 0.0
        %657 = vmatpush1.msra.mxu0 0.0
        %658 = vmatprep.subr.mxu0 0.0
        %659 = vmatpush1.msra.mxu0 0.0
        %660 = vmatprep.subr.mxu0 0.0
        %661 = vmatpush1.msra.mxu0 0.0
        %662 = vmatprep.subr.mxu0 0.0
        %663 = vmatpush1.msra.mxu0 0.0
        %664 = vmatprep.subr.mxu0 0.0
        %665 = vmatpush1.msra.mxu0 0.0
        %666 = vmatprep.subr.mxu0 0.0
        %667 = vmatpush1.msra.mxu0 0.0
        %668 = vmatprep.subr.mxu0 0.0
        %669 = vmatpush1.msra.mxu0 0.0
        %670 = vmatprep.subr.mxu0 0.0
        %671 = vmatpush1.msra.mxu0 0.0
        %672 = vmatprep.mubr.f32.mxu0 0.0
        %673 = vmatmul.mubr.f32.gmra.mrb[0].mxu0 %v606
        %v674 = vpop.f32.mrb[0].mxu0
        %v675 = vadd.f32 0.0, %v674
        %v676 = vpop.f32.mrb[0].mxu0
        %677 = vdwg.mxu0
        %v678 = vadd.f32 %v598, %v675
        %s679 = sadd.s32 %s351, 2
        %s680 = smul.u32 %s679, 8
        %s681 = scalar_lea.vmem %s300, %s680
        %v682 = vld [vmem:[%s681] sm:$0x1f]
        %s683 = scalar_lea.vmem %s1, 128
        %v684 = vld [vmem:[%s683] sm:$0xff]
        %v685 = vld [vmem:[%s683 + $0x8] sm:$0xff]
        %v686 = vld [vmem:[%s683 + $0x10] sm:$0xff]
        %v687 = vld [vmem:[%s683 + $0x18] sm:$0xff]
        %v689 = vsel %vm369, %v682, 0
        %691 = vmatprep.subr.mxu0 0.0
        %692 = vmatpush1.msra.mxu0 %v684
        %693 = vmatprep.subr.mxu0 0.0
        %694 = vmatpush1.msra.mxu0 %v685
        %695 = vmatprep.subr.mxu0 0.0
        %696 = vmatpush1.msra.mxu0 %v686
        %697 = vmatprep.subr.mxu0 0.0
        %698 = vmatpush1.msra.mxu0 %v687
        %699 = vmatprep.subr.mxu0 0.0
        %700 = vmatpush1.msra.mxu0 0.0
        %701 = vmatprep.subr.mxu0 0.0
        %702 = vmatpush1.msra.mxu0 0.0
        %703 = vmatprep.subr.mxu0 0.0
        %704 = vmatpush1.msra.mxu0 0.0
        %705 = vmatprep.subr.mxu0 0.0
        %706 = vmatpush1.msra.mxu0 0.0
        %707 = vmatprep.subr.mxu0 0.0
        %708 = vmatpush1.msra.mxu0 0.0
        %709 = vmatprep.subr.mxu0 0.0
        %710 = vmatpush1.msra.mxu0 0.0
        %711 = vmatprep.subr.mxu0 0.0
        %712 = vmatpush1.msra.mxu0 0.0
        %713 = vmatprep.subr.mxu0 0.0
        %714 = vmatpush1.msra.mxu0 0.0
        %715 = vmatprep.subr.mxu0 0.0
        %716 = vmatpush1.msra.mxu0 0.0
        %717 = vmatprep.subr.mxu0 0.0
        %718 = vmatpush1.msra.mxu0 0.0
        %719 = vmatprep.subr.mxu0 0.0
        %720 = vmatpush1.msra.mxu0 0.0
        %721 = vmatprep.subr.mxu0 0.0
        %722 = vmatpush1.msra.mxu0 0.0
        %723 = vmatprep.subr.mxu0 0.0
        %724 = vmatpush1.msra.mxu0 0.0
        %725 = vmatprep.subr.mxu0 0.0
        %726 = vmatpush1.msra.mxu0 0.0
        %727 = vmatprep.subr.mxu0 0.0
        %728 = vmatpush1.msra.mxu0 0.0
        %729 = vmatprep.subr.mxu0 0.0
        %730 = vmatpush1.msra.mxu0 0.0
        %731 = vmatprep.subr.mxu0 0.0
        %732 = vmatpush1.msra.mxu0 0.0
        %733 = vmatprep.subr.mxu0 0.0
        %734 = vmatpush1.msra.mxu0 0.0
        %735 = vmatprep.subr.mxu0 0.0
        %736 = vmatpush1.msra.mxu0 0.0
        %737 = vmatprep.subr.mxu0 0.0
        %738 = vmatpush1.msra.mxu0 0.0
        %739 = vmatprep.subr.mxu0 0.0
        %740 = vmatpush1.msra.mxu0 0.0
        %741 = vmatprep.subr.mxu0 0.0
        %742 = vmatpush1.msra.mxu0 0.0
        %743 = vmatprep.subr.mxu0 0.0
        %744 = vmatpush1.msra.mxu0 0.0
        %745 = vmatprep.subr.mxu0 0.0
        %746 = vmatpush1.msra.mxu0 0.0
        %747 = vmatprep.subr.mxu0 0.0
        %748 = vmatpush1.msra.mxu0 0.0
        %749 = vmatprep.subr.mxu0 0.0
        %750 = vmatpush1.msra.mxu0 0.0
        %751 = vmatprep.subr.mxu0 0.0
        %752 = vmatpush1.msra.mxu0 0.0
        %753 = vmatprep.subr.mxu0 0.0
        %754 = vmatpush1.msra.mxu0 0.0
        %755 = vmatprep.mubr.f32.mxu0 0.0
        %756 = vmatmul.mubr.f32.gmra.mrb[0].mxu0 %v689
        %v757 = vpop.f32.mrb[0].mxu0
        %v758 = vadd.f32 0.0, %v757
        %v759 = vpop.f32.mrb[0].mxu0
        %760 = vdwg.mxu0
        %v761 = vadd.f32 %v678, %v758
        %v762 = vld [vmem:[%s681 + $0x1] sm:$0x1f]
        %s763 = scalar_lea.vmem %s1, 160
        %v764 = vld [vmem:[%s763] sm:$0xff]
        %v765 = vld [vmem:[%s763 + $0x8] sm:$0xff]
        %v766 = vld [vmem:[%s763 + $0x10] sm:$0xff]
        %v767 = vld [vmem:[%s763 + $0x18] sm:$0xff]
        %v769 = vsel %vm369, %v762, 0
        %771 = vmatprep.subr.mxu0 0.0
        %772 = vmatpush1.msra.mxu0 %v764
        %773 = vmatprep.subr.mxu0 0.0
        %774 = vmatpush1.msra.mxu0 %v765
        %775 = vmatprep.subr.mxu0 0.0
        %776 = vmatpush1.msra.mxu0 %v766
        %777 = vmatprep.subr.mxu0 0.0
        %778 = vmatpush1.msra.mxu0 %v767
        %779 = vmatprep.subr.mxu0 0.0
        %780 = vmatpush1.msra.mxu0 0.0
        %781 = vmatprep.subr.mxu0 0.0
        %782 = vmatpush1.msra.mxu0 0.0
        %783 = vmatprep.subr.mxu0 0.0
        %784 = vmatpush1.msra.mxu0 0.0
        %785 = vmatprep.subr.mxu0 0.0
        %786 = vmatpush1.msra.mxu0 0.0
        %787 = vmatprep.subr.mxu0 0.0
        %788 = vmatpush1.msra.mxu0 0.0
        %789 = vmatprep.subr.mxu0 0.0
        %790 = vmatpush1.msra.mxu0 0.0
        %791 = vmatprep.subr.mxu0 0.0
        %792 = vmatpush1.msra.mxu0 0.0
        %793 = vmatprep.subr.mxu0 0.0
        %794 = vmatpush1.msra.mxu0 0.0
        %795 = vmatprep.subr.mxu0 0.0
        %796 = vmatpush1.msra.mxu0 0.0
        %797 = vmatprep.subr.mxu0 0.0
        %798 = vmatpush1.msra.mxu0 0.0
        %799 = vmatprep.subr.mxu0 0.0
        %800 = vmatpush1.msra.mxu0 0.0
        %801 = vmatprep.subr.mxu0 0.0
        %802 = vmatpush1.msra.mxu0 0.0
        %803 = vmatprep.subr.mxu0 0.0
        %804 = vmatpush1.msra.mxu0 0.0
        %805 = vmatprep.subr.mxu0 0.0
        %806 = vmatpush1.msra.mxu0 0.0
        %807 = vmatprep.subr.mxu0 0.0
        %808 = vmatpush1.msra.mxu0 0.0
        %809 = vmatprep.subr.mxu0 0.0
        %810 = vmatpush1.msra.mxu0 0.0
        %811 = vmatprep.subr.mxu0 0.0
        %812 = vmatpush1.msra.mxu0 0.0
        %813 = vmatprep.subr.mxu0 0.0
        %814 = vmatpush1.msra.mxu0 0.0
        %815 = vmatprep.subr.mxu0 0.0
        %816 = vmatpush1.msra.mxu0 0.0
        %817 = vmatprep.subr.mxu0 0.0
        %818 = vmatpush1.msra.mxu0 0.0
        %819 = vmatprep.subr.mxu0 0.0
        %820 = vmatpush1.msra.mxu0 0.0
        %821 = vmatprep.subr.mxu0 0.0
        %822 = vmatpush1.msra.mxu0 0.0
        %823 = vmatprep.subr.mxu0 0.0
        %824 = vmatpush1.msra.mxu0 0.0
        %825 = vmatprep.subr.mxu0 0.0
        %826 = vmatpush1.msra.mxu0 0.0
        %827 = vmatprep.subr.mxu0 0.0
        %828 = vmatpush1.msra.mxu0 0.0
        %829 = vmatprep.subr.mxu0 0.0
        %830 = vmatpush1.msra.mxu0 0.0
        %831 = vmatprep.subr.mxu0 0.0
        %832 = vmatpush1.msra.mxu0 0.0
        %833 = vmatprep.subr.mxu0 0.0
        %834 = vmatpush1.msra.mxu0 0.0
        %835 = vmatprep.mubr.f32.mxu0 0.0
        %836 = vmatmul.mubr.f32.gmra.mrb[0].mxu0 %v769
        %v837 = vpop.f32.mrb[0].mxu0
        %v838 = vadd.f32 0.0, %v837
        %v839 = vpop.f32.mrb[0].mxu0
        %840 = vdwg.mxu0
        %v841 = vadd.f32 %v761, %v838
        %s842 = sadd.s32 %s351, 3
        %s843 = smul.u32 %s842, 8
        %s844 = scalar_lea.vmem %s300, %s843
        %v845 = vld [vmem:[%s844] sm:$0x1f]
        %s846 = scalar_lea.vmem %s1, 192
        %v847 = vld [vmem:[%s846] sm:$0xff]
        %v848 = vld [vmem:[%s846 + $0x8] sm:$0xff]
        %v849 = vld [vmem:[%s846 + $0x10] sm:$0xff]
        %v850 = vld [vmem:[%s846 + $0x18] sm:$0xff]
        %v852 = vsel %vm369, %v845, 0
        %854 = vmatprep.subr.mxu0 0.0
        %855 = vmatpush1.msra.mxu0 %v847
        %856 = vmatprep.subr.mxu0 0.0
        %857 = vmatpush1.msra.mxu0 %v848
        %858 = vmatprep.subr.mxu0 0.0
        %859 = vmatpush1.msra.mxu0 %v849
        %860 = vmatprep.subr.mxu0 0.0
        %861 = vmatpush1.msra.mxu0 %v850
        %862 = vmatprep.subr.mxu0 0.0
        %863 = vmatpush1.msra.mxu0 0.0
        %864 = vmatprep.subr.mxu0 0.0
        %865 = vmatpush1.msra.mxu0 0.0
        %866 = vmatprep.subr.mxu0 0.0
        %867 = vmatpush1.msra.mxu0 0.0
        %868 = vmatprep.subr.mxu0 0.0
        %869 = vmatpush1.msra.mxu0 0.0
        %870 = vmatprep.subr.mxu0 0.0
        %871 = vmatpush1.msra.mxu0 0.0
        %872 = vmatprep.subr.mxu0 0.0
        %873 = vmatpush1.msra.mxu0 0.0
        %874 = vmatprep.subr.mxu0 0.0
        %875 = vmatpush1.msra.mxu0 0.0
        %876 = vmatprep.subr.mxu0 0.0
        %877 = vmatpush1.msra.mxu0 0.0
        %878 = vmatprep.subr.mxu0 0.0
        %879 = vmatpush1.msra.mxu0 0.0
        %880 = vmatprep.subr.mxu0 0.0
        %881 = vmatpush1.msra.mxu0 0.0
        %882 = vmatprep.subr.mxu0 0.0
        %883 = vmatpush1.msra.mxu0 0.0
        %884 = vmatprep.subr.mxu0 0.0
        %885 = vmatpush1.msra.mxu0 0.0
        %886 = vmatprep.subr.mxu0 0.0
        %887 = vmatpush1.msra.mxu0 0.0
        %888 = vmatprep.subr.mxu0 0.0
        %889 = vmatpush1.msra.mxu0 0.0
        %890 = vmatprep.subr.mxu0 0.0
        %891 = vmatpush1.msra.mxu0 0.0
        %892 = vmatprep.subr.mxu0 0.0
        %893 = vmatpush1.msra.mxu0 0.0
        %894 = vmatprep.subr.mxu0 0.0
        %895 = vmatpush1.msra.mxu0 0.0
        %896 = vmatprep.subr.mxu0 0.0
        %897 = vmatpush1.msra.mxu0 0.0
        %898 = vmatprep.subr.mxu0 0.0
        %899 = vmatpush1.msra.mxu0 0.0
        %900 = vmatprep.subr.mxu0 0.0
        %901 = vmatpush1.msra.mxu0 0.0
        %902 = vmatprep.subr.mxu0 0.0
        %903 = vmatpush1.msra.mxu0 0.0
        %904 = vmatprep.subr.mxu0 0.0
        %905 = vmatpush1.msra.mxu0 0.0
        %906 = vmatprep.subr.mxu0 0.0
        %907 = vmatpush1.msra.mxu0 0.0
        %908 = vmatprep.subr.mxu0 0.0
        %909 = vmatpush1.msra.mxu0 0.0
        %910 = vmatprep.subr.mxu0 0.0
        %911 = vmatpush1.msra.mxu0 0.0
        %912 = vmatprep.subr.mxu0 0.0
        %913 = vmatpush1.msra.mxu0 0.0
        %914 = vmatprep.subr.mxu0 0.0
        %915 = vmatpush1.msra.mxu0 0.0
        %916 = vmatprep.subr.mxu0 0.0
        %917 = vmatpush1.msra.mxu0 0.0
        %918 = vmatprep.mubr.f32.mxu0 0.0
        %919 = vmatmul.mubr.f32.gmra.mrb[0].mxu0 %v852
        %v920 = vpop.f32.mrb[0].mxu0
        %v921 = vadd.f32 0.0, %v920
        %v922 = vpop.f32.mrb[0].mxu0
        %923 = vdwg.mxu0
        %v924 = vadd.f32 %v841, %v921
        %v925 = vld [vmem:[%s844 + $0x1] sm:$0x1f]
        %s926 = scalar_lea.vmem %s1, 224
        %v927 = vld [vmem:[%s926] sm:$0xff]
        %v928 = vld [vmem:[%s926 + $0x8] sm:$0xff]
        %v929 = vld [vmem:[%s926 + $0x10] sm:$0xff]
        %v930 = vld [vmem:[%s926 + $0x18] sm:$0xff]
        %v932 = vsel %vm369, %v925, 0
        %934 = vmatprep.subr.mxu0 0.0
        %935 = vmatpush1.msra.mxu0 %v927
        %936 = vmatprep.subr.mxu0 0.0
        %937 = vmatpush1.msra.mxu0 %v928
        %938 = vmatprep.subr.mxu0 0.0
        %939 = vmatpush1.msra.mxu0 %v929
        %940 = vmatprep.subr.mxu0 0.0
        %941 = vmatpush1.msra.mxu0 %v930
        %942 = vmatprep.subr.mxu0 0.0
        %943 = vmatpush1.msra.mxu0 0.0
        %944 = vmatprep.subr.mxu0 0.0
        %945 = vmatpush1.msra.mxu0 0.0
        %946 = vmatprep.subr.mxu0 0.0
        %947 = vmatpush1.msra.mxu0 0.0
        %948 = vmatprep.subr.mxu0 0.0
        %949 = vmatpush1.msra.mxu0 0.0
        %950 = vmatprep.subr.mxu0 0.0
        %951 = vmatpush1.msra.mxu0 0.0
        %952 = vmatprep.subr.mxu0 0.0
        %953 = vmatpush1.msra.mxu0 0.0
        %954 = vmatprep.subr.mxu0 0.0
        %955 = vmatpush1.msra.mxu0 0.0
        %956 = vmatprep.subr.mxu0 0.0
        %957 = vmatpush1.msra.mxu0 0.0
        %958 = vmatprep.subr.mxu0 0.0
        %959 = vmatpush1.msra.mxu0 0.0
        %960 = vmatprep.subr.mxu0 0.0
        %961 = vmatpush1.msra.mxu0 0.0
        %962 = vmatprep.subr.mxu0 0.0
        %963 = vmatpush1.msra.mxu0 0.0
        %964 = vmatprep.subr.mxu0 0.0
        %965 = vmatpush1.msra.mxu0 0.0
        %966 = vmatprep.subr.mxu0 0.0
        %967 = vmatpush1.msra.mxu0 0.0
        %968 = vmatprep.subr.mxu0 0.0
        %969 = vmatpush1.msra.mxu0 0.0
        %970 = vmatprep.subr.mxu0 0.0
        %971 = vmatpush1.msra.mxu0 0.0
        %972 = vmatprep.subr.mxu0 0.0
        %973 = vmatpush1.msra.mxu0 0.0
        %974 = vmatprep.subr.mxu0 0.0
        %975 = vmatpush1.msra.mxu0 0.0
        %976 = vmatprep.subr.mxu0 0.0
        %977 = vmatpush1.msra.mxu0 0.0
        %978 = vmatprep.subr.mxu0 0.0
        %979 = vmatpush1.msra.mxu0 0.0
        %980 = vmatprep.subr.mxu0 0.0
        %981 = vmatpush1.msra.mxu0 0.0
        %982 = vmatprep.subr.mxu0 0.0
        %983 = vmatpush1.msra.mxu0 0.0
        %984 = vmatprep.subr.mxu0 0.0
        %985 = vmatpush1.msra.mxu0 0.0
        %986 = vmatprep.subr.mxu0 0.0
        %987 = vmatpush1.msra.mxu0 0.0
        %988 = vmatprep.subr.mxu0 0.0
        %989 = vmatpush1.msra.mxu0 0.0
        %990 = vmatprep.subr.mxu0 0.0
        %991 = vmatpush1.msra.mxu0 0.0
        %992 = vmatprep.subr.mxu0 0.0
        %993 = vmatpush1.msra.mxu0 0.0
        %994 = vmatprep.subr.mxu0 0.0
        %995 = vmatpush1.msra.mxu0 0.0
        %996 = vmatprep.subr.mxu0 0.0
        %997 = vmatpush1.msra.mxu0 0.0
        %998 = vmatprep.mubr.f32.mxu0 0.0
        %999 = vmatmul.mubr.f32.gmra.mrb[0].mxu0 %v932
        %v1000 = vpop.f32.mrb[0].mxu0
        %v1001 = vadd.f32 0.0, %v1000
        %v1002 = vpop.f32.mrb[0].mxu0
        %1003 = vdwg.mxu0
        %v1004 = vadd.f32 %v924, %v1001
        %v1005 = vld [vmem:[%s2] sm:$0x1]
        %v1007 = vlaneseq
        %v1008 = vshrl.u32 %v1007, 7
        %v1009 = vsub.s32 0, %v1008
        %v1010 = vrot.slane %v1005, %v1009
        %v1012 = vmul.f32 %v1004, %v1010
        %v1013 = vld [vmem:[%s3] sm:$0x1]
        %v1015 = vlaneseq
        %v1016 = vshrl.u32 %v1015, 7
        %v1017 = vsub.s32 0, %v1016
        %v1018 = vrot.slane %v1013, %v1017
        %v1020 = vadd.f32 %v1012, %v1018
        %vm1021 = vcmp.ge.f32.partialorder %v1020, 0.0
        %v1022 = vmul.f32 %v1020, 0.2
        %v1023 = vsel %vm1021, %v1020, %v1022
        %s1024 = smul.u32 %s679, 16
        %s1025 = scalar_lea.vmem [#allocation2], %s1024
        %vm1026 = vcmask 520192
        %1027 = vst.msk [vmem:[%s1025 + $0x2] sm:$0x1f] %vm1026, %v1023
      $region57: #{tfblock_v3_forward.1} parent=51 // loop_footer
        %s355 = sadd.s32 1, %s351
      $region58: #{tfblock_v3_forward.1} parent=51 // loop_footer_branch
        %350 = sbr.rel target = $region54
      $region59: #{tfblock_v3_forward.1} parent=51 // loop_exit
        _
      loop: start=0, step=1, limit=5
      $region60: #{tfblock_v3_forward.1} parent=51 // loop_pre_header
        _
      $region61: #{tfblock_v3_forward.1} parent=51 // loop_header
        %s1029 = sphi 0, %s1033
        %p1030 = scmp.ge.s32.totalorder %s1029, 5
      $region62: #{tfblock_v3_forward.1} parent=51 // loop_header_branch
        %1032 = sbr.rel (%p1030) target = $region66
      $region63: #{tfblock_v3_forward.1} parent=51 // loop_body
        %s1034 = smul.u32 %s1029, 16
        %s1035 = scalar_lea.vmem [#allocation2], %s1034
        %v1036 = vld [vmem:[%s1035] sm:$0x7f]
        %v1037 = vld [vmem:[%s4] sm:$0xff]
        %v1038 = vld [vmem:[%s4 + $0x8] sm:$0xff]
        %v1039 = vld [vmem:[%s4 + $0x10] sm:$0xff]
        %v1040 = vld [vmem:[%s4 + $0x18] sm:$0xff]
        %v1041 = vld [vmem:[%s4 + $0x20] sm:$0xff]
        %v1042 = vld [vmem:[%s4 + $0x28] sm:$0xff]
        %v1043 = vld [vmem:[%s4 + $0x30] sm:$0xff]
        %v1044 = vld [vmem:[%s4 + $0x38] sm:$0xff]
        %v1045 = vld [vmem:[%s1035 + $0x1] sm:$0x7f]
        %s1046 = scalar_lea.vmem %s4, 64
        %v1047 = vld [vmem:[%s1046] sm:$0xff]
        %v1048 = vld [vmem:[%s1046 + $0x8] sm:$0xff]
        %v1049 = vld [vmem:[%s1046 + $0x10] sm:$0xff]
        %v1050 = vld [vmem:[%s1046 + $0x18] sm:$0xff]
        %v1051 = vld [vmem:[%s1046 + $0x20] sm:$0xff]
        %v1052 = vld [vmem:[%s1046 + $0x28] sm:$0xff]
        %v1053 = vld [vmem:[%s1046 + $0x30] sm:$0xff]
        %v1054 = vld [vmem:[%s1046 + $0x38] sm:$0xff]
        %v1056 = vsel %vm306, %v1045, 0
        %1058 = vmatprep.subr.mxu0 0.0
        %1059 = vmatpush1.msra.mxu0 %v1047
        %1060 = vmatprep.subr.mxu0 0.0
        %1061 = vmatpush1.msra.mxu0 %v1048
        %1062 = vmatprep.subr.mxu0 0.0
        %1063 = vmatpush1.msra.mxu0 %v1049
        %1064 = vmatprep.subr.mxu0 0.0
        %1065 = vmatpush1.msra.mxu0 %v1050
        %1066 = vmatprep.subr.mxu0 0.0
        %1067 = vmatpush1.msra.mxu0 %v1051
        %1068 = vmatprep.subr.mxu0 0.0
        %1069 = vmatpush1.msra.mxu0 %v1052
        %1070 = vmatprep.subr.mxu0 0.0
        %1071 = vmatpush1.msra.mxu0 %v1053
        %1072 = vmatprep.subr.mxu0 0.0
        %1073 = vmatpush1.msra.mxu0 %v1054
        %1074 = vmatprep.subr.mxu0 0.0
        %1075 = vmatpush1.msra.mxu0 0.0
        %1076 = vmatprep.subr.mxu0 0.0
        %1077 = vmatpush1.msra.mxu0 0.0
        %1078 = vmatprep.subr.mxu0 0.0
        %1079 = vmatpush1.msra.mxu0 0.0
        %1080 = vmatprep.subr.mxu0 0.0
        %1081 = vmatpush1.msra.mxu0 0.0
        %1082 = vmatprep.subr.mxu0 0.0
        %1083 = vmatpush1.msra.mxu0 0.0
        %1084 = vmatprep.subr.mxu0 0.0
        %1085 = vmatpush1.msra.mxu0 0.0
        %1086 = vmatprep.subr.mxu0 0.0
        %1087 = vmatpush1.msra.mxu0 0.0
        %1088 = vmatprep.subr.mxu0 0.0
        %1089 = vmatpush1.msra.mxu0 0.0
        %1090 = vmatprep.subr.mxu0 0.0
        %1091 = vmatpush1.msra.mxu0 0.0
        %1092 = vmatprep.subr.mxu0 0.0
        %1093 = vmatpush1.msra.mxu0 0.0
        %1094 = vmatprep.subr.mxu0 0.0
        %1095 = vmatpush1.msra.mxu0 0.0
        %1096 = vmatprep.subr.mxu0 0.0
        %1097 = vmatpush1.msra.mxu0 0.0
        %1098 = vmatprep.subr.mxu0 0.0
        %1099 = vmatpush1.msra.mxu0 0.0
        %1100 = vmatprep.subr.mxu0 0.0
        %1101 = vmatpush1.msra.mxu0 0.0
        %1102 = vmatprep.subr.mxu0 0.0
        %1103 = vmatpush1.msra.mxu0 0.0
        %1104 = vmatprep.subr.mxu0 0.0
        %1105 = vmatpush1.msra.mxu0 0.0
        %1106 = vmatprep.subr.mxu0 0.0
        %1107 = vmatpush1.msra.mxu0 0.0
        %1108 = vmatprep.subr.mxu0 0.0
        %1109 = vmatpush1.msra.mxu0 0.0
        %1110 = vmatprep.subr.mxu0 0.0
        %1111 = vmatpush1.msra.mxu0 0.0
        %1112 = vmatprep.subr.mxu0 0.0
        %1113 = vmatpush1.msra.mxu0 0.0
        %1114 = vmatprep.subr.mxu0 0.0
        %1115 = vmatpush1.msra.mxu0 0.0
        %1116 = vmatprep.subr.mxu0 0.0
        %1117 = vmatpush1.msra.mxu0 0.0
        %1118 = vmatprep.subr.mxu0 0.0
        %1119 = vmatpush1.msra.mxu0 0.0
        %1120 = vmatprep.subr.mxu0 0.0
        %1121 = vmatpush1.msra.mxu0 0.0
        %1122 = vmatprep.mubr.f32.mxu0 0.0
        %1123 = vmatmul.mubr.f32.gmra.mrb[0].mxu0 %v1056
        %v1124 = vpop.f32.mrb[0].mxu0
        %v1125 = vadd.f32 0.0, %v1124
        %v1126 = vpop.f32.mrb[0].mxu0
        %1127 = vdwg.mxu0
        %v1129 = vsel %vm306, %v1036, 0
        %1131 = vmatprep.subr.mxu0 0.0
        %1132 = vmatpush1.msra.mxu0 %v1037
        %1133 = vmatprep.subr.mxu0 0.0
        %1134 = vmatpush1.msra.mxu0 %v1038
        %1135 = vmatprep.subr.mxu0 0.0
        %1136 = vmatpush1.msra.mxu0 %v1039
        %1137 = vmatprep.subr.mxu0 0.0
        %1138 = vmatpush1.msra.mxu0 %v1040
        %1139 = vmatprep.subr.mxu0 0.0
        %1140 = vmatpush1.msra.mxu0 %v1041
        %1141 = vmatprep.subr.mxu0 0.0
        %1142 = vmatpush1.msra.mxu0 %v1042
        %1143 = vmatprep.subr.mxu0 0.0
        %1144 = vmatpush1.msra.mxu0 %v1043
        %1145 = vmatprep.subr.mxu0 0.0
        %1146 = vmatpush1.msra.mxu0 %v1044
        %1147 = vmatprep.subr.mxu0 0.0
        %1148 = vmatpush1.msra.mxu0 0.0
        %1149 = vmatprep.subr.mxu0 0.0
        %1150 = vmatpush1.msra.mxu0 0.0
        %1151 = vmatprep.subr.mxu0 0.0
        %1152 = vmatpush1.msra.mxu0 0.0
        %1153 = vmatprep.subr.mxu0 0.0
        %1154 = vmatpush1.msra.mxu0 0.0
        %1155 = vmatprep.subr.mxu0 0.0
        %1156 = vmatpush1.msra.mxu0 0.0
        %1157 = vmatprep.subr.mxu0 0.0
        %1158 = vmatpush1.msra.mxu0 0.0
        %1159 = vmatprep.subr.mxu0 0.0
        %1160 = vmatpush1.msra.mxu0 0.0
        %1161 = vmatprep.subr.mxu0 0.0
        %1162 = vmatpush1.msra.mxu0 0.0
        %1163 = vmatprep.subr.mxu0 0.0
        %1164 = vmatpush1.msra.mxu0 0.0
        %1165 = vmatprep.subr.mxu0 0.0
        %1166 = vmatpush1.msra.mxu0 0.0
        %1167 = vmatprep.subr.mxu0 0.0
        %1168 = vmatpush1.msra.mxu0 0.0
        %1169 = vmatprep.subr.mxu0 0.0
        %1170 = vmatpush1.msra.mxu0 0.0
        %1171 = vmatprep.subr.mxu0 0.0
        %1172 = vmatpush1.msra.mxu0 0.0
        %1173 = vmatprep.subr.mxu0 0.0
        %1174 = vmatpush1.msra.mxu0 0.0
        %1175 = vmatprep.subr.mxu0 0.0
        %1176 = vmatpush1.msra.mxu0 0.0
        %1177 = vmatprep.subr.mxu0 0.0
        %1178 = vmatpush1.msra.mxu0 0.0
        %1179 = vmatprep.subr.mxu0 0.0
        %1180 = vmatpush1.msra.mxu0 0.0
        %1181 = vmatprep.subr.mxu0 0.0
        %1182 = vmatpush1.msra.mxu0 0.0
        %1183 = vmatprep.subr.mxu0 0.0
        %1184 = vmatpush1.msra.mxu0 0.0
        %1185 = vmatprep.subr.mxu0 0.0
        %1186 = vmatpush1.msra.mxu0 0.0
        %1187 = vmatprep.subr.mxu0 0.0
        %1188 = vmatpush1.msra.mxu0 0.0
        %1189 = vmatprep.subr.mxu0 0.0
        %1190 = vmatpush1.msra.mxu0 0.0
        %1191 = vmatprep.subr.mxu0 0.0
        %1192 = vmatpush1.msra.mxu0 0.0
        %1193 = vmatprep.subr.mxu0 0.0
        %1194 = vmatpush1.msra.mxu0 0.0
        %1195 = vmatprep.mubr.f32.mxu0 0.0
        %1196 = vmatmul.mubr.f32.gmra.mrb[0].mxu0 %v1129
        %v1197 = vpop.f32.mrb[0].mxu0
        %v1198 = vadd.f32 %v1125, %v1197
        %v1199 = vpop.f32.mrb[0].mxu0
        %1200 = vdwg.mxu0
        %v1201 = vld [vmem:[%s1035 + $0x2] sm:$0x7f]
        %s1202 = scalar_lea.vmem %s4, 128
        %v1203 = vld [vmem:[%s1202] sm:$0xff]
        %v1204 = vld [vmem:[%s1202 + $0x8] sm:$0xff]
        %v1205 = vld [vmem:[%s1202 + $0x10] sm:$0xff]
        %v1206 = vld [vmem:[%s1202 + $0x18] sm:$0xff]
        %v1207 = vld [vmem:[%s1202 + $0x20] sm:$0xff]
        %v1208 = vld [vmem:[%s1202 + $0x28] sm:$0xff]
        %v1209 = vld [vmem:[%s1202 + $0x30] sm:$0xff]
        %v1210 = vld [vmem:[%s1202 + $0x38] sm:$0xff]
        %v1212 = vsel %vm306, %v1201, 0
        %1214 = vmatprep.subr.mxu0 0.0
        %1215 = vmatpush1.msra.mxu0 %v1203
        %1216 = vmatprep.subr.mxu0 0.0
        %1217 = vmatpush1.msra.mxu0 %v1204
        %1218 = vmatprep.subr.mxu0 0.0
        %1219 = vmatpush1.msra.mxu0 %v1205
        %1220 = vmatprep.subr.mxu0 0.0
        %1221 = vmatpush1.msra.mxu0 %v1206
        %1222 = vmatprep.subr.mxu0 0.0
        %1223 = vmatpush1.msra.mxu0 %v1207
        %1224 = vmatprep.subr.mxu0 0.0
        %1225 = vmatpush1.msra.mxu0 %v1208
        %1226 = vmatprep.subr.mxu0 0.0
        %1227 = vmatpush1.msra.mxu0 %v1209
        %1228 = vmatprep.subr.mxu0 0.0
        %1229 = vmatpush1.msra.mxu0 %v1210
        %1230 = vmatprep.subr.mxu0 0.0
        %1231 = vmatpush1.msra.mxu0 0.0
        %1232 = vmatprep.subr.mxu0 0.0
        %1233 = vmatpush1.msra.mxu0 0.0
        %1234 = vmatprep.subr.mxu0 0.0
        %1235 = vmatpush1.msra.mxu0 0.0
        %1236 = vmatprep.subr.mxu0 0.0
        %1237 = vmatpush1.msra.mxu0 0.0
        %1238 = vmatprep.subr.mxu0 0.0
        %1239 = vmatpush1.msra.mxu0 0.0
        %1240 = vmatprep.subr.mxu0 0.0
        %1241 = vmatpush1.msra.mxu0 0.0
        %1242 = vmatprep.subr.mxu0 0.0
        %1243 = vmatpush1.msra.mxu0 0.0
        %1244 = vmatprep.subr.mxu0 0.0
        %1245 = vmatpush1.msra.mxu0 0.0
        %1246 = vmatprep.subr.mxu0 0.0
        %1247 = vmatpush1.msra.mxu0 0.0
        %1248 = vmatprep.subr.mxu0 0.0
        %1249 = vmatpush1.msra.mxu0 0.0
        %1250 = vmatprep.subr.mxu0 0.0
        %1251 = vmatpush1.msra.mxu0 0.0
        %1252 = vmatprep.subr.mxu0 0.0
        %1253 = vmatpush1.msra.mxu0 0.0
        %1254 = vmatprep.subr.mxu0 0.0
        %1255 = vmatpush1.msra.mxu0 0.0
        %1256 = vmatprep.subr.mxu0 0.0
        %1257 = vmatpush1.msra.mxu0 0.0
        %1258 = vmatprep.subr.mxu0 0.0
        %1259 = vmatpush1.msra.mxu0 0.0
        %1260 = vmatprep.subr.mxu0 0.0
        %1261 = vmatpush1.msra.mxu0 0.0
        %1262 = vmatprep.subr.mxu0 0.0
        %1263 = vmatpush1.msra.mxu0 0.0
        %1264 = vmatprep.subr.mxu0 0.0
        %1265 = vmatpush1.msra.mxu0 0.0
        %1266 = vmatprep.subr.mxu0 0.0
        %1267 = vmatpush1.msra.mxu0 0.0
        %1268 = vmatprep.subr.mxu0 0.0
        %1269 = vmatpush1.msra.mxu0 0.0
        %1270 = vmatprep.subr.mxu0 0.0
        %1271 = vmatpush1.msra.mxu0 0.0
        %1272 = vmatprep.subr.mxu0 0.0
        %1273 = vmatpush1.msra.mxu0 0.0
        %1274 = vmatprep.subr.mxu0 0.0
        %1275 = vmatpush1.msra.mxu0 0.0
        %1276 = vmatprep.subr.mxu0 0.0
        %1277 = vmatpush1.msra.mxu0 0.0
        %1278 = vmatprep.mubr.f32.mxu0 0.0
        %1279 = vmatmul.mubr.f32.gmra.mrb[0].mxu0 %v1212
        %v1280 = vpop.f32.mrb[0].mxu0
        %v1281 = vadd.f32 0.0, %v1280
        %v1282 = vpop.f32.mrb[0].mxu0
        %1283 = vdwg.mxu0
        %v1284 = vadd.f32 %v1198, %v1281
        %s1285 = sadd.s32 %s1029, 1
        %s1286 = smul.u32 %s1285, 16
        %s1287 = scalar_lea.vmem [#allocation2], %s1286
        %v1288 = vld [vmem:[%s1287] sm:$0x7f]
        %s1289 = scalar_lea.vmem %s4, 192
        %v1290 = vld [vmem:[%s1289] sm:$0xff]
        %v1291 = vld [vmem:[%s1289 + $0x8] sm:$0xff]
        %v1292 = vld [vmem:[%s1289 + $0x10] sm:$0xff]
        %v1293 = vld [vmem:[%s1289 + $0x18] sm:$0xff]
        %v1294 = vld [vmem:[%s1289 + $0x20] sm:$0xff]
        %v1295 = vld [vmem:[%s1289 + $0x28] sm:$0xff]
        %v1296 = vld [vmem:[%s1289 + $0x30] sm:$0xff]
        %v1297 = vld [vmem:[%s1289 + $0x38] sm:$0xff]
        %v1299 = vsel %vm306, %v1288, 0
        %1301 = vmatprep.subr.mxu0 0.0
        %1302 = vmatpush1.msra.mxu0 %v1290
        %1303 = vmatprep.subr.mxu0 0.0
        %1304 = vmatpush1.msra.mxu0 %v1291
        %1305 = vmatprep.subr.mxu0 0.0
        %1306 = vmatpush1.msra.mxu0 %v1292
        %1307 = vmatprep.subr.mxu0 0.0
        %1308 = vmatpush1.msra.mxu0 %v1293
        %1309 = vmatprep.subr.mxu0 0.0
        %1310 = vmatpush1.msra.mxu0 %v1294
        %1311 = vmatprep.subr.mxu0 0.0
        %1312 = vmatpush1.msra.mxu0 %v1295
        %1313 = vmatprep.subr.mxu0 0.0
        %1314 = vmatpush1.msra.mxu0 %v1296
        %1315 = vmatprep.subr.mxu0 0.0
        %1316 = vmatpush1.msra.mxu0 %v1297
        %1317 = vmatprep.subr.mxu0 0.0
        %1318 = vmatpush1.msra.mxu0 0.0
        %1319 = vmatprep.subr.mxu0 0.0
        %1320 = vmatpush1.msra.mxu0 0.0
        %1321 = vmatprep.subr.mxu0 0.0
        %1322 = vmatpush1.msra.mxu0 0.0
        %1323 = vmatprep.subr.mxu0 0.0
        %1324 = vmatpush1.msra.mxu0 0.0
        %1325 = vmatprep.subr.mxu0 0.0
        %1326 = vmatpush1.msra.mxu0 0.0
        %1327 = vmatprep.subr.mxu0 0.0
        %1328 = vmatpush1.msra.mxu0 0.0
        %1329 = vmatprep.subr.mxu0 0.0
        %1330 = vmatpush1.msra.mxu0 0.0
        %1331 = vmatprep.subr.mxu0 0.0
        %1332 = vmatpush1.msra.mxu0 0.0
        %1333 = vmatprep.subr.mxu0 0.0
        %1334 = vmatpush1.msra.mxu0 0.0
        %1335 = vmatprep.subr.mxu0 0.0
        %1336 = vmatpush1.msra.mxu0 0.0
        %1337 = vmatprep.subr.mxu0 0.0
        %1338 = vmatpush1.msra.mxu0 0.0
        %1339 = vmatprep.subr.mxu0 0.0
        %1340 = vmatpush1.msra.mxu0 0.0
        %1341 = vmatprep.subr.mxu0 0.0
        %1342 = vmatpush1.msra.mxu0 0.0
        %1343 = vmatprep.subr.mxu0 0.0
        %1344 = vmatpush1.msra.mxu0 0.0
        %1345 = vmatprep.subr.mxu0 0.0
        %1346 = vmatpush1.msra.mxu0 0.0
        %1347 = vmatprep.subr.mxu0 0.0
        %1348 = vmatpush1.msra.mxu0 0.0
        %1349 = vmatprep.subr.mxu0 0.0
        %1350 = vmatpush1.msra.mxu0 0.0
        %1351 = vmatprep.subr.mxu0 0.0
        %1352 = vmatpush1.msra.mxu0 0.0
        %1353 = vmatprep.subr.mxu0 0.0
        %1354 = vmatpush1.msra.mxu0 0.0
        %1355 = vmatprep.subr.mxu0 0.0
        %1356 = vmatpush1.msra.mxu0 0.0
        %1357 = vmatprep.subr.mxu0 0.0
        %1358 = vmatpush1.msra.mxu0 0.0
        %1359 = vmatprep.subr.mxu0 0.0
        %1360 = vmatpush1.msra.mxu0 0.0
        %1361 = vmatprep.subr.mxu0 0.0
        %1362 = vmatpush1.msra.mxu0 0.0
        %1363 = vmatprep.subr.mxu0 0.0
        %1364 = vmatpush1.msra.mxu0 0.0
        %1365 = vmatprep.mubr.f32.mxu0 0.0
        %1366 = vmatmul.mubr.f32.gmra.mrb[0].mxu0 %v1299
        %v1367 = vpop.f32.mrb[0].mxu0
        %v1368 = vadd.f32 0.0, %v1367
        %v1369 = vpop.f32.mrb[0].mxu0
        %1370 = vdwg.mxu0
        %v1371 = vadd.f32 %v1284, %v1368
        %v1372 = vld [vmem:[%s1287 + $0x1] sm:$0x7f]
        %s1373 = scalar_lea.vmem %s4, 256
        %v1374 = vld [vmem:[%s1373] sm:$0xff]
        %v1375 = vld [vmem:[%s1373 + $0x8] sm:$0xff]
        %v1376 = vld [vmem:[%s1373 + $0x10] sm:$0xff]
        %v1377 = vld [vmem:[%s1373 + $0x18] sm:$0xff]
        %v1378 = vld [vmem:[%s1373 + $0x20] sm:$0xff]
        %v1379 = vld [vmem:[%s1373 + $0x28] sm:$0xff]
        %v1380 = vld [vmem:[%s1373 + $0x30] sm:$0xff]
        %v1381 = vld [vmem:[%s1373 + $0x38] sm:$0xff]
        %v1383 = vsel %vm306, %v1372, 0
        %1385 = vmatprep.subr.mxu0 0.0
        %1386 = vmatpush1.msra.mxu0 %v1374
        %1387 = vmatprep.subr.mxu0 0.0
        %1388 = vmatpush1.msra.mxu0 %v1375
        %1389 = vmatprep.subr.mxu0 0.0
        %1390 = vmatpush1.msra.mxu0 %v1376
        %1391 = vmatprep.subr.mxu0 0.0
        %1392 = vmatpush1.msra.mxu0 %v1377
        %1393 = vmatprep.subr.mxu0 0.0
        %1394 = vmatpush1.msra.mxu0 %v1378
        %1395 = vmatprep.subr.mxu0 0.0
        %1396 = vmatpush1.msra.mxu0 %v1379
        %1397 = vmatprep.subr.mxu0 0.0
        %1398 = vmatpush1.msra.mxu0 %v1380
        %1399 = vmatprep.subr.mxu0 0.0
        %1400 = vmatpush1.msra.mxu0 %v1381
        %1401 = vmatprep.subr.mxu0 0.0
        %1402 = vmatpush1.msra.mxu0 0.0
        %1403 = vmatprep.subr.mxu0 0.0
        %1404 = vmatpush1.msra.mxu0 0.0
        %1405 = vmatprep.subr.mxu0 0.0
        %1406 = vmatpush1.msra.mxu0 0.0
        %1407 = vmatprep.subr.mxu0 0.0
        %1408 = vmatpush1.msra.mxu0 0.0
        %1409 = vmatprep.subr.mxu0 0.0
        %1410 = vmatpush1.msra.mxu0 0.0
        %1411 = vmatprep.subr.mxu0 0.0
        %1412 = vmatpush1.msra.mxu0 0.0
        %1413 = vmatprep.subr.mxu0 0.0
        %1414 = vmatpush1.msra.mxu0 0.0
        %1415 = vmatprep.subr.mxu0 0.0
        %1416 = vmatpush1.msra.mxu0 0.0
        %1417 = vmatprep.subr.mxu0 0.0
        %1418 = vmatpush1.msra.mxu0 0.0
        %1419 = vmatprep.subr.mxu0 0.0
        %1420 = vmatpush1.msra.mxu0 0.0
        %1421 = vmatprep.subr.mxu0 0.0
        %1422 = vmatpush1.msra.mxu0 0.0
        %1423 = vmatprep.subr.mxu0 0.0
        %1424 = vmatpush1.msra.mxu0 0.0
        %1425 = vmatprep.subr.mxu0 0.0
        %1426 = vmatpush1.msra.mxu0 0.0
        %1427 = vmatprep.subr.mxu0 0.0
        %1428 = vmatpush1.msra.mxu0 0.0
        %1429 = vmatprep.subr.mxu0 0.0
        %1430 = vmatpush1.msra.mxu0 0.0
        %1431 = vmatprep.subr.mxu0 0.0
        %1432 = vmatpush1.msra.mxu0 0.0
        %1433 = vmatprep.subr.mxu0 0.0
        %1434 = vmatpush1.msra.mxu0 0.0
        %1435 = vmatprep.subr.mxu0 0.0
        %1436 = vmatpush1.msra.mxu0 0.0
        %1437 = vmatprep.subr.mxu0 0.0
        %1438 = vmatpush1.msra.mxu0 0.0
        %1439 = vmatprep.subr.mxu0 0.0
        %1440 = vmatpush1.msra.mxu0 0.0
        %1441 = vmatprep.subr.mxu0 0.0
        %1442 = vmatpush1.msra.mxu0 0.0
        %1443 = vmatprep.subr.mxu0 0.0
        %1444 = vmatpush1.msra.mxu0 0.0
        %1445 = vmatprep.subr.mxu0 0.0
        %1446 = vmatpush1.msra.mxu0 0.0
        %1447 = vmatprep.subr.mxu0 0.0
        %1448 = vmatpush1.msra.mxu0 0.0
        %1449 = vmatprep.mubr.f32.mxu0 0.0
        %1450 = vmatmul.mubr.f32.gmra.mrb[0].mxu0 %v1383
        %v1451 = vpop.f32.mrb[0].mxu0
        %v1452 = vadd.f32 0.0, %v1451
        %v1453 = vpop.f32.mrb[0].mxu0
        %1454 = vdwg.mxu0
        %v1455 = vadd.f32 %v1371, %v1452
        %v1456 = vld [vmem:[%s1287 + $0x2] sm:$0x7f]
        %s1457 = scalar_lea.vmem %s4, 320
        %v1458 = vld [vmem:[%s1457] sm:$0xff]
        %v1459 = vld [vmem:[%s1457 + $0x8] sm:$0xff]
        %v1460 = vld [vmem:[%s1457 + $0x10] sm:$0xff]
        %v1461 = vld [vmem:[%s1457 + $0x18] sm:$0xff]
        %v1462 = vld [vmem:[%s1457 + $0x20] sm:$0xff]
        %v1463 = vld [vmem:[%s1457 + $0x28] sm:$0xff]
        %v1464 = vld [vmem:[%s1457 + $0x30] sm:$0xff]
        %v1465 = vld [vmem:[%s1457 + $0x38] sm:$0xff]
        %v1467 = vsel %vm306, %v1456, 0
        %1469 = vmatprep.subr.mxu0 0.0
        %1470 = vmatpush1.msra.mxu0 %v1458
        %1471 = vmatprep.subr.mxu0 0.0
        %1472 = vmatpush1.msra.mxu0 %v1459
        %1473 = vmatprep.subr.mxu0 0.0
        %1474 = vmatpush1.msra.mxu0 %v1460
        %1475 = vmatprep.subr.mxu0 0.0
        %1476 = vmatpush1.msra.mxu0 %v1461
        %1477 = vmatprep.subr.mxu0 0.0
        %1478 = vmatpush1.msra.mxu0 %v1462
        %1479 = vmatprep.subr.mxu0 0.0
        %1480 = vmatpush1.msra.mxu0 %v1463
        %1481 = vmatprep.subr.mxu0 0.0
        %1482 = vmatpush1.msra.mxu0 %v1464
        %1483 = vmatprep.subr.mxu0 0.0
        %1484 = vmatpush1.msra.mxu0 %v1465
        %1485 = vmatprep.subr.mxu0 0.0
        %1486 = vmatpush1.msra.mxu0 0.0
        %1487 = vmatprep.subr.mxu0 0.0
        %1488 = vmatpush1.msra.mxu0 0.0
        %1489 = vmatprep.subr.mxu0 0.0
        %1490 = vmatpush1.msra.mxu0 0.0
        %1491 = vmatprep.subr.mxu0 0.0
        %1492 = vmatpush1.msra.mxu0 0.0
        %1493 = vmatprep.subr.mxu0 0.0
        %1494 = vmatpush1.msra.mxu0 0.0
        %1495 = vmatprep.subr.mxu0 0.0
        %1496 = vmatpush1.msra.mxu0 0.0
        %1497 = vmatprep.subr.mxu0 0.0
        %1498 = vmatpush1.msra.mxu0 0.0
        %1499 = vmatprep.subr.mxu0 0.0
        %1500 = vmatpush1.msra.mxu0 0.0
        %1501 = vmatprep.subr.mxu0 0.0
        %1502 = vmatpush1.msra.mxu0 0.0
        %1503 = vmatprep.subr.mxu0 0.0
        %1504 = vmatpush1.msra.mxu0 0.0
        %1505 = vmatprep.subr.mxu0 0.0
        %1506 = vmatpush1.msra.mxu0 0.0
        %1507 = vmatprep.subr.mxu0 0.0
        %1508 = vmatpush1.msra.mxu0 0.0
        %1509 = vmatprep.subr.mxu0 0.0
        %1510 = vmatpush1.msra.mxu0 0.0
        %1511 = vmatprep.subr.mxu0 0.0
        %1512 = vmatpush1.msra.mxu0 0.0
        %1513 = vmatprep.subr.mxu0 0.0
        %1514 = vmatpush1.msra.mxu0 0.0
        %1515 = vmatprep.subr.mxu0 0.0
        %1516 = vmatpush1.msra.mxu0 0.0
        %1517 = vmatprep.subr.mxu0 0.0
        %1518 = vmatpush1.msra.mxu0 0.0
        %1519 = vmatprep.subr.mxu0 0.0
        %1520 = vmatpush1.msra.mxu0 0.0
        %1521 = vmatprep.subr.mxu0 0.0
        %1522 = vmatpush1.msra.mxu0 0.0
        %1523 = vmatprep.subr.mxu0 0.0
        %1524 = vmatpush1.msra.mxu0 0.0
        %1525 = vmatprep.subr.mxu0 0.0
        %1526 = vmatpush1.msra.mxu0 0.0
        %1527 = vmatprep.subr.mxu0 0.0
        %1528 = vmatpush1.msra.mxu0 0.0
        %1529 = vmatprep.subr.mxu0 0.0
        %1530 = vmatpush1.msra.mxu0 0.0
        %1531 = vmatprep.subr.mxu0 0.0
        %1532 = vmatpush1.msra.mxu0 0.0
        %1533 = vmatprep.mubr.f32.mxu0 0.0
        %1534 = vmatmul.mubr.f32.gmra.mrb[0].mxu0 %v1467
        %v1535 = vpop.f32.mrb[0].mxu0
        %v1536 = vadd.f32 0.0, %v1535
        %v1537 = vpop.f32.mrb[0].mxu0
        %1538 = vdwg.mxu0
        %v1539 = vadd.f32 %v1455, %v1536
        %s1540 = sadd.s32 %s1029, 2
        %s1541 = smul.u32 %s1540, 16
        %s1542 = scalar_lea.vmem [#allocation2], %s1541
        %v1543 = vld [vmem:[%s1542] sm:$0x7f]
        %s1544 = scalar_lea.vmem %s4, 384
        %v1545 = vld [vmem:[%s1544] sm:$0xff]
        %v1546 = vld [vmem:[%s1544 + $0x8] sm:$0xff]
        %v1547 = vld [vmem:[%s1544 + $0x10] sm:$0xff]
        %v1548 = vld [vmem:[%s1544 + $0x18] sm:$0xff]
        %v1549 = vld [vmem:[%s1544 + $0x20] sm:$0xff]
        %v1550 = vld [vmem:[%s1544 + $0x28] sm:$0xff]
        %v1551 = vld [vmem:[%s1544 + $0x30] sm:$0xff]
        %v1552 = vld [vmem:[%s1544 + $0x38] sm:$0xff]
        %v1554 = vsel %vm306, %v1543, 0
        %1556 = vmatprep.subr.mxu0 0.0
        %1557 = vmatpush1.msra.mxu0 %v1545
        %1558 = vmatprep.subr.mxu0 0.0
        %1559 = vmatpush1.msra.mxu0 %v1546
        %1560 = vmatprep.subr.mxu0 0.0
        %1561 = vmatpush1.msra.mxu0 %v1547
        %1562 = vmatprep.subr.mxu0 0.0
        %1563 = vmatpush1.msra.mxu0 %v1548
        %1564 = vmatprep.subr.mxu0 0.0
        %1565 = vmatpush1.msra.mxu0 %v1549
        %1566 = vmatprep.subr.mxu0 0.0
        %1567 = vmatpush1.msra.mxu0 %v1550
        %1568 = vmatprep.subr.mxu0 0.0
        %1569 = vmatpush1.msra.mxu0 %v1551
        %1570 = vmatprep.subr.mxu0 0.0
        %1571 = vmatpush1.msra.mxu0 %v1552
        %1572 = vmatprep.subr.mxu0 0.0
        %1573 = vmatpush1.msra.mxu0 0.0
        %1574 = vmatprep.subr.mxu0 0.0
        %1575 = vmatpush1.msra.mxu0 0.0
        %1576 = vmatprep.subr.mxu0 0.0
        %1577 = vmatpush1.msra.mxu0 0.0
        %1578 = vmatprep.subr.mxu0 0.0
        %1579 = vmatpush1.msra.mxu0 0.0
        %1580 = vmatprep.subr.mxu0 0.0
        %1581 = vmatpush1.msra.mxu0 0.0
        %1582 = vmatprep.subr.mxu0 0.0
        %1583 = vmatpush1.msra.mxu0 0.0
        %1584 = vmatprep.subr.mxu0 0.0
        %1585 = vmatpush1.msra.mxu0 0.0
        %1586 = vmatprep.subr.mxu0 0.0
        %1587 = vmatpush1.msra.mxu0 0.0
        %1588 = vmatprep.subr.mxu0 0.0
        %1589 = vmatpush1.msra.mxu0 0.0
        %1590 = vmatprep.subr.mxu0 0.0
        %1591 = vmatpush1.msra.mxu0 0.0
        %1592 = vmatprep.subr.mxu0 0.0
        %1593 = vmatpush1.msra.mxu0 0.0
        %1594 = vmatprep.subr.mxu0 0.0
        %1595 = vmatpush1.msra.mxu0 0.0
        %1596 = vmatprep.subr.mxu0 0.0
        %1597 = vmatpush1.msra.mxu0 0.0
        %1598 = vmatprep.subr.mxu0 0.0
        %1599 = vmatpush1.msra.mxu0 0.0
        %1600 = vmatprep.subr.mxu0 0.0
        %1601 = vmatpush1.msra.mxu0 0.0
        %1602 = vmatprep.subr.mxu0 0.0
        %1603 = vmatpush1.msra.mxu0 0.0
        %1604 = vmatprep.subr.mxu0 0.0
        %1605 = vmatpush1.msra.mxu0 0.0
        %1606 = vmatprep.subr.mxu0 0.0
        %1607 = vmatpush1.msra.mxu0 0.0
        %1608 = vmatprep.subr.mxu0 0.0
        %1609 = vmatpush1.msra.mxu0 0.0
        %1610 = vmatprep.subr.mxu0 0.0
        %1611 = vmatpush1.msra.mxu0 0.0
        %1612 = vmatprep.subr.mxu0 0.0
        %1613 = vmatpush1.msra.mxu0 0.0
        %1614 = vmatprep.subr.mxu0 0.0
        %1615 = vmatpush1.msra.mxu0 0.0
        %1616 = vmatprep.subr.mxu0 0.0
        %1617 = vmatpush1.msra.mxu0 0.0
        %1618 = vmatprep.subr.mxu0 0.0
        %1619 = vmatpush1.msra.mxu0 0.0
        %1620 = vmatprep.mubr.f32.mxu0 0.0
        %1621 = vmatmul.mubr.f32.gmra.mrb[0].mxu0 %v1554
        %v1622 = vpop.f32.mrb[0].mxu0
        %v1623 = vadd.f32 0.0, %v1622
        %v1624 = vpop.f32.mrb[0].mxu0
        %1625 = vdwg.mxu0
        %v1626 = vadd.f32 %v1539, %v1623
        %v1627 = vld [vmem:[%s1542 + $0x1] sm:$0x7f]
        %s1628 = scalar_lea.vmem %s4, 448
        %v1629 = vld [vmem:[%s1628] sm:$0xff]
        %v1630 = vld [vmem:[%s1628 + $0x8] sm:$0xff]
        %v1631 = vld [vmem:[%s1628 + $0x10] sm:$0xff]
        %v1632 = vld [vmem:[%s1628 + $0x18] sm:$0xff]
        %v1633 = vld [vmem:[%s1628 + $0x20] sm:$0xff]
        %v1634 = vld [vmem:[%s1628 + $0x28] sm:$0xff]
        %v1635 = vld [vmem:[%s1628 + $0x30] sm:$0xff]
        %v1636 = vld [vmem:[%s1628 + $0x38] sm:$0xff]
        %v1638 = vsel %vm306, %v1627, 0
        %1640 = vmatprep.subr.mxu0 0.0
        %1641 = vmatpush1.msra.mxu0 %v1629
        %1642 = vmatprep.subr.mxu0 0.0
        %1643 = vmatpush1.msra.mxu0 %v1630
        %1644 = vmatprep.subr.mxu0 0.0
        %1645 = vmatpush1.msra.mxu0 %v1631
        %1646 = vmatprep.subr.mxu0 0.0
        %1647 = vmatpush1.msra.mxu0 %v1632
        %1648 = vmatprep.subr.mxu0 0.0
        %1649 = vmatpush1.msra.mxu0 %v1633
        %1650 = vmatprep.subr.mxu0 0.0
        %1651 = vmatpush1.msra.mxu0 %v1634
        %1652 = vmatprep.subr.mxu0 0.0
        %1653 = vmatpush1.msra.mxu0 %v1635
        %1654 = vmatprep.subr.mxu0 0.0
        %1655 = vmatpush1.msra.mxu0 %v1636
        %1656 = vmatprep.subr.mxu0 0.0
        %1657 = vmatpush1.msra.mxu0 0.0
        %1658 = vmatprep.subr.mxu0 0.0
        %1659 = vmatpush1.msra.mxu0 0.0
        %1660 = vmatprep.subr.mxu0 0.0
        %1661 = vmatpush1.msra.mxu0 0.0
        %1662 = vmatprep.subr.mxu0 0.0
        %1663 = vmatpush1.msra.mxu0 0.0
        %1664 = vmatprep.subr.mxu0 0.0
        %1665 = vmatpush1.msra.mxu0 0.0
        %1666 = vmatprep.subr.mxu0 0.0
        %1667 = vmatpush1.msra.mxu0 0.0
        %1668 = vmatprep.subr.mxu0 0.0
        %1669 = vmatpush1.msra.mxu0 0.0
        %1670 = vmatprep.subr.mxu0 0.0
        %1671 = vmatpush1.msra.mxu0 0.0
        %1672 = vmatprep.subr.mxu0 0.0
        %1673 = vmatpush1.msra.mxu0 0.0
        %1674 = vmatprep.subr.mxu0 0.0
        %1675 = vmatpush1.msra.mxu0 0.0
        %1676 = vmatprep.subr.mxu0 0.0
        %1677 = vmatpush1.msra.mxu0 0.0
        %1678 = vmatprep.subr.mxu0 0.0
        %1679 = vmatpush1.msra.mxu0 0.0
        %1680 = vmatprep.subr.mxu0 0.0
        %1681 = vmatpush1.msra.mxu0 0.0
        %1682 = vmatprep.subr.mxu0 0.0
        %1683 = vmatpush1.msra.mxu0 0.0
        %1684 = vmatprep.subr.mxu0 0.0
        %1685 = vmatpush1.msra.mxu0 0.0
        %1686 = vmatprep.subr.mxu0 0.0
        %1687 = vmatpush1.msra.mxu0 0.0
        %1688 = vmatprep.subr.mxu0 0.0
        %1689 = vmatpush1.msra.mxu0 0.0
        %1690 = vmatprep.subr.mxu0 0.0
        %1691 = vmatpush1.msra.mxu0 0.0
        %1692 = vmatprep.subr.mxu0 0.0
        %1693 = vmatpush1.msra.mxu0 0.0
        %1694 = vmatprep.subr.mxu0 0.0
        %1695 = vmatpush1.msra.mxu0 0.0
        %1696 = vmatprep.subr.mxu0 0.0
        %1697 = vmatpush1.msra.mxu0 0.0
        %1698 = vmatprep.subr.mxu0 0.0
        %1699 = vmatpush1.msra.mxu0 0.0
        %1700 = vmatprep.subr.mxu0 0.0
        %1701 = vmatpush1.msra.mxu0 0.0
        %1702 = vmatprep.subr.mxu0 0.0
        %1703 = vmatpush1.msra.mxu0 0.0
        %1704 = vmatprep.mubr.f32.mxu0 0.0
        %1705 = vmatmul.mubr.f32.gmra.mrb[0].mxu0 %v1638
        %v1706 = vpop.f32.mrb[0].mxu0
        %v1707 = vadd.f32 0.0, %v1706
        %v1708 = vpop.f32.mrb[0].mxu0
        %1709 = vdwg.mxu0
        %v1710 = vadd.f32 %v1626, %v1707
        %v1711 = vld [vmem:[%s1542 + $0x2] sm:$0x7f]
        %s1712 = scalar_lea.vmem %s4, 512
        %v1713 = vld [vmem:[%s1712] sm:$0xff]
        %v1714 = vld [vmem:[%s1712 + $0x8] sm:$0xff]
        %v1715 = vld [vmem:[%s1712 + $0x10] sm:$0xff]
        %v1716 = vld [vmem:[%s1712 + $0x18] sm:$0xff]
        %v1717 = vld [vmem:[%s1712 + $0x20] sm:$0xff]
        %v1718 = vld [vmem:[%s1712 + $0x28] sm:$0xff]
        %v1719 = vld [vmem:[%s1712 + $0x30] sm:$0xff]
        %v1720 = vld [vmem:[%s1712 + $0x38] sm:$0xff]
        %v1722 = vsel %vm306, %v1711, 0
        %1724 = vmatprep.subr.mxu0 0.0
        %1725 = vmatpush1.msra.mxu0 %v1713
        %1726 = vmatprep.subr.mxu0 0.0
        %1727 = vmatpush1.msra.mxu0 %v1714
        %1728 = vmatprep.subr.mxu0 0.0
        %1729 = vmatpush1.msra.mxu0 %v1715
        %1730 = vmatprep.subr.mxu0 0.0
        %1731 = vmatpush1.msra.mxu0 %v1716
        %1732 = vmatprep.subr.mxu0 0.0
        %1733 = vmatpush1.msra.mxu0 %v1717
        %1734 = vmatprep.subr.mxu0 0.0
        %1735 = vmatpush1.msra.mxu0 %v1718
        %1736 = vmatprep.subr.mxu0 0.0
        %1737 = vmatpush1.msra.mxu0 %v1719
        %1738 = vmatprep.subr.mxu0 0.0
        %1739 = vmatpush1.msra.mxu0 %v1720
        %1740 = vmatprep.subr.mxu0 0.0
        %1741 = vmatpush1.msra.mxu0 0.0
        %1742 = vmatprep.subr.mxu0 0.0
        %1743 = vmatpush1.msra.mxu0 0.0
        %1744 = vmatprep.subr.mxu0 0.0
        %1745 = vmatpush1.msra.mxu0 0.0
        %1746 = vmatprep.subr.mxu0 0.0
        %1747 = vmatpush1.msra.mxu0 0.0
        %1748 = vmatprep.subr.mxu0 0.0
        %1749 = vmatpush1.msra.mxu0 0.0
        %1750 = vmatprep.subr.mxu0 0.0
        %1751 = vmatpush1.msra.mxu0 0.0
        %1752 = vmatprep.subr.mxu0 0.0
        %1753 = vmatpush1.msra.mxu0 0.0
        %1754 = vmatprep.subr.mxu0 0.0
        %1755 = vmatpush1.msra.mxu0 0.0
        %1756 = vmatprep.subr.mxu0 0.0
        %1757 = vmatpush1.msra.mxu0 0.0
        %1758 = vmatprep.subr.mxu0 0.0
        %1759 = vmatpush1.msra.mxu0 0.0
        %1760 = vmatprep.subr.mxu0 0.0
        %1761 = vmatpush1.msra.mxu0 0.0
        %1762 = vmatprep.subr.mxu0 0.0
        %1763 = vmatpush1.msra.mxu0 0.0
        %1764 = vmatprep.subr.mxu0 0.0
        %1765 = vmatpush1.msra.mxu0 0.0
        %1766 = vmatprep.subr.mxu0 0.0
        %1767 = vmatpush1.msra.mxu0 0.0
        %1768 = vmatprep.subr.mxu0 0.0
        %1769 = vmatpush1.msra.mxu0 0.0
        %1770 = vmatprep.subr.mxu0 0.0
        %1771 = vmatpush1.msra.mxu0 0.0
        %1772 = vmatprep.subr.mxu0 0.0
        %1773 = vmatpush1.msra.mxu0 0.0
        %1774 = vmatprep.subr.mxu0 0.0
        %1775 = vmatpush1.msra.mxu0 0.0
        %1776 = vmatprep.subr.mxu0 0.0
        %1777 = vmatpush1.msra.mxu0 0.0
        %1778 = vmatprep.subr.mxu0 0.0
        %1779 = vmatpush1.msra.mxu0 0.0
        %1780 = vmatprep.subr.mxu0 0.0
        %1781 = vmatpush1.msra.mxu0 0.0
        %1782 = vmatprep.subr.mxu0 0.0
        %1783 = vmatpush1.msra.mxu0 0.0
        %1784 = vmatprep.subr.mxu0 0.0
        %1785 = vmatpush1.msra.mxu0 0.0
        %1786 = vmatprep.subr.mxu0 0.0
        %1787 = vmatpush1.msra.mxu0 0.0
        %1788 = vmatprep.mubr.f32.mxu0 0.0
        %1789 = vmatmul.mubr.f32.gmra.mrb[0].mxu0 %v1722
        %v1790 = vpop.f32.mrb[0].mxu0
        %v1791 = vadd.f32 0.0, %v1790
        %v1792 = vpop.f32.mrb[0].mxu0
        %1793 = vdwg.mxu0
        %v1794 = vadd.f32 %v1710, %v1791
        %v1795 = vld [vmem:[%s5] sm:$0x1]
        %v1797 = vlaneseq
        %v1798 = vshrl.u32 %v1797, 7
        %v1799 = vsub.s32 0, %v1798
        %v1800 = vrot.slane %v1795, %v1799
        %v1802 = vmul.f32 %v1794, %v1800
        %v1803 = vld [vmem:[%s6] sm:$0x1]
        %v1805 = vlaneseq
        %v1806 = vshrl.u32 %v1805, 7
        %v1807 = vsub.s32 0, %v1806
        %v1808 = vrot.slane %v1803, %v1807
        %v1810 = vadd.f32 %v1802, %v1808
        %vm1811 = vcmp.ge.f32.partialorder %v1810, 0.0
        %v1812 = vmul.f32 %v1810, 0.2
        %v1813 = vsel %vm1811, %v1810, %v1812
        %s1814 = sadd.s32 %s1029, 4
        %s1815 = smul.u32 %s1814, 16
        %s1816 = scalar_lea.vmem [#allocation3], %s1815
        %1817 = vst.msk [vmem:[%s1816 + $0x4] sm:$0x7f] %vm324, %v1813
      $region64: #{tfblock_v3_forward.1} parent=51 // loop_footer
        %s1033 = sadd.s32 1, %s1029
      $region65: #{tfblock_v3_forward.1} parent=51 // loop_footer_branch
        %1028 = sbr.rel target = $region61
      $region66: #{tfblock_v3_forward.1} parent=51 // loop_exit
        _
      loop: start=0, step=1, limit=9
      $region67: #{tfblock_v3_forward.1} parent=51 // loop_pre_header
        _
      $region68: #{tfblock_v3_forward.1} parent=51 // loop_header
        %s1819 = sphi 0, %s1823
        %p1820 = scmp.ge.s32.totalorder %s1819, 9
      $region69: #{tfblock_v3_forward.1} parent=51 // loop_header_branch
        %1822 = sbr.rel (%p1820) target = $region73
      $region70: #{tfblock_v3_forward.1} parent=51 // loop_body
        %s1824 = smul.u32 %s1819, 16
        %s1825 = scalar_lea.vmem [#allocation3], %s1824
        %v1826 = vld [vmem:[%s1825] sm:$0xff]
        %v1827 = vld [vmem:[%s1825 + $0x8] sm:$0x7]
        %v1828 = vld [vmem:[%s7] sm:$0xff]
        %v1829 = vld [vmem:[%s7 + $0x8] sm:$0xff]
        %v1830 = vld [vmem:[%s7 + $0x10] sm:$0xff]
        %v1831 = vld [vmem:[%s7 + $0x18] sm:$0xff]
        %v1832 = vld [vmem:[%s7 + $0x20] sm:$0xff]
        %v1833 = vld [vmem:[%s7 + $0x28] sm:$0xff]
        %v1834 = vld [vmem:[%s1825 + $0x1] sm:$0xff]
        %v1835 = vld [vmem:[%s1825 + $0x9] sm:$0x7]
        %s1836 = scalar_lea.vmem %s7, 48
        %v1837 = vld [vmem:[%s1836] sm:$0xff]
        %v1838 = vld [vmem:[%s1836 + $0x8] sm:$0xff]
        %v1839 = vld [vmem:[%s1836 + $0x10] sm:$0xff]
        %v1840 = vld [vmem:[%s1836 + $0x18] sm:$0xff]
        %v1841 = vld [vmem:[%s1836 + $0x20] sm:$0xff]
        %v1842 = vld [vmem:[%s1836 + $0x28] sm:$0xff]
        %v1844 = vsel %vm322, %v1834, 0
        %v1847 = vsel %vm322, %v1835, 0
        %1849 = vmatprep.subr.mxu0 0.0
        %1850 = vmatpush1.msra.mxu0 %v1837
        %1851 = vmatprep.subr.mxu0 0.0
        %1852 = vmatpush1.msra.mxu0 %v1838
        %1853 = vmatprep.subr.mxu0 0.0
        %1854 = vmatpush1.msra.mxu0 %v1839
        %1855 = vmatprep.subr.mxu0 0.0
        %1856 = vmatpush1.msra.mxu0 %v1840
        %1857 = vmatprep.subr.mxu0 0.0
        %1858 = vmatpush1.msra.mxu0 %v1841
        %1859 = vmatprep.subr.mxu0 0.0
        %1860 = vmatpush1.msra.mxu0 %v1842
        %1861 = vmatprep.subr.mxu0 0.0
        %1862 = vmatpush1.msra.mxu0 0.0
        %1863 = vmatprep.subr.mxu0 0.0
        %1864 = vmatpush1.msra.mxu0 0.0
        %1865 = vmatprep.subr.mxu0 0.0
        %1866 = vmatpush1.msra.mxu0 0.0
        %1867 = vmatprep.subr.mxu0 0.0
        %1868 = vmatpush1.msra.mxu0 0.0
        %1869 = vmatprep.subr.mxu0 0.0
        %1870 = vmatpush1.msra.mxu0 0.0
        %1871 = vmatprep.subr.mxu0 0.0
        %1872 = vmatpush1.msra.mxu0 0.0
        %1873 = vmatprep.subr.mxu0 0.0
        %1874 = vmatpush1.msra.mxu0 0.0
        %1875 = vmatprep.subr.mxu0 0.0
        %1876 = vmatpush1.msra.mxu0 0.0
        %1877 = vmatprep.subr.mxu0 0.0
        %1878 = vmatpush1.msra.mxu0 0.0
        %1879 = vmatprep.subr.mxu0 0.0
        %1880 = vmatpush1.msra.mxu0 0.0
        %1881 = vmatprep.subr.mxu0 0.0
        %1882 = vmatpush1.msra.mxu0 0.0
        %1883 = vmatprep.subr.mxu0 0.0
        %1884 = vmatpush1.msra.mxu0 0.0
        %1885 = vmatprep.subr.mxu0 0.0
        %1886 = vmatpush1.msra.mxu0 0.0
        %1887 = vmatprep.subr.mxu0 0.0
        %1888 = vmatpush1.msra.mxu0 0.0
        %1889 = vmatprep.subr.mxu0 0.0
        %1890 = vmatpush1.msra.mxu0 0.0
        %1891 = vmatprep.subr.mxu0 0.0
        %1892 = vmatpush1.msra.mxu0 0.0
        %1893 = vmatprep.subr.mxu0 0.0
        %1894 = vmatpush1.msra.mxu0 0.0
        %1895 = vmatprep.subr.mxu0 0.0
        %1896 = vmatpush1.msra.mxu0 0.0
        %1897 = vmatprep.subr.mxu0 0.0
        %1898 = vmatpush1.msra.mxu0 0.0
        %1899 = vmatprep.subr.mxu0 0.0
        %1900 = vmatpush1.msra.mxu0 0.0
        %1901 = vmatprep.subr.mxu0 0.0
        %1902 = vmatpush1.msra.mxu0 0.0
        %1903 = vmatprep.subr.mxu0 0.0
        %1904 = vmatpush1.msra.mxu0 0.0
        %1905 = vmatprep.subr.mxu0 0.0
        %1906 = vmatpush1.msra.mxu0 0.0
        %1907 = vmatprep.subr.mxu0 0.0
        %1908 = vmatpush1.msra.mxu0 0.0
        %1909 = vmatprep.subr.mxu0 0.0
        %1910 = vmatpush1.msra.mxu0 0.0
        %1911 = vmatprep.subr.mxu0 0.0
        %1912 = vmatpush1.msra.mxu0 0.0
        %1913 = vmatprep.mubr.f32.mxu0 0.0
        %1914 = vmatmul.mubr.f32.gmra.mrb[0].mxu0 %v1844
        %v1915 = vpop.f32.mrb[0].mxu0
        %v1916 = vadd.f32 0.0, %v1915
        %v1917 = vpop.f32.mrb[0].mxu0
        %1918 = vmatprep.mubr.f32.mxu0 0.0
        %1919 = vmatmul.mubr.f32.gmra.mrb[0].mxu0 %v1847
        %v1920 = vpop.f32.mrb[0].mxu0
        %v1921 = vadd.f32 0.0, %v1920
        %v1922 = vpop.f32.mrb[0].mxu0
        %1923 = vdwg.mxu0
        %v1925 = vsel %vm322, %v1826, 0
        %v1928 = vsel %vm322, %v1827, 0
        %1930 = vmatprep.subr.mxu0 0.0
        %1931 = vmatpush1.msra.mxu0 %v1828
        %1932 = vmatprep.subr.mxu0 0.0
        %1933 = vmatpush1.msra.mxu0 %v1829
        %1934 = vmatprep.subr.mxu0 0.0
        %1935 = vmatpush1.msra.mxu0 %v1830
        %1936 = vmatprep.subr.mxu0 0.0
        %1937 = vmatpush1.msra.mxu0 %v1831
        %1938 = vmatprep.subr.mxu0 0.0
        %1939 = vmatpush1.msra.mxu0 %v1832
        %1940 = vmatprep.subr.mxu0 0.0
        %1941 = vmatpush1.msra.mxu0 %v1833
        %1942 = vmatprep.subr.mxu0 0.0
        %1943 = vmatpush1.msra.mxu0 0.0
        %1944 = vmatprep.subr.mxu0 0.0
        %1945 = vmatpush1.msra.mxu0 0.0
        %1946 = vmatprep.subr.mxu0 0.0
        %1947 = vmatpush1.msra.mxu0 0.0
        %1948 = vmatprep.subr.mxu0 0.0
        %1949 = vmatpush1.msra.mxu0 0.0
        %1950 = vmatprep.subr.mxu0 0.0
        %1951 = vmatpush1.msra.mxu0 0.0
        %1952 = vmatprep.subr.mxu0 0.0
        %1953 = vmatpush1.msra.mxu0 0.0
        %1954 = vmatprep.subr.mxu0 0.0
        %1955 = vmatpush1.msra.mxu0 0.0
        %1956 = vmatprep.subr.mxu0 0.0
        %1957 = vmatpush1.msra.mxu0 0.0
        %1958 = vmatprep.subr.mxu0 0.0
        %1959 = vmatpush1.msra.mxu0 0.0
        %1960 = vmatprep.subr.mxu0 0.0
        %1961 = vmatpush1.msra.mxu0 0.0
        %1962 = vmatprep.subr.mxu0 0.0
        %1963 = vmatpush1.msra.mxu0 0.0
        %1964 = vmatprep.subr.mxu0 0.0
        %1965 = vmatpush1.msra.mxu0 0.0
        %1966 = vmatprep.subr.mxu0 0.0
        %1967 = vmatpush1.msra.mxu0 0.0
        %1968 = vmatprep.subr.mxu0 0.0
        %1969 = vmatpush1.msra.mxu0 0.0
        %1970 = vmatprep.subr.mxu0 0.0
        %1971 = vmatpush1.msra.mxu0 0.0
        %1972 = vmatprep.subr.mxu0 0.0
        %1973 = vmatpush1.msra.mxu0 0.0
        %1974 = vmatprep.subr.mxu0 0.0
        %1975 = vmatpush1.msra.mxu0 0.0
        %1976 = vmatprep.subr.mxu0 0.0
        %1977 = vmatpush1.msra.mxu0 0.0
        %1978 = vmatprep.subr.mxu0 0.0
        %1979 = vmatpush1.msra.mxu0 0.0
        %1980 = vmatprep.subr.mxu0 0.0
        %1981 = vmatpush1.msra.mxu0 0.0
        %1982 = vmatprep.subr.mxu0 0.0
        %1983 = vmatpush1.msra.mxu0 0.0
        %1984 = vmatprep.subr.mxu0 0.0
        %1985 = vmatpush1.msra.mxu0 0.0
        %1986 = vmatprep.subr.mxu0 0.0
        %1987 = vmatpush1.msra.mxu0 0.0
        %1988 = vmatprep.subr.mxu0 0.0
        %1989 = vmatpush1.msra.mxu0 0.0
        %1990 = vmatprep.subr.mxu0 0.0
        %1991 = vmatpush1.msra.mxu0 0.0
        %1992 = vmatprep.subr.mxu0 0.0
        %1993 = vmatpush1.msra.mxu0 0.0
        %1994 = vmatprep.mubr.f32.mxu0 0.0
        %1995 = vmatmul.mubr.f32.gmra.mrb[0].mxu0 %v1925
        %v1996 = vpop.f32.mrb[0].mxu0
        %v1997 = vadd.f32 %v1916, %v1996
        %v1998 = vpop.f32.mrb[0].mxu0
        %1999 = vmatprep.mubr.f32.mxu0 0.0
        %2000 = vmatmul.mubr.f32.gmra.mrb[0].mxu0 %v1928
        %v2001 = vpop.f32.mrb[0].mxu0
        %v2002 = vadd.f32 %v1921, %v2001
        %v2003 = vpop.f32.mrb[0].mxu0
        %2004 = vdwg.mxu0
        %v2005 = vld [vmem:[%s1825 + $0x2] sm:$0xff]
        %v2006 = vld [vmem:[%s1825 + $0xa] sm:$0x7]
        %s2007 = scalar_lea.vmem %s7, 96
        %v2008 = vld [vmem:[%s2007] sm:$0xff]
        %v2009 = vld [vmem:[%s2007 + $0x8] sm:$0xff]
        %v2010 = vld [vmem:[%s2007 + $0x10] sm:$0xff]
        %v2011 = vld [vmem:[%s2007 + $0x18] sm:$0xff]
        %v2012 = vld [vmem:[%s2007 + $0x20] sm:$0xff]
        %v2013 = vld [vmem:[%s2007 + $0x28] sm:$0xff]
        %v2015 = vsel %vm322, %v2005, 0
        %v2018 = vsel %vm322, %v2006, 0
        %2020 = vmatprep.subr.mxu0 0.0
        %2021 = vmatpush1.msra.mxu0 %v2008
        %2022 = vmatprep.subr.mxu0 0.0
        %2023 = vmatpush1.msra.mxu0 %v2009
        %2024 = vmatprep.subr.mxu0 0.0
        %2025 = vmatpush1.msra.mxu0 %v2010
        %2026 = vmatprep.subr.mxu0 0.0
        %2027 = vmatpush1.msra.mxu0 %v2011
        %2028 = vmatprep.subr.mxu0 0.0
        %2029 = vmatpush1.msra.mxu0 %v2012
        %2030 = vmatprep.subr.mxu0 0.0
        %2031 = vmatpush1.msra.mxu0 %v2013
        %2032 = vmatprep.subr.mxu0 0.0
        %2033 = vmatpush1.msra.mxu0 0.0
        %2034 = vmatprep.subr.mxu0 0.0
        %2035 = vmatpush1.msra.mxu0 0.0
        %2036 = vmatprep.subr.mxu0 0.0
        %2037 = vmatpush1.msra.mxu0 0.0
        %2038 = vmatprep.subr.mxu0 0.0
        %2039 = vmatpush1.msra.mxu0 0.0
        %2040 = vmatprep.subr.mxu0 0.0
        %2041 = vmatpush1.msra.mxu0 0.0
        %2042 = vmatprep.subr.mxu0 0.0
        %2043 = vmatpush1.msra.mxu0 0.0
        %2044 = vmatprep.subr.mxu0 0.0
        %2045 = vmatpush1.msra.mxu0 0.0
        %2046 = vmatprep.subr.mxu0 0.0
        %2047 = vmatpush1.msra.mxu0 0.0
        %2048 = vmatprep.subr.mxu0 0.0
        %2049 = vmatpush1.msra.mxu0 0.0
        %2050 = vmatprep.subr.mxu0 0.0
        %2051 = vmatpush1.msra.mxu0 0.0
        %2052 = vmatprep.subr.mxu0 0.0
        %2053 = vmatpush1.msra.mxu0 0.0
        %2054 = vmatprep.subr.mxu0 0.0
        %2055 = vmatpush1.msra.mxu0 0.0
        %2056 = vmatprep.subr.mxu0 0.0
        %2057 = vmatpush1.msra.mxu0 0.0
        %2058 = vmatprep.subr.mxu0 0.0
        %2059 = vmatpush1.msra.mxu0 0.0
        %2060 = vmatprep.subr.mxu0 0.0
        %2061 = vmatpush1.msra.mxu0 0.0
        %2062 = vmatprep.subr.mxu0 0.0
        %2063 = vmatpush1.msra.mxu0 0.0
        %2064 = vmatprep.subr.mxu0 0.0
        %2065 = vmatpush1.msra.mxu0 0.0
        %2066 = vmatprep.subr.mxu0 0.0
        %2067 = vmatpush1.msra.mxu0 0.0
        %2068 = vmatprep.subr.mxu0 0.0
        %2069 = vmatpush1.msra.mxu0 0.0
        %2070 = vmatprep.subr.mxu0 0.0
        %2071 = vmatpush1.msra.mxu0 0.0
        %2072 = vmatprep.subr.mxu0 0.0
        %2073 = vmatpush1.msra.mxu0 0.0
        %2074 = vmatprep.subr.mxu0 0.0
        %2075 = vmatpush1.msra.mxu0 0.0
        %2076 = vmatprep.subr.mxu0 0.0
        %2077 = vmatpush1.msra.mxu0 0.0
        %2078 = vmatprep.subr.mxu0 0.0
        %2079 = vmatpush1.msra.mxu0 0.0
        %2080 = vmatprep.subr.mxu0 0.0
        %2081 = vmatpush1.msra.mxu0 0.0
        %2082 = vmatprep.subr.mxu0 0.0
        %2083 = vmatpush1.msra.mxu0 0.0
        %2084 = vmatprep.mubr.f32.mxu0 0.0
        %2085 = vmatmul.mubr.f32.gmra.mrb[0].mxu0 %v2015
        %v2086 = vpop.f32.mrb[0].mxu0
        %v2087 = vadd.f32 0.0, %v2086
        %v2088 = vpop.f32.mrb[0].mxu0
        %2089 = vmatprep.mubr.f32.mxu0 0.0
        %2090 = vmatmul.mubr.f32.gmra.mrb[0].mxu0 %v2018
        %v2091 = vpop.f32.mrb[0].mxu0
        %v2092 = vadd.f32 0.0, %v2091
        %v2093 = vpop.f32.mrb[0].mxu0
        %2094 = vdwg.mxu0
        %v2095 = vadd.f32 %v1997, %v2087
        %v2096 = vadd.f32 %v2002, %v2092
        %v2097 = vld [vmem:[%s1825 + $0x3] sm:$0xff]
        %v2098 = vld [vmem:[%s1825 + $0xb] sm:$0x7]
        %s2099 = scalar_lea.vmem %s7, 144
        %v2100 = vld [vmem:[%s2099] sm:$0xff]
        %v2101 = vld [vmem:[%s2099 + $0x8] sm:$0xff]
        %v2102 = vld [vmem:[%s2099 + $0x10] sm:$0xff]
        %v2103 = vld [vmem:[%s2099 + $0x18] sm:$0xff]
        %v2104 = vld [vmem:[%s2099 + $0x20] sm:$0xff]
        %v2105 = vld [vmem:[%s2099 + $0x28] sm:$0xff]
        %v2107 = vsel %vm322, %v2097, 0
        %v2110 = vsel %vm322, %v2098, 0
        %2112 = vmatprep.subr.mxu0 0.0
        %2113 = vmatpush1.msra.mxu0 %v2100
        %2114 = vmatprep.subr.mxu0 0.0
        %2115 = vmatpush1.msra.mxu0 %v2101
        %2116 = vmatprep.subr.mxu0 0.0
        %2117 = vmatpush1.msra.mxu0 %v2102
        %2118 = vmatprep.subr.mxu0 0.0
        %2119 = vmatpush1.msra.mxu0 %v2103
        %2120 = vmatprep.subr.mxu0 0.0
        %2121 = vmatpush1.msra.mxu0 %v2104
        %2122 = vmatprep.subr.mxu0 0.0
        %2123 = vmatpush1.msra.mxu0 %v2105
        %2124 = vmatprep.subr.mxu0 0.0
        %2125 = vmatpush1.msra.mxu0 0.0
        %2126 = vmatprep.subr.mxu0 0.0
        %2127 = vmatpush1.msra.mxu0 0.0
        %2128 = vmatprep.subr.mxu0 0.0
        %2129 = vmatpush1.msra.mxu0 0.0
        %2130 = vmatprep.subr.mxu0 0.0
        %2131 = vmatpush1.msra.mxu0 0.0
        %2132 = vmatprep.subr.mxu0 0.0
        %2133 = vmatpush1.msra.mxu0 0.0
        %2134 = vmatprep.subr.mxu0 0.0
        %2135 = vmatpush1.msra.mxu0 0.0
        %2136 = vmatprep.subr.mxu0 0.0
        %2137 = vmatpush1.msra.mxu0 0.0
        %2138 = vmatprep.subr.mxu0 0.0
        %2139 = vmatpush1.msra.mxu0 0.0
        %2140 = vmatprep.subr.mxu0 0.0
        %2141 = vmatpush1.msra.mxu0 0.0
        %2142 = vmatprep.subr.mxu0 0.0
        %2143 = vmatpush1.msra.mxu0 0.0
        %2144 = vmatprep.subr.mxu0 0.0
        %2145 = vmatpush1.msra.mxu0 0.0
        %2146 = vmatprep.subr.mxu0 0.0
        %2147 = vmatpush1.msra.mxu0 0.0
        %2148 = vmatprep.subr.mxu0 0.0
        %2149 = vmatpush1.msra.mxu0 0.0
        %2150 = vmatprep.subr.mxu0 0.0
        %2151 = vmatpush1.msra.mxu0 0.0
        %2152 = vmatprep.subr.mxu0 0.0
        %2153 = vmatpush1.msra.mxu0 0.0
        %2154 = vmatprep.subr.mxu0 0.0
        %2155 = vmatpush1.msra.mxu0 0.0
        %2156 = vmatprep.subr.mxu0 0.0
        %2157 = vmatpush1.msra.mxu0 0.0
        %2158 = vmatprep.subr.mxu0 0.0
        %2159 = vmatpush1.msra.mxu0 0.0
        %2160 = vmatprep.subr.mxu0 0.0
        %2161 = vmatpush1.msra.mxu0 0.0
        %2162 = vmatprep.subr.mxu0 0.0
        %2163 = vmatpush1.msra.mxu0 0.0
        %2164 = vmatprep.subr.mxu0 0.0
        %2165 = vmatpush1.msra.mxu0 0.0
        %2166 = vmatprep.subr.mxu0 0.0
        %2167 = vmatpush1.msra.mxu0 0.0
        %2168 = vmatprep.subr.mxu0 0.0
        %2169 = vmatpush1.msra.mxu0 0.0
        %2170 = vmatprep.subr.mxu0 0.0
        %2171 = vmatpush1.msra.mxu0 0.0
        %2172 = vmatprep.subr.mxu0 0.0
        %2173 = vmatpush1.msra.mxu0 0.0
        %2174 = vmatprep.subr.mxu0 0.0
        %2175 = vmatpush1.msra.mxu0 0.0
        %2176 = vmatprep.mubr.f32.mxu0 0.0
        %2177 = vmatmul.mubr.f32.gmra.mrb[0].mxu0 %v2107
        %v2178 = vpop.f32.mrb[0].mxu0
        %v2179 = vadd.f32 0.0, %v2178
        %v2180 = vpop.f32.mrb[0].mxu0
        %2181 = vmatprep.mubr.f32.mxu0 0.0
        %2182 = vmatmul.mubr.f32.gmra.mrb[0].mxu0 %v2110
        %v2183 = vpop.f32.mrb[0].mxu0
        %v2184 = vadd.f32 0.0, %v2183
        %v2185 = vpop.f32.mrb[0].mxu0
        %2186 = vdwg.mxu0
        %v2187 = vadd.f32 %v2095, %v2179
        %v2188 = vadd.f32 %v2096, %v2184
        %v2189 = vld [vmem:[%s1825 + $0x4] sm:$0xff]
        %v2190 = vld [vmem:[%s1825 + $0xc] sm:$0x7]
        %s2191 = scalar_lea.vmem %s7, 192
        %v2192 = vld [vmem:[%s2191] sm:$0xff]
        %v2193 = vld [vmem:[%s2191 + $0x8] sm:$0xff]
        %v2194 = vld [vmem:[%s2191 + $0x10] sm:$0xff]
        %v2195 = vld [vmem:[%s2191 + $0x18] sm:$0xff]
        %v2196 = vld [vmem:[%s2191 + $0x20] sm:$0xff]
        %v2197 = vld [vmem:[%s2191 + $0x28] sm:$0xff]
        %v2199 = vsel %vm322, %v2189, 0
        %v2202 = vsel %vm322, %v2190, 0
        %2204 = vmatprep.subr.mxu0 0.0
        %2205 = vmatpush1.msra.mxu0 %v2192
        %2206 = vmatprep.subr.mxu0 0.0
        %2207 = vmatpush1.msra.mxu0 %v2193
        %2208 = vmatprep.subr.mxu0 0.0
        %2209 = vmatpush1.msra.mxu0 %v2194
        %2210 = vmatprep.subr.mxu0 0.0
        %2211 = vmatpush1.msra.mxu0 %v2195
        %2212 = vmatprep.subr.mxu0 0.0
        %2213 = vmatpush1.msra.mxu0 %v2196
        %2214 = vmatprep.subr.mxu0 0.0
        %2215 = vmatpush1.msra.mxu0 %v2197
        %2216 = vmatprep.subr.mxu0 0.0
        %2217 = vmatpush1.msra.mxu0 0.0
        %2218 = vmatprep.subr.mxu0 0.0
        %2219 = vmatpush1.msra.mxu0 0.0
        %2220 = vmatprep.subr.mxu0 0.0
        %2221 = vmatpush1.msra.mxu0 0.0
        %2222 = vmatprep.subr.mxu0 0.0
        %2223 = vmatpush1.msra.mxu0 0.0
        %2224 = vmatprep.subr.mxu0 0.0
        %2225 = vmatpush1.msra.mxu0 0.0
        %2226 = vmatprep.subr.mxu0 0.0
        %2227 = vmatpush1.msra.mxu0 0.0
        %2228 = vmatprep.subr.mxu0 0.0
        %2229 = vmatpush1.msra.mxu0 0.0
        %2230 = vmatprep.subr.mxu0 0.0
        %2231 = vmatpush1.msra.mxu0 0.0
        %2232 = vmatprep.subr.mxu0 0.0
        %2233 = vmatpush1.msra.mxu0 0.0
        %2234 = vmatprep.subr.mxu0 0.0
        %2235 = vmatpush1.msra.mxu0 0.0
        %2236 = vmatprep.subr.mxu0 0.0
        %2237 = vmatpush1.msra.mxu0 0.0
        %2238 = vmatprep.subr.mxu0 0.0
        %2239 = vmatpush1.msra.mxu0 0.0
        %2240 = vmatprep.subr.mxu0 0.0
        %2241 = vmatpush1.msra.mxu0 0.0
        %2242 = vmatprep.subr.mxu0 0.0
        %2243 = vmatpush1.msra.mxu0 0.0
        %2244 = vmatprep.subr.mxu0 0.0
        %2245 = vmatpush1.msra.mxu0 0.0
        %2246 = vmatprep.subr.mxu0 0.0
        %2247 = vmatpush1.msra.mxu0 0.0
        %2248 = vmatprep.subr.mxu0 0.0
        %2249 = vmatpush1.msra.mxu0 0.0
        %2250 = vmatprep.subr.mxu0 0.0
        %2251 = vmatpush1.msra.mxu0 0.0
        %2252 = vmatprep.subr.mxu0 0.0
        %2253 = vmatpush1.msra.mxu0 0.0
        %2254 = vmatprep.subr.mxu0 0.0
        %2255 = vmatpush1.msra.mxu0 0.0
        %2256 = vmatprep.subr.mxu0 0.0
        %2257 = vmatpush1.msra.mxu0 0.0
        %2258 = vmatprep.subr.mxu0 0.0
        %2259 = vmatpush1.msra.mxu0 0.0
        %2260 = vmatprep.subr.mxu0 0.0
        %2261 = vmatpush1.msra.mxu0 0.0
        %2262 = vmatprep.subr.mxu0 0.0
        %2263 = vmatpush1.msra.mxu0 0.0
        %2264 = vmatprep.subr.mxu0 0.0
        %2265 = vmatpush1.msra.mxu0 0.0
        %2266 = vmatprep.subr.mxu0 0.0
        %2267 = vmatpush1.msra.mxu0 0.0
        %2268 = vmatprep.mubr.f32.mxu0 0.0
        %2269 = vmatmul.mubr.f32.gmra.mrb[0].mxu0 %v2199
        %v2270 = vpop.f32.mrb[0].mxu0
        %v2271 = vadd.f32 0.0, %v2270
        %v2272 = vpop.f32.mrb[0].mxu0
        %2273 = vmatprep.mubr.f32.mxu0 0.0
        %2274 = vmatmul.mubr.f32.gmra.mrb[0].mxu0 %v2202
        %v2275 = vpop.f32.mrb[0].mxu0
        %v2276 = vadd.f32 0.0, %v2275
        %v2277 = vpop.f32.mrb[0].mxu0
        %2278 = vdwg.mxu0
        %v2279 = vadd.f32 %v2187, %v2271
        %v2280 = vadd.f32 %v2188, %v2276
        %s2281 = sadd.s32 %s1819, 1
        %s2282 = smul.u32 %s2281, 16
        %s2283 = scalar_lea.vmem [#allocation3], %s2282
        %v2284 = vld [vmem:[%s2283] sm:$0xff]
        %v2285 = vld [vmem:[%s2283 + $0x8] sm:$0x7]
        %s2286 = scalar_lea.vmem %s7, 240
        %v2287 = vld [vmem:[%s2286] sm:$0xff]
        %v2288 = vld [vmem:[%s2286 + $0x8] sm:$0xff]
        %v2289 = vld [vmem:[%s2286 + $0x10] sm:$0xff]
        %v2290 = vld [vmem:[%s2286 + $0x18] sm:$0xff]
        %v2291 = vld [vmem:[%s2286 + $0x20] sm:$0xff]
        %v2292 = vld [vmem:[%s2286 + $0x28] sm:$0xff]
        %v2294 = vsel %vm322, %v2284, 0
        %v2297 = vsel %vm322, %v2285, 0
        %2299 = vmatprep.subr.mxu0 0.0
        %2300 = vmatpush1.msra.mxu0 %v2287
        %2301 = vmatprep.subr.mxu0 0.0
        %2302 = vmatpush1.msra.mxu0 %v2288
        %2303 = vmatprep.subr.mxu0 0.0
        %2304 = vmatpush1.msra.mxu0 %v2289
        %2305 = vmatprep.subr.mxu0 0.0
        %2306 = vmatpush1.msra.mxu0 %v2290
        %2307 = vmatprep.subr.mxu0 0.0
        %2308 = vmatpush1.msra.mxu0 %v2291
        %2309 = vmatprep.subr.mxu0 0.0
        %2310 = vmatpush1.msra.mxu0 %v2292
        %2311 = vmatprep.subr.mxu0 0.0
        %2312 = vmatpush1.msra.mxu0 0.0
        %2313 = vmatprep.subr.mxu0 0.0
        %2314 = vmatpush1.msra.mxu0 0.0
        %2315 = vmatprep.subr.mxu0 0.0
        %2316 = vmatpush1.msra.mxu0 0.0
        %2317 = vmatprep.subr.mxu0 0.0
        %2318 = vmatpush1.msra.mxu0 0.0
        %2319 = vmatprep.subr.mxu0 0.0
        %2320 = vmatpush1.msra.mxu0 0.0
        %2321 = vmatprep.subr.mxu0 0.0
        %2322 = vmatpush1.msra.mxu0 0.0
        %2323 = vmatprep.subr.mxu0 0.0
        %2324 = vmatpush1.msra.mxu0 0.0
        %2325 = vmatprep.subr.mxu0 0.0
        %2326 = vmatpush1.msra.mxu0 0.0
        %2327 = vmatprep.subr.mxu0 0.0
        %2328 = vmatpush1.msra.mxu0 0.0
        %2329 = vmatprep.subr.mxu0 0.0
        %2330 = vmatpush1.msra.mxu0 0.0
        %2331 = vmatprep.subr.mxu0 0.0
        %2332 = vmatpush1.msra.mxu0 0.0
        %2333 = vmatprep.subr.mxu0 0.0
        %2334 = vmatpush1.msra.mxu0 0.0
        %2335 = vmatprep.subr.mxu0 0.0
        %2336 = vmatpush1.msra.mxu0 0.0
        %2337 = vmatprep.subr.mxu0 0.0
        %2338 = vmatpush1.msra.mxu0 0.0
        %2339 = vmatprep.subr.mxu0 0.0
        %2340 = vmatpush1.msra.mxu0 0.0
        %2341 = vmatprep.subr.mxu0 0.0
        %2342 = vmatpush1.msra.mxu0 0.0
        %2343 = vmatprep.subr.mxu0 0.0
        %2344 = vmatpush1.msra.mxu0 0.0
        %2345 = vmatprep.subr.mxu0 0.0
        %2346 = vmatpush1.msra.mxu0 0.0
        %2347 = vmatprep.subr.mxu0 0.0
        %2348 = vmatpush1.msra.mxu0 0.0
        %2349 = vmatprep.subr.mxu0 0.0
        %2350 = vmatpush1.msra.mxu0 0.0
        %2351 = vmatprep.subr.mxu0 0.0
        %2352 = vmatpush1.msra.mxu0 0.0
        %2353 = vmatprep.subr.mxu0 0.0
        %2354 = vmatpush1.msra.mxu0 0.0
        %2355 = vmatprep.subr.mxu0 0.0
        %2356 = vmatpush1.msra.mxu0 0.0
        %2357 = vmatprep.subr.mxu0 0.0
        %2358 = vmatpush1.msra.mxu0 0.0
        %2359 = vmatprep.subr.mxu0 0.0
        %2360 = vmatpush1.msra.mxu0 0.0
        %2361 = vmatprep.subr.mxu0 0.0
        %2362 = vmatpush1.msra.mxu0 0.0
        %2363 = vmatprep.mubr.f32.mxu0 0.0
        %2364 = vmatmul.mubr.f32.gmra.mrb[0].mxu0 %v2294
        %v2365 = vpop.f32.mrb[0].mxu0
        %v2366 = vadd.f32 0.0, %v2365
        %v2367 = vpop.f32.mrb[0].mxu0
        %2368 = vmatprep.mubr.f32.mxu0 0.0
        %2369 = vmatmul.mubr.f32.gmra.mrb[0].mxu0 %v2297
        %v2370 = vpop.f32.mrb[0].mxu0
        %v2371 = vadd.f32 0.0, %v2370
        %v2372 = vpop.f32.mrb[0].mxu0
        %2373 = vdwg.mxu0
        %v2374 = vadd.f32 %v2279, %v2366
        %v2375 = vadd.f32 %v2280, %v2371
        %v2376 = vld [vmem:[%s2283 + $0x1] sm:$0xff]
        %v2377 = vld [vmem:[%s2283 + $0x9] sm:$0x7]
        %s2378 = scalar_lea.vmem %s7, 288
        %v2379 = vld [vmem:[%s2378] sm:$0xff]
        %v2380 = vld [vmem:[%s2378 + $0x8] sm:$0xff]
        %v2381 = vld [vmem:[%s2378 + $0x10] sm:$0xff]
        %v2382 = vld [vmem:[%s2378 + $0x18] sm:$0xff]
        %v2383 = vld [vmem:[%s2378 + $0x20] sm:$0xff]
        %v2384 = vld [vmem:[%s2378 + $0x28] sm:$0xff]
        %v2386 = vsel %vm322, %v2376, 0
        %v2389 = vsel %vm322, %v2377, 0
        %2391 = vmatprep.subr.mxu0 0.0
        %2392 = vmatpush1.msra.mxu0 %v2379
        %2393 = vmatprep.subr.mxu0 0.0
        %2394 = vmatpush1.msra.mxu0 %v2380
        %2395 = vmatprep.subr.mxu0 0.0
        %2396 = vmatpush1.msra.mxu0 %v2381
        %2397 = vmatprep.subr.mxu0 0.0
        %2398 = vmatpush1.msra.mxu0 %v2382
        %2399 = vmatprep.subr.mxu0 0.0
        %2400 = vmatpush1.msra.mxu0 %v2383
        %2401 = vmatprep.subr.mxu0 0.0
        %2402 = vmatpush1.msra.mxu0 %v2384
        %2403 = vmatprep.subr.mxu0 0.0
        %2404 = vmatpush1.msra.mxu0 0.0
        %2405 = vmatprep.subr.mxu0 0.0
        %2406 = vmatpush1.msra.mxu0 0.0
        %2407 = vmatprep.subr.mxu0 0.0
        %2408 = vmatpush1.msra.mxu0 0.0
        %2409 = vmatprep.subr.mxu0 0.0
        %2410 = vmatpush1.msra.mxu0 0.0
        %2411 = vmatprep.subr.mxu0 0.0
        %2412 = vmatpush1.msra.mxu0 0.0
        %2413 = vmatprep.subr.mxu0 0.0
        %2414 = vmatpush1.msra.mxu0 0.0
        %2415 = vmatprep.subr.mxu0 0.0
        %2416 = vmatpush1.msra.mxu0 0.0
        %2417 = vmatprep.subr.mxu0 0.0
        %2418 = vmatpush1.msra.mxu0 0.0
        %2419 = vmatprep.subr.mxu0 0.0
        %2420 = vmatpush1.msra.mxu0 0.0
        %2421 = vmatprep.subr.mxu0 0.0
        %2422 = vmatpush1.msra.mxu0 0.0
        %2423 = vmatprep.subr.mxu0 0.0
        %2424 = vmatpush1.msra.mxu0 0.0
        %2425 = vmatprep.subr.mxu0 0.0
        %2426 = vmatpush1.msra.mxu0 0.0
        %2427 = vmatprep.subr.mxu0 0.0
        %2428 = vmatpush1.msra.mxu0 0.0
        %2429 = vmatprep.subr.mxu0 0.0
        %2430 = vmatpush1.msra.mxu0 0.0
        %2431 = vmatprep.subr.mxu0 0.0
        %2432 = vmatpush1.msra.mxu0 0.0
        %2433 = vmatprep.subr.mxu0 0.0
        %2434 = vmatpush1.msra.mxu0 0.0
        %2435 = vmatprep.subr.mxu0 0.0
        %2436 = vmatpush1.msra.mxu0 0.0
        %2437 = vmatprep.subr.mxu0 0.0
        %2438 = vmatpush1.msra.mxu0 0.0
        %2439 = vmatprep.subr.mxu0 0.0
        %2440 = vmatpush1.msra.mxu0 0.0
        %2441 = vmatprep.subr.mxu0 0.0
        %2442 = vmatpush1.msra.mxu0 0.0
        %2443 = vmatprep.subr.mxu0 0.0
        %2444 = vmatpush1.msra.mxu0 0.0
        %2445 = vmatprep.subr.mxu0 0.0
        %2446 = vmatpush1.msra.mxu0 0.0
        %2447 = vmatprep.subr.mxu0 0.0
        %2448 = vmatpush1.msra.mxu0 0.0
        %2449 = vmatprep.subr.mxu0 0.0
        %2450 = vmatpush1.msra.mxu0 0.0
        %2451 = vmatprep.subr.mxu0 0.0
        %2452 = vmatpush1.msra.mxu0 0.0
        %2453 = vmatprep.subr.mxu0 0.0
        %2454 = vmatpush1.msra.mxu0 0.0
        %2455 = vmatprep.mubr.f32.mxu0 0.0
        %2456 = vmatmul.mubr.f32.gmra.mrb[0].mxu0 %v2386
        %v2457 = vpop.f32.mrb[0].mxu0
        %v2458 = vadd.f32 0.0, %v2457
        %v2459 = vpop.f32.mrb[0].mxu0
        %2460 = vmatprep.mubr.f32.mxu0 0.0
        %2461 = vmatmul.mubr.f32.gmra.mrb[0].mxu0 %v2389
        %v2462 = vpop.f32.mrb[0].mxu0
        %v2463 = vadd.f32 0.0, %v2462
        %v2464 = vpop.f32.mrb[0].mxu0
        %2465 = vdwg.mxu0
        %v2466 = vadd.f32 %v2374, %v2458
        %v2467 = vadd.f32 %v2375, %v2463
        %v2468 = vld [vmem:[%s2283 + $0x2] sm:$0xff]
        %v2469 = vld [vmem:[%s2283 + $0xa] sm:$0x7]
        %s2470 = scalar_lea.vmem %s7, 336
        %v2471 = vld [vmem:[%s2470] sm:$0xff]
        %v2472 = vld [vmem:[%s2470 + $0x8] sm:$0xff]
        %v2473 = vld [vmem:[%s2470 + $0x10] sm:$0xff]
        %v2474 = vld [vmem:[%s2470 + $0x18] sm:$0xff]
        %v2475 = vld [vmem:[%s2470 + $0x20] sm:$0xff]
        %v2476 = vld [vmem:[%s2470 + $0x28] sm:$0xff]
        %v2478 = vsel %vm322, %v2468, 0
        %v2481 = vsel %vm322, %v2469, 0
        %2483 = vmatprep.subr.mxu0 0.0
        %2484 = vmatpush1.msra.mxu0 %v2471
        %2485 = vmatprep.subr.mxu0 0.0
        %2486 = vmatpush1.msra.mxu0 %v2472
        %2487 = vmatprep.subr.mxu0 0.0
        %2488 = vmatpush1.msra.mxu0 %v2473
        %2489 = vmatprep.subr.mxu0 0.0
        %2490 = vmatpush1.msra.mxu0 %v2474
        %2491 = vmatprep.subr.mxu0 0.0
        %2492 = vmatpush1.msra.mxu0 %v2475
        %2493 = vmatprep.subr.mxu0 0.0
        %2494 = vmatpush1.msra.mxu0 %v2476
        %2495 = vmatprep.subr.mxu0 0.0
        %2496 = vmatpush1.msra.mxu0 0.0
        %2497 = vmatprep.subr.mxu0 0.0
        %2498 = vmatpush1.msra.mxu0 0.0
        %2499 = vmatprep.subr.mxu0 0.0
        %2500 = vmatpush1.msra.mxu0 0.0
        %2501 = vmatprep.subr.mxu0 0.0
        %2502 = vmatpush1.msra.mxu0 0.0
        %2503 = vmatprep.subr.mxu0 0.0
        %2504 = vmatpush1.msra.mxu0 0.0
        %2505 = vmatprep.subr.mxu0 0.0
        %2506 = vmatpush1.msra.mxu0 0.0
        %2507 = vmatprep.subr.mxu0 0.0
        %2508 = vmatpush1.msra.mxu0 0.0
        %2509 = vmatprep.subr.mxu0 0.0
        %2510 = vmatpush1.msra.mxu0 0.0
        %2511 = vmatprep.subr.mxu0 0.0
        %2512 = vmatpush1.msra.mxu0 0.0
        %2513 = vmatprep.subr.mxu0 0.0
        %2514 = vmatpush1.msra.mxu0 0.0
        %2515 = vmatprep.subr.mxu0 0.0
        %2516 = vmatpush1.msra.mxu0 0.0
        %2517 = vmatprep.subr.mxu0 0.0
        %2518 = vmatpush1.msra.mxu0 0.0
        %2519 = vmatprep.subr.mxu0 0.0
        %2520 = vmatpush1.msra.mxu0 0.0
        %2521 = vmatprep.subr.mxu0 0.0
        %2522 = vmatpush1.msra.mxu0 0.0
        %2523 = vmatprep.subr.mxu0 0.0
        %2524 = vmatpush1.msra.mxu0 0.0
        %2525 = vmatprep.subr.mxu0 0.0
        %2526 = vmatpush1.msra.mxu0 0.0
        %2527 = vmatprep.subr.mxu0 0.0
        %2528 = vmatpush1.msra.mxu0 0.0
        %2529 = vmatprep.subr.mxu0 0.0
        %2530 = vmatpush1.msra.mxu0 0.0
        %2531 = vmatprep.subr.mxu0 0.0
        %2532 = vmatpush1.msra.mxu0 0.0
        %2533 = vmatprep.subr.mxu0 0.0
        %2534 = vmatpush1.msra.mxu0 0.0
        %2535 = vmatprep.subr.mxu0 0.0
        %2536 = vmatpush1.msra.mxu0 0.0
        %2537 = vmatprep.subr.mxu0 0.0
        %2538 = vmatpush1.msra.mxu0 0.0
        %2539 = vmatprep.subr.mxu0 0.0
        %2540 = vmatpush1.msra.mxu0 0.0
        %2541 = vmatprep.subr.mxu0 0.0
        %2542 = vmatpush1.msra.mxu0 0.0
        %2543 = vmatprep.subr.mxu0 0.0
        %2544 = vmatpush1.msra.mxu0 0.0
        %2545 = vmatprep.subr.mxu0 0.0
        %2546 = vmatpush1.msra.mxu0 0.0
        %2547 = vmatprep.mubr.f32.mxu0 0.0
        %2548 = vmatmul.mubr.f32.gmra.mrb[0].mxu0 %v2478
        %v2549 = vpop.f32.mrb[0].mxu0
        %v2550 = vadd.f32 0.0, %v2549
        %v2551 = vpop.f32.mrb[0].mxu0
        %2552 = vmatprep.mubr.f32.mxu0 0.0
        %2553 = vmatmul.mubr.f32.gmra.mrb[0].mxu0 %v2481
        %v2554 = vpop.f32.mrb[0].mxu0
        %v2555 = vadd.f32 0.0, %v2554
        %v2556 = vpop.f32.mrb[0].mxu0
        %2557 = vdwg.mxu0
        %v2558 = vadd.f32 %v2466, %v2550
        %v2559 = vadd.f32 %v2467, %v2555
        %v2560 = vld [vmem:[%s2283 + $0x3] sm:$0xff]
        %v2561 = vld [vmem:[%s2283 + $0xb] sm:$0x7]
        %s2562 = scalar_lea.vmem %s7, 384
        %v2563 = vld [vmem:[%s2562] sm:$0xff]
        %v2564 = vld [vmem:[%s2562 + $0x8] sm:$0xff]
        %v2565 = vld [vmem:[%s2562 + $0x10] sm:$0xff]
        %v2566 = vld [vmem:[%s2562 + $0x18] sm:$0xff]
        %v2567 = vld [vmem:[%s2562 + $0x20] sm:$0xff]
        %v2568 = vld [vmem:[%s2562 + $0x28] sm:$0xff]
        %v2570 = vsel %vm322, %v2560, 0
        %v2573 = vsel %vm322, %v2561, 0
        %2575 = vmatprep.subr.mxu0 0.0
        %2576 = vmatpush1.msra.mxu0 %v2563
        %2577 = vmatprep.subr.mxu0 0.0
        %2578 = vmatpush1.msra.mxu0 %v2564
        %2579 = vmatprep.subr.mxu0 0.0
        %2580 = vmatpush1.msra.mxu0 %v2565
        %2581 = vmatprep.subr.mxu0 0.0
        %2582 = vmatpush1.msra.mxu0 %v2566
        %2583 = vmatprep.subr.mxu0 0.0
        %2584 = vmatpush1.msra.mxu0 %v2567
        %2585 = vmatprep.subr.mxu0 0.0
        %2586 = vmatpush1.msra.mxu0 %v2568
        %2587 = vmatprep.subr.mxu0 0.0
        %2588 = vmatpush1.msra.mxu0 0.0
        %2589 = vmatprep.subr.mxu0 0.0
        %2590 = vmatpush1.msra.mxu0 0.0
        %2591 = vmatprep.subr.mxu0 0.0
        %2592 = vmatpush1.msra.mxu0 0.0
        %2593 = vmatprep.subr.mxu0 0.0
        %2594 = vmatpush1.msra.mxu0 0.0
        %2595 = vmatprep.subr.mxu0 0.0
        %2596 = vmatpush1.msra.mxu0 0.0
        %2597 = vmatprep.subr.mxu0 0.0
        %2598 = vmatpush1.msra.mxu0 0.0
        %2599 = vmatprep.subr.mxu0 0.0
        %2600 = vmatpush1.msra.mxu0 0.0
        %2601 = vmatprep.subr.mxu0 0.0
        %2602 = vmatpush1.msra.mxu0 0.0
        %2603 = vmatprep.subr.mxu0 0.0
        %2604 = vmatpush1.msra.mxu0 0.0
        %2605 = vmatprep.subr.mxu0 0.0
        %2606 = vmatpush1.msra.mxu0 0.0
        %2607 = vmatprep.subr.mxu0 0.0
        %2608 = vmatpush1.msra.mxu0 0.0
        %2609 = vmatprep.subr.mxu0 0.0
        %2610 = vmatpush1.msra.mxu0 0.0
        %2611 = vmatprep.subr.mxu0 0.0
        %2612 = vmatpush1.msra.mxu0 0.0
        %2613 = vmatprep.subr.mxu0 0.0
        %2614 = vmatpush1.msra.mxu0 0.0
        %2615 = vmatprep.subr.mxu0 0.0
        %2616 = vmatpush1.msra.mxu0 0.0
        %2617 = vmatprep.subr.mxu0 0.0
        %2618 = vmatpush1.msra.mxu0 0.0
        %2619 = vmatprep.subr.mxu0 0.0
        %2620 = vmatpush1.msra.mxu0 0.0
        %2621 = vmatprep.subr.mxu0 0.0
        %2622 = vmatpush1.msra.mxu0 0.0
        %2623 = vmatprep.subr.mxu0 0.0
        %2624 = vmatpush1.msra.mxu0 0.0
        %2625 = vmatprep.subr.mxu0 0.0
        %2626 = vmatpush1.msra.mxu0 0.0
        %2627 = vmatprep.subr.mxu0 0.0
        %2628 = vmatpush1.msra.mxu0 0.0
        %2629 = vmatprep.subr.mxu0 0.0
        %2630 = vmatpush1.msra.mxu0 0.0
        %2631 = vmatprep.subr.mxu0 0.0
        %2632 = vmatpush1.msra.mxu0 0.0
        %2633 = vmatprep.subr.mxu0 0.0
        %2634 = vmatpush1.msra.mxu0 0.0
        %2635 = vmatprep.subr.mxu0 0.0
        %2636 = vmatpush1.msra.mxu0 0.0
        %2637 = vmatprep.subr.mxu0 0.0
        %2638 = vmatpush1.msra.mxu0 0.0
        %2639 = vmatprep.mubr.f32.mxu0 0.0
        %2640 = vmatmul.mubr.f32.gmra.mrb[0].mxu0 %v2570
        %v2641 = vpop.f32.mrb[0].mxu0
        %v2642 = vadd.f32 0.0, %v2641
        %v2643 = vpop.f32.mrb[0].mxu0
        %2644 = vmatprep.mubr.f32.mxu0 0.0
        %2645 = vmatmul.mubr.f32.gmra.mrb[0].mxu0 %v2573
        %v2646 = vpop.f32.mrb[0].mxu0
        %v2647 = vadd.f32 0.0, %v2646
        %v2648 = vpop.f32.mrb[0].mxu0
        %2649 = vdwg.mxu0
        %v2650 = vadd.f32 %v2558, %v2642
        %v2651 = vadd.f32 %v2559, %v2647
        %v2652 = vld [vmem:[%s2283 + $0x4] sm:$0xff]
        %v2653 = vld [vmem:[%s2283 + $0xc] sm:$0x7]
        %s2654 = scalar_lea.vmem %s7, 432
        %v2655 = vld [vmem:[%s2654] sm:$0xff]
        %v2656 = vld [vmem:[%s2654 + $0x8] sm:$0xff]
        %v2657 = vld [vmem:[%s2654 + $0x10] sm:$0xff]
        %v2658 = vld [vmem:[%s2654 + $0x18] sm:$0xff]
        %v2659 = vld [vmem:[%s2654 + $0x20] sm:$0xff]
        %v2660 = vld [vmem:[%s2654 + $0x28] sm:$0xff]
        %v2662 = vsel %vm322, %v2652, 0
        %v2665 = vsel %vm322, %v2653, 0
        %2667 = vmatprep.subr.mxu0 0.0
        %2668 = vmatpush1.msra.mxu0 %v2655
        %2669 = vmatprep.subr.mxu0 0.0
        %2670 = vmatpush1.msra.mxu0 %v2656
        %2671 = vmatprep.subr.mxu0 0.0
        %2672 = vmatpush1.msra.mxu0 %v2657
        %2673 = vmatprep.subr.mxu0 0.0
        %2674 = vmatpush1.msra.mxu0 %v2658
        %2675 = vmatprep.subr.mxu0 0.0
        %2676 = vmatpush1.msra.mxu0 %v2659
        %2677 = vmatprep.subr.mxu0 0.0
        %2678 = vmatpush1.msra.mxu0 %v2660
        %2679 = vmatprep.subr.mxu0 0.0
        %2680 = vmatpush1.msra.mxu0 0.0
        %2681 = vmatprep.subr.mxu0 0.0
        %2682 = vmatpush1.msra.mxu0 0.0
        %2683 = vmatprep.subr.mxu0 0.0
        %2684 = vmatpush1.msra.mxu0 0.0
        %2685 = vmatprep.subr.mxu0 0.0
        %2686 = vmatpush1.msra.mxu0 0.0
        %2687 = vmatprep.subr.mxu0 0.0
        %2688 = vmatpush1.msra.mxu0 0.0
        %2689 = vmatprep.subr.mxu0 0.0
        %2690 = vmatpush1.msra.mxu0 0.0
        %2691 = vmatprep.subr.mxu0 0.0
        %2692 = vmatpush1.msra.mxu0 0.0
        %2693 = vmatprep.subr.mxu0 0.0
        %2694 = vmatpush1.msra.mxu0 0.0
        %2695 = vmatprep.subr.mxu0 0.0
        %2696 = vmatpush1.msra.mxu0 0.0
        %2697 = vmatprep.subr.mxu0 0.0
        %2698 = vmatpush1.msra.mxu0 0.0
        %2699 = vmatprep.subr.mxu0 0.0
        %2700 = vmatpush1.msra.mxu0 0.0
        %2701 = vmatprep.subr.mxu0 0.0
        %2702 = vmatpush1.msra.mxu0 0.0
        %2703 = vmatprep.subr.mxu0 0.0
        %2704 = vmatpush1.msra.mxu0 0.0
        %2705 = vmatprep.subr.mxu0 0.0
        %2706 = vmatpush1.msra.mxu0 0.0
        %2707 = vmatprep.subr.mxu0 0.0
        %2708 = vmatpush1.msra.mxu0 0.0
        %2709 = vmatprep.subr.mxu0 0.0
        %2710 = vmatpush1.msra.mxu0 0.0
        %2711 = vmatprep.subr.mxu0 0.0
        %2712 = vmatpush1.msra.mxu0 0.0
        %2713 = vmatprep.subr.mxu0 0.0
        %2714 = vmatpush1.msra.mxu0 0.0
        %2715 = vmatprep.subr.mxu0 0.0
        %2716 = vmatpush1.msra.mxu0 0.0
        %2717 = vmatprep.subr.mxu0 0.0
        %2718 = vmatpush1.msra.mxu0 0.0
        %2719 = vmatprep.subr.mxu0 0.0
        %2720 = vmatpush1.msra.mxu0 0.0
        %2721 = vmatprep.subr.mxu0 0.0
        %2722 = vmatpush1.msra.mxu0 0.0
        %2723 = vmatprep.subr.mxu0 0.0
        %2724 = vmatpush1.msra.mxu0 0.0
        %2725 = vmatprep.subr.mxu0 0.0
        %2726 = vmatpush1.msra.mxu0 0.0
        %2727 = vmatprep.subr.mxu0 0.0
        %2728 = vmatpush1.msra.mxu0 0.0
        %2729 = vmatprep.subr.mxu0 0.0
        %2730 = vmatpush1.msra.mxu0 0.0
        %2731 = vmatprep.mubr.f32.mxu0 0.0
        %2732 = vmatmul.mubr.f32.gmra.mrb[0].mxu0 %v2662
        %v2733 = vpop.f32.mrb[0].mxu0
        %v2734 = vadd.f32 0.0, %v2733
        %v2735 = vpop.f32.mrb[0].mxu0
        %2736 = vmatprep.mubr.f32.mxu0 0.0
        %2737 = vmatmul.mubr.f32.gmra.mrb[0].mxu0 %v2665
        %v2738 = vpop.f32.mrb[0].mxu0
        %v2739 = vadd.f32 0.0, %v2738
        %v2740 = vpop.f32.mrb[0].mxu0
        %2741 = vdwg.mxu0
        %v2742 = vadd.f32 %v2650, %v2734
        %v2743 = vadd.f32 %v2651, %v2739
        %s2744 = sadd.s32 %s1819, 2
        %s2745 = smul.u32 %s2744, 16
        %s2746 = scalar_lea.vmem [#allocation3], %s2745
        %v2747 = vld [vmem:[%s2746] sm:$0xff]
        %v2748 = vld [vmem:[%s2746 + $0x8] sm:$0x7]
        %s2749 = scalar_lea.vmem %s7, 480
        %v2750 = vld [vmem:[%s2749] sm:$0xff]
        %v2751 = vld [vmem:[%s2749 + $0x8] sm:$0xff]
        %v2752 = vld [vmem:[%s2749 + $0x10] sm:$0xff]
        %v2753 = vld [vmem:[%s2749 + $0x18] sm:$0xff]
        %v2754 = vld [vmem:[%s2749 + $0x20] sm:$0xff]
        %v2755 = vld [vmem:[%s2749 + $0x28] sm:$0xff]
        %v2757 = vsel %vm322, %v2747, 0
        %v2760 = vsel %vm322, %v2748, 0
        %2762 = vmatprep.subr.mxu0 0.0
        %2763 = vmatpush1.msra.mxu0 %v2750
        %2764 = vmatprep.subr.mxu0 0.0
        %2765 = vmatpush1.msra.mxu0 %v2751
        %2766 = vmatprep.subr.mxu0 0.0
        %2767 = vmatpush1.msra.mxu0 %v2752
        %2768 = vmatprep.subr.mxu0 0.0
        %2769 = vmatpush1.msra.mxu0 %v2753
        %2770 = vmatprep.subr.mxu0 0.0
        %2771 = vmatpush1.msra.mxu0 %v2754
        %2772 = vmatprep.subr.mxu0 0.0
        %2773 = vmatpush1.msra.mxu0 %v2755
        %2774 = vmatprep.subr.mxu0 0.0
        %2775 = vmatpush1.msra.mxu0 0.0
        %2776 = vmatprep.subr.mxu0 0.0
        %2777 = vmatpush1.msra.mxu0 0.0
        %2778 = vmatprep.subr.mxu0 0.0
        %2779 = vmatpush1.msra.mxu0 0.0
        %2780 = vmatprep.subr.mxu0 0.0
        %2781 = vmatpush1.msra.mxu0 0.0
        %2782 = vmatprep.subr.mxu0 0.0
        %2783 = vmatpush1.msra.mxu0 0.0
        %2784 = vmatprep.subr.mxu0 0.0
        %2785 = vmatpush1.msra.mxu0 0.0
        %2786 = vmatprep.subr.mxu0 0.0
        %2787 = vmatpush1.msra.mxu0 0.0
        %2788 = vmatprep.subr.mxu0 0.0
        %2789 = vmatpush1.msra.mxu0 0.0
        %2790 = vmatprep.subr.mxu0 0.0
        %2791 = vmatpush1.msra.mxu0 0.0
        %2792 = vmatprep.subr.mxu0 0.0
        %2793 = vmatpush1.msra.mxu0 0.0
        %2794 = vmatprep.subr.mxu0 0.0
        %2795 = vmatpush1.msra.mxu0 0.0
        %2796 = vmatprep.subr.mxu0 0.0
        %2797 = vmatpush1.msra.mxu0 0.0
        %2798 = vmatprep.subr.mxu0 0.0
        %2799 = vmatpush1.msra.mxu0 0.0
        %2800 = vmatprep.subr.mxu0 0.0
        %2801 = vmatpush1.msra.mxu0 0.0
        %2802 = vmatprep.subr.mxu0 0.0
        %2803 = vmatpush1.msra.mxu0 0.0
        %2804 = vmatprep.subr.mxu0 0.0
        %2805 = vmatpush1.msra.mxu0 0.0
        %2806 = vmatprep.subr.mxu0 0.0
        %2807 = vmatpush1.msra.mxu0 0.0
        %2808 = vmatprep.subr.mxu0 0.0
        %2809 = vmatpush1.msra.mxu0 0.0
        %2810 = vmatprep.subr.mxu0 0.0
        %2811 = vmatpush1.msra.mxu0 0.0
        %2812 = vmatprep.subr.mxu0 0.0
        %2813 = vmatpush1.msra.mxu0 0.0
        %2814 = vmatprep.subr.mxu0 0.0
        %2815 = vmatpush1.msra.mxu0 0.0
        %2816 = vmatprep.subr.mxu0 0.0
        %2817 = vmatpush1.msra.mxu0 0.0
        %2818 = vmatprep.subr.mxu0 0.0
        %2819 = vmatpush1.msra.mxu0 0.0
        %2820 = vmatprep.subr.mxu0 0.0
        %2821 = vmatpush1.msra.mxu0 0.0
        %2822 = vmatprep.subr.mxu0 0.0
        %2823 = vmatpush1.msra.mxu0 0.0
        %2824 = vmatprep.subr.mxu0 0.0
        %2825 = vmatpush1.msra.mxu0 0.0
        %2826 = vmatprep.mubr.f32.mxu0 0.0
        %2827 = vmatmul.mubr.f32.gmra.mrb[0].mxu0 %v2757
        %v2828 = vpop.f32.mrb[0].mxu0
        %v2829 = vadd.f32 0.0, %v2828
        %v2830 = vpop.f32.mrb[0].mxu0
        %2831 = vmatprep.mubr.f32.mxu0 0.0
        %2832 = vmatmul.mubr.f32.gmra.mrb[0].mxu0 %v2760
        %v2833 = vpop.f32.mrb[0].mxu0
        %v2834 = vadd.f32 0.0, %v2833
        %v2835 = vpop.f32.mrb[0].mxu0
        %2836 = vdwg.mxu0
        %v2837 = vadd.f32 %v2742, %v2829
        %v2838 = vadd.f32 %v2743, %v2834
        %v2839 = vld [vmem:[%s2746 + $0x1] sm:$0xff]
        %v2840 = vld [vmem:[%s2746 + $0x9] sm:$0x7]
        %s2841 = scalar_lea.vmem %s7, 528
        %v2842 = vld [vmem:[%s2841] sm:$0xff]
        %v2843 = vld [vmem:[%s2841 + $0x8] sm:$0xff]
        %v2844 = vld [vmem:[%s2841 + $0x10] sm:$0xff]
        %v2845 = vld [vmem:[%s2841 + $0x18] sm:$0xff]
        %v2846 = vld [vmem:[%s2841 + $0x20] sm:$0xff]
        %v2847 = vld [vmem:[%s2841 + $0x28] sm:$0xff]
        %v2849 = vsel %vm322, %v2839, 0
        %v2852 = vsel %vm322, %v2840, 0
        %2854 = vmatprep.subr.mxu0 0.0
        %2855 = vmatpush1.msra.mxu0 %v2842
        %2856 = vmatprep.subr.mxu0 0.0
        %2857 = vmatpush1.msra.mxu0 %v2843
        %2858 = vmatprep.subr.mxu0 0.0
        %2859 = vmatpush1.msra.mxu0 %v2844
        %2860 = vmatprep.subr.mxu0 0.0
        %2861 = vmatpush1.msra.mxu0 %v2845
        %2862 = vmatprep.subr.mxu0 0.0
        %2863 = vmatpush1.msra.mxu0 %v2846
        %2864 = vmatprep.subr.mxu0 0.0
        %2865 = vmatpush1.msra.mxu0 %v2847
        %2866 = vmatprep.subr.mxu0 0.0
        %2867 = vmatpush1.msra.mxu0 0.0
        %2868 = vmatprep.subr.mxu0 0.0
        %2869 = vmatpush1.msra.mxu0 0.0
        %2870 = vmatprep.subr.mxu0 0.0
        %2871 = vmatpush1.msra.mxu0 0.0
        %2872 = vmatprep.subr.mxu0 0.0
        %2873 = vmatpush1.msra.mxu0 0.0
        %2874 = vmatprep.subr.mxu0 0.0
        %2875 = vmatpush1.msra.mxu0 0.0
        %2876 = vmatprep.subr.mxu0 0.0
        %2877 = vmatpush1.msra.mxu0 0.0
        %2878 = vmatprep.subr.mxu0 0.0
        %2879 = vmatpush1.msra.mxu0 0.0
        %2880 = vmatprep.subr.mxu0 0.0
        %2881 = vmatpush1.msra.mxu0 0.0
        %2882 = vmatprep.subr.mxu0 0.0
        %2883 = vmatpush1.msra.mxu0 0.0
        %2884 = vmatprep.subr.mxu0 0.0
        %2885 = vmatpush1.msra.mxu0 0.0
        %2886 = vmatprep.subr.mxu0 0.0
        %2887 = vmatpush1.msra.mxu0 0.0
        %2888 = vmatprep.subr.mxu0 0.0
        %2889 = vmatpush1.msra.mxu0 0.0
        %2890 = vmatprep.subr.mxu0 0.0
        %2891 = vmatpush1.msra.mxu0 0.0
        %2892 = vmatprep.subr.mxu0 0.0
        %2893 = vmatpush1.msra.mxu0 0.0
        %2894 = vmatprep.subr.mxu0 0.0
        %2895 = vmatpush1.msra.mxu0 0.0
        %2896 = vmatprep.subr.mxu0 0.0
        %2897 = vmatpush1.msra.mxu0 0.0
        %2898 = vmatprep.subr.mxu0 0.0
        %2899 = vmatpush1.msra.mxu0 0.0
        %2900 = vmatprep.subr.mxu0 0.0
        %2901 = vmatpush1.msra.mxu0 0.0
        %2902 = vmatprep.subr.mxu0 0.0
        %2903 = vmatpush1.msra.mxu0 0.0
        %2904 = vmatprep.subr.mxu0 0.0
        %2905 = vmatpush1.msra.mxu0 0.0
        %2906 = vmatprep.subr.mxu0 0.0
        %2907 = vmatpush1.msra.mxu0 0.0
        %2908 = vmatprep.subr.mxu0 0.0
        %2909 = vmatpush1.msra.mxu0 0.0
        %2910 = vmatprep.subr.mxu0 0.0
        %2911 = vmatpush1.msra.mxu0 0.0
        %2912 = vmatprep.subr.mxu0 0.0
        %2913 = vmatpush1.msra.mxu0 0.0
        %2914 = vmatprep.subr.mxu0 0.0
        %2915 = vmatpush1.msra.mxu0 0.0
        %2916 = vmatprep.subr.mxu0 0.0
        %2917 = vmatpush1.msra.mxu0 0.0
        %2918 = vmatprep.mubr.f32.mxu0 0.0
        %2919 = vmatmul.mubr.f32.gmra.mrb[0].mxu0 %v2849
        %v2920 = vpop.f32.mrb[0].mxu0
        %v2921 = vadd.f32 0.0, %v2920
        %v2922 = vpop.f32.mrb[0].mxu0
        %2923 = vmatprep.mubr.f32.mxu0 0.0
        %2924 = vmatmul.mubr.f32.gmra.mrb[0].mxu0 %v2852
        %v2925 = vpop.f32.mrb[0].mxu0
        %v2926 = vadd.f32 0.0, %v2925
        %v2927 = vpop.f32.mrb[0].mxu0
        %2928 = vdwg.mxu0
        %v2929 = vadd.f32 %v2837, %v2921
        %v2930 = vadd.f32 %v2838, %v2926
        %v2931 = vld [vmem:[%s2746 + $0x2] sm:$0xff]
        %v2932 = vld [vmem:[%s2746 + $0xa] sm:$0x7]
        %s2933 = scalar_lea.vmem %s7, 576
        %v2934 = vld [vmem:[%s2933] sm:$0xff]
        %v2935 = vld [vmem:[%s2933 + $0x8] sm:$0xff]
        %v2936 = vld [vmem:[%s2933 + $0x10] sm:$0xff]
        %v2937 = vld [vmem:[%s2933 + $0x18] sm:$0xff]
        %v2938 = vld [vmem:[%s2933 + $0x20] sm:$0xff]
        %v2939 = vld [vmem:[%s2933 + $0x28] sm:$0xff]
        %v2941 = vsel %vm322, %v2931, 0
        %v2944 = vsel %vm322, %v2932, 0
        %2946 = vmatprep.subr.mxu0 0.0
        %2947 = vmatpush1.msra.mxu0 %v2934
        %2948 = vmatprep.subr.mxu0 0.0
        %2949 = vmatpush1.msra.mxu0 %v2935
        %2950 = vmatprep.subr.mxu0 0.0
        %2951 = vmatpush1.msra.mxu0 %v2936
        %2952 = vmatprep.subr.mxu0 0.0
        %2953 = vmatpush1.msra.mxu0 %v2937
        %2954 = vmatprep.subr.mxu0 0.0
        %2955 = vmatpush1.msra.mxu0 %v2938
        %2956 = vmatprep.subr.mxu0 0.0
        %2957 = vmatpush1.msra.mxu0 %v2939
        %2958 = vmatprep.subr.mxu0 0.0
        %2959 = vmatpush1.msra.mxu0 0.0
        %2960 = vmatprep.subr.mxu0 0.0
        %2961 = vmatpush1.msra.mxu0 0.0
        %2962 = vmatprep.subr.mxu0 0.0
        %2963 = vmatpush1.msra.mxu0 0.0
        %2964 = vmatprep.subr.mxu0 0.0
        %2965 = vmatpush1.msra.mxu0 0.0
        %2966 = vmatprep.subr.mxu0 0.0
        %2967 = vmatpush1.msra.mxu0 0.0
        %2968 = vmatprep.subr.mxu0 0.0
        %2969 = vmatpush1.msra.mxu0 0.0
        %2970 = vmatprep.subr.mxu0 0.0
        %2971 = vmatpush1.msra.mxu0 0.0
        %2972 = vmatprep.subr.mxu0 0.0
        %2973 = vmatpush1.msra.mxu0 0.0
        %2974 = vmatprep.subr.mxu0 0.0
        %2975 = vmatpush1.msra.mxu0 0.0
        %2976 = vmatprep.subr.mxu0 0.0
        %2977 = vmatpush1.msra.mxu0 0.0
        %2978 = vmatprep.subr.mxu0 0.0
        %2979 = vmatpush1.msra.mxu0 0.0
        %2980 = vmatprep.subr.mxu0 0.0
        %2981 = vmatpush1.msra.mxu0 0.0
        %2982 = vmatprep.subr.mxu0 0.0
        %2983 = vmatpush1.msra.mxu0 0.0
        %2984 = vmatprep.subr.mxu0 0.0
        %2985 = vmatpush1.msra.mxu0 0.0
        %2986 = vmatprep.subr.mxu0 0.0
        %2987 = vmatpush1.msra.mxu0 0.0
        %2988 = vmatprep.subr.mxu0 0.0
        %2989 = vmatpush1.msra.mxu0 0.0
        %2990 = vmatprep.subr.mxu0 0.0
        %2991 = vmatpush1.msra.mxu0 0.0
        %2992 = vmatprep.subr.mxu0 0.0
        %2993 = vmatpush1.msra.mxu0 0.0
        %2994 = vmatprep.subr.mxu0 0.0
        %2995 = vmatpush1.msra.mxu0 0.0
        %2996 = vmatprep.subr.mxu0 0.0
        %2997 = vmatpush1.msra.mxu0 0.0
        %2998 = vmatprep.subr.mxu0 0.0
        %2999 = vmatpush1.msra.mxu0 0.0
        %3000 = vmatprep.subr.mxu0 0.0
        %3001 = vmatpush1.msra.mxu0 0.0
        %3002 = vmatprep.subr.mxu0 0.0
        %3003 = vmatpush1.msra.mxu0 0.0
        %3004 = vmatprep.subr.mxu0 0.0
        %3005 = vmatpush1.msra.mxu0 0.0
        %3006 = vmatprep.subr.mxu0 0.0
        %3007 = vmatpush1.msra.mxu0 0.0
        %3008 = vmatprep.subr.mxu0 0.0
        %3009 = vmatpush1.msra.mxu0 0.0
        %3010 = vmatprep.mubr.f32.mxu0 0.0
        %3011 = vmatmul.mubr.f32.gmra.mrb[0].mxu0 %v2941
        %v3012 = vpop.f32.mrb[0].mxu0
        %v3013 = vadd.f32 0.0, %v3012
        %v3014 = vpop.f32.mrb[0].mxu0
        %3015 = vmatprep.mubr.f32.mxu0 0.0
        %3016 = vmatmul.mubr.f32.gmra.mrb[0].mxu0 %v2944
        %v3017 = vpop.f32.mrb[0].mxu0
        %v3018 = vadd.f32 0.0, %v3017
        %v3019 = vpop.f32.mrb[0].mxu0
        %3020 = vdwg.mxu0
        %v3021 = vadd.f32 %v2929, %v3013
        %v3022 = vadd.f32 %v2930, %v3018
        %v3023 = vld [vmem:[%s2746 + $0x3] sm:$0xff]
        %v3024 = vld [vmem:[%s2746 + $0xb] sm:$0x7]
        %s3025 = scalar_lea.vmem %s7, 624
        %v3026 = vld [vmem:[%s3025] sm:$0xff]
        %v3027 = vld [vmem:[%s3025 + $0x8] sm:$0xff]
        %v3028 = vld [vmem:[%s3025 + $0x10] sm:$0xff]
        %v3029 = vld [vmem:[%s3025 + $0x18] sm:$0xff]
        %v3030 = vld [vmem:[%s3025 + $0x20] sm:$0xff]
        %v3031 = vld [vmem:[%s3025 + $0x28] sm:$0xff]
        %v3033 = vsel %vm322, %v3023, 0
        %v3036 = vsel %vm322, %v3024, 0
        %3038 = vmatprep.subr.mxu0 0.0
        %3039 = vmatpush1.msra.mxu0 %v3026
        %3040 = vmatprep.subr.mxu0 0.0
        %3041 = vmatpush1.msra.mxu0 %v3027
        %3042 = vmatprep.subr.mxu0 0.0
        %3043 = vmatpush1.msra.mxu0 %v3028
        %3044 = vmatprep.subr.mxu0 0.0
        %3045 = vmatpush1.msra.mxu0 %v3029
        %3046 = vmatprep.subr.mxu0 0.0
        %3047 = vmatpush1.msra.mxu0 %v3030
        %3048 = vmatprep.subr.mxu0 0.0
        %3049 = vmatpush1.msra.mxu0 %v3031
        %3050 = vmatprep.subr.mxu0 0.0
        %3051 = vmatpush1.msra.mxu0 0.0
        %3052 = vmatprep.subr.mxu0 0.0
        %3053 = vmatpush1.msra.mxu0 0.0
        %3054 = vmatprep.subr.mxu0 0.0
        %3055 = vmatpush1.msra.mxu0 0.0
        %3056 = vmatprep.subr.mxu0 0.0
        %3057 = vmatpush1.msra.mxu0 0.0
        %3058 = vmatprep.subr.mxu0 0.0
        %3059 = vmatpush1.msra.mxu0 0.0
        %3060 = vmatprep.subr.mxu0 0.0
        %3061 = vmatpush1.msra.mxu0 0.0
        %3062 = vmatprep.subr.mxu0 0.0
        %3063 = vmatpush1.msra.mxu0 0.0
        %3064 = vmatprep.subr.mxu0 0.0
        %3065 = vmatpush1.msra.mxu0 0.0
        %3066 = vmatprep.subr.mxu0 0.0
        %3067 = vmatpush1.msra.mxu0 0.0
        %3068 = vmatprep.subr.mxu0 0.0
        %3069 = vmatpush1.msra.mxu0 0.0
        %3070 = vmatprep.subr.mxu0 0.0
        %3071 = vmatpush1.msra.mxu0 0.0
        %3072 = vmatprep.subr.mxu0 0.0
        %3073 = vmatpush1.msra.mxu0 0.0
        %3074 = vmatprep.subr.mxu0 0.0
        %3075 = vmatpush1.msra.mxu0 0.0
        %3076 = vmatprep.subr.mxu0 0.0
        %3077 = vmatpush1.msra.mxu0 0.0
        %3078 = vmatprep.subr.mxu0 0.0
        %3079 = vmatpush1.msra.mxu0 0.0
        %3080 = vmatprep.subr.mxu0 0.0
        %3081 = vmatpush1.msra.mxu0 0.0
        %3082 = vmatprep.subr.mxu0 0.0
        %3083 = vmatpush1.msra.mxu0 0.0
        %3084 = vmatprep.subr.mxu0 0.0
        %3085 = vmatpush1.msra.mxu0 0.0
        %3086 = vmatprep.subr.mxu0 0.0
        %3087 = vmatpush1.msra.mxu0 0.0
        %3088 = vmatprep.subr.mxu0 0.0
        %3089 = vmatpush1.msra.mxu0 0.0
        %3090 = vmatprep.subr.mxu0 0.0
        %3091 = vmatpush1.msra.mxu0 0.0
        %3092 = vmatprep.subr.mxu0 0.0
        %3093 = vmatpush1.msra.mxu0 0.0
        %3094 = vmatprep.subr.mxu0 0.0
        %3095 = vmatpush1.msra.mxu0 0.0
        %3096 = vmatprep.subr.mxu0 0.0
        %3097 = vmatpush1.msra.mxu0 0.0
        %3098 = vmatprep.subr.mxu0 0.0
        %3099 = vmatpush1.msra.mxu0 0.0
        %3100 = vmatprep.subr.mxu0 0.0
        %3101 = vmatpush1.msra.mxu0 0.0
        %3102 = vmatprep.mubr.f32.mxu0 0.0
        %3103 = vmatmul.mubr.f32.gmra.mrb[0].mxu0 %v3033
        %v3104 = vpop.f32.mrb[0].mxu0
        %v3105 = vadd.f32 0.0, %v3104
        %v3106 = vpop.f32.mrb[0].mxu0
        %3107 = vmatprep.mubr.f32.mxu0 0.0
        %3108 = vmatmul.mubr.f32.gmra.mrb[0].mxu0 %v3036
        %v3109 = vpop.f32.mrb[0].mxu0
        %v3110 = vadd.f32 0.0, %v3109
        %v3111 = vpop.f32.mrb[0].mxu0
        %3112 = vdwg.mxu0
        %v3113 = vadd.f32 %v3021, %v3105
        %v3114 = vadd.f32 %v3022, %v3110
        %v3115 = vld [vmem:[%s2746 + $0x4] sm:$0xff]
        %v3116 = vld [vmem:[%s2746 + $0xc] sm:$0x7]
        %s3117 = scalar_lea.vmem %s7, 672
        %v3118 = vld [vmem:[%s3117] sm:$0xff]
        %v3119 = vld [vmem:[%s3117 + $0x8] sm:$0xff]
        %v3120 = vld [vmem:[%s3117 + $0x10] sm:$0xff]
        %v3121 = vld [vmem:[%s3117 + $0x18] sm:$0xff]
        %v3122 = vld [vmem:[%s3117 + $0x20] sm:$0xff]
        %v3123 = vld [vmem:[%s3117 + $0x28] sm:$0xff]
        %v3125 = vsel %vm322, %v3115, 0
        %v3128 = vsel %vm322, %v3116, 0
        %3130 = vmatprep.subr.mxu0 0.0
        %3131 = vmatpush1.msra.mxu0 %v3118
        %3132 = vmatprep.subr.mxu0 0.0
        %3133 = vmatpush1.msra.mxu0 %v3119
        %3134 = vmatprep.subr.mxu0 0.0
        %3135 = vmatpush1.msra.mxu0 %v3120
        %3136 = vmatprep.subr.mxu0 0.0
        %3137 = vmatpush1.msra.mxu0 %v3121
        %3138 = vmatprep.subr.mxu0 0.0
        %3139 = vmatpush1.msra.mxu0 %v3122
        %3140 = vmatprep.subr.mxu0 0.0
        %3141 = vmatpush1.msra.mxu0 %v3123
        %3142 = vmatprep.subr.mxu0 0.0
        %3143 = vmatpush1.msra.mxu0 0.0
        %3144 = vmatprep.subr.mxu0 0.0
        %3145 = vmatpush1.msra.mxu0 0.0
        %3146 = vmatprep.subr.mxu0 0.0
        %3147 = vmatpush1.msra.mxu0 0.0
        %3148 = vmatprep.subr.mxu0 0.0
        %3149 = vmatpush1.msra.mxu0 0.0
        %3150 = vmatprep.subr.mxu0 0.0
        %3151 = vmatpush1.msra.mxu0 0.0
        %3152 = vmatprep.subr.mxu0 0.0
        %3153 = vmatpush1.msra.mxu0 0.0
        %3154 = vmatprep.subr.mxu0 0.0
        %3155 = vmatpush1.msra.mxu0 0.0
        %3156 = vmatprep.subr.mxu0 0.0
        %3157 = vmatpush1.msra.mxu0 0.0
        %3158 = vmatprep.subr.mxu0 0.0
        %3159 = vmatpush1.msra.mxu0 0.0
        %3160 = vmatprep.subr.mxu0 0.0
        %3161 = vmatpush1.msra.mxu0 0.0
        %3162 = vmatprep.subr.mxu0 0.0
        %3163 = vmatpush1.msra.mxu0 0.0
        %3164 = vmatprep.subr.mxu0 0.0
        %3165 = vmatpush1.msra.mxu0 0.0
        %3166 = vmatprep.subr.mxu0 0.0
        %3167 = vmatpush1.msra.mxu0 0.0
        %3168 = vmatprep.subr.mxu0 0.0
        %3169 = vmatpush1.msra.mxu0 0.0
        %3170 = vmatprep.subr.mxu0 0.0
        %3171 = vmatpush1.msra.mxu0 0.0
        %3172 = vmatprep.subr.mxu0 0.0
        %3173 = vmatpush1.msra.mxu0 0.0
        %3174 = vmatprep.subr.mxu0 0.0
        %3175 = vmatpush1.msra.mxu0 0.0
        %3176 = vmatprep.subr.mxu0 0.0
        %3177 = vmatpush1.msra.mxu0 0.0
        %3178 = vmatprep.subr.mxu0 0.0
        %3179 = vmatpush1.msra.mxu0 0.0
        %3180 = vmatprep.subr.mxu0 0.0
        %3181 = vmatpush1.msra.mxu0 0.0
        %3182 = vmatprep.subr.mxu0 0.0
        %3183 = vmatpush1.msra.mxu0 0.0
        %3184 = vmatprep.subr.mxu0 0.0
        %3185 = vmatpush1.msra.mxu0 0.0
        %3186 = vmatprep.subr.mxu0 0.0
        %3187 = vmatpush1.msra.mxu0 0.0
        %3188 = vmatprep.subr.mxu0 0.0
        %3189 = vmatpush1.msra.mxu0 0.0
        %3190 = vmatprep.subr.mxu0 0.0
        %3191 = vmatpush1.msra.mxu0 0.0
        %3192 = vmatprep.subr.mxu0 0.0
        %3193 = vmatpush1.msra.mxu0 0.0
        %3194 = vmatprep.mubr.f32.mxu0 0.0
        %3195 = vmatmul.mubr.f32.gmra.mrb[0].mxu0 %v3125
        %v3196 = vpop.f32.mrb[0].mxu0
        %v3197 = vadd.f32 0.0, %v3196
        %v3198 = vpop.f32.mrb[0].mxu0
        %3199 = vmatprep.mubr.f32.mxu0 0.0
        %3200 = vmatmul.mubr.f32.gmra.mrb[0].mxu0 %v3128
        %v3201 = vpop.f32.mrb[0].mxu0
        %v3202 = vadd.f32 0.0, %v3201
        %v3203 = vpop.f32.mrb[0].mxu0
        %3204 = vdwg.mxu0
        %v3205 = vadd.f32 %v3113, %v3197
        %v3206 = vadd.f32 %v3114, %v3202
        %s3207 = sadd.s32 %s1819, 3
        %s3208 = smul.u32 %s3207, 16
        %s3209 = scalar_lea.vmem [#allocation3], %s3208
        %v3210 = vld [vmem:[%s3209] sm:$0xff]
        %v3211 = vld [vmem:[%s3209 + $0x8] sm:$0x7]
        %s3212 = scalar_lea.vmem %s7, 720
        %v3213 = vld [vmem:[%s3212] sm:$0xff]
        %v3214 = vld [vmem:[%s3212 + $0x8] sm:$0xff]
        %v3215 = vld [vmem:[%s3212 + $0x10] sm:$0xff]
        %v3216 = vld [vmem:[%s3212 + $0x18] sm:$0xff]
        %v3217 = vld [vmem:[%s3212 + $0x20] sm:$0xff]
        %v3218 = vld [vmem:[%s3212 + $0x28] sm:$0xff]
        %v3220 = vsel %vm322, %v3210, 0
        %v3223 = vsel %vm322, %v3211, 0
        %3225 = vmatprep.subr.mxu0 0.0
        %3226 = vmatpush1.msra.mxu0 %v3213
        %3227 = vmatprep.subr.mxu0 0.0
        %3228 = vmatpush1.msra.mxu0 %v3214
        %3229 = vmatprep.subr.mxu0 0.0
        %3230 = vmatpush1.msra.mxu0 %v3215
        %3231 = vmatprep.subr.mxu0 0.0
        %3232 = vmatpush1.msra.mxu0 %v3216
        %3233 = vmatprep.subr.mxu0 0.0
        %3234 = vmatpush1.msra.mxu0 %v3217
        %3235 = vmatprep.subr.mxu0 0.0
        %3236 = vmatpush1.msra.mxu0 %v3218
        %3237 = vmatprep.subr.mxu0 0.0
        %3238 = vmatpush1.msra.mxu0 0.0
        %3239 = vmatprep.subr.mxu0 0.0
        %3240 = vmatpush1.msra.mxu0 0.0
        %3241 = vmatprep.subr.mxu0 0.0
        %3242 = vmatpush1.msra.mxu0 0.0
        %3243 = vmatprep.subr.mxu0 0.0
        %3244 = vmatpush1.msra.mxu0 0.0
        %3245 = vmatprep.subr.mxu0 0.0
        %3246 = vmatpush1.msra.mxu0 0.0
        %3247 = vmatprep.subr.mxu0 0.0
        %3248 = vmatpush1.msra.mxu0 0.0
        %3249 = vmatprep.subr.mxu0 0.0
        %3250 = vmatpush1.msra.mxu0 0.0
        %3251 = vmatprep.subr.mxu0 0.0
        %3252 = vmatpush1.msra.mxu0 0.0
        %3253 = vmatprep.subr.mxu0 0.0
        %3254 = vmatpush1.msra.mxu0 0.0
        %3255 = vmatprep.subr.mxu0 0.0
        %3256 = vmatpush1.msra.mxu0 0.0
        %3257 = vmatprep.subr.mxu0 0.0
        %3258 = vmatpush1.msra.mxu0 0.0
        %3259 = vmatprep.subr.mxu0 0.0
        %3260 = vmatpush1.msra.mxu0 0.0
        %3261 = vmatprep.subr.mxu0 0.0
        %3262 = vmatpush1.msra.mxu0 0.0
        %3263 = vmatprep.subr.mxu0 0.0
        %3264 = vmatpush1.msra.mxu0 0.0
        %3265 = vmatprep.subr.mxu0 0.0
        %3266 = vmatpush1.msra.mxu0 0.0
        %3267 = vmatprep.subr.mxu0 0.0
        %3268 = vmatpush1.msra.mxu0 0.0
        %3269 = vmatprep.subr.mxu0 0.0
        %3270 = vmatpush1.msra.mxu0 0.0
        %3271 = vmatprep.subr.mxu0 0.0
        %3272 = vmatpush1.msra.mxu0 0.0
        %3273 = vmatprep.subr.mxu0 0.0
        %3274 = vmatpush1.msra.mxu0 0.0
        %3275 = vmatprep.subr.mxu0 0.0
        %3276 = vmatpush1.msra.mxu0 0.0
        %3277 = vmatprep.subr.mxu0 0.0
        %3278 = vmatpush1.msra.mxu0 0.0
        %3279 = vmatprep.subr.mxu0 0.0
        %3280 = vmatpush1.msra.mxu0 0.0
        %3281 = vmatprep.subr.mxu0 0.0
        %3282 = vmatpush1.msra.mxu0 0.0
        %3283 = vmatprep.subr.mxu0 0.0
        %3284 = vmatpush1.msra.mxu0 0.0
        %3285 = vmatprep.subr.mxu0 0.0
        %3286 = vmatpush1.msra.mxu0 0.0
        %3287 = vmatprep.subr.mxu0 0.0
        %3288 = vmatpush1.msra.mxu0 0.0
        %3289 = vmatprep.mubr.f32.mxu0 0.0
        %3290 = vmatmul.mubr.f32.gmra.mrb[0].mxu0 %v3220
        %v3291 = vpop.f32.mrb[0].mxu0
        %v3292 = vadd.f32 0.0, %v3291
        %v3293 = vpop.f32.mrb[0].mxu0
        %3294 = vmatprep.mubr.f32.mxu0 0.0
        %3295 = vmatmul.mubr.f32.gmra.mrb[0].mxu0 %v3223
        %v3296 = vpop.f32.mrb[0].mxu0
        %v3297 = vadd.f32 0.0, %v3296
        %v3298 = vpop.f32.mrb[0].mxu0
        %3299 = vdwg.mxu0
        %v3300 = vadd.f32 %v3205, %v3292
        %v3301 = vadd.f32 %v3206, %v3297
        %v3302 = vld [vmem:[%s3209 + $0x1] sm:$0xff]
        %v3303 = vld [vmem:[%s3209 + $0x9] sm:$0x7]
        %s3304 = scalar_lea.vmem %s7, 768
        %v3305 = vld [vmem:[%s3304] sm:$0xff]
        %v3306 = vld [vmem:[%s3304 + $0x8] sm:$0xff]
        %v3307 = vld [vmem:[%s3304 + $0x10] sm:$0xff]
        %v3308 = vld [vmem:[%s3304 + $0x18] sm:$0xff]
        %v3309 = vld [vmem:[%s3304 + $0x20] sm:$0xff]
        %v3310 = vld [vmem:[%s3304 + $0x28] sm:$0xff]
        %v3312 = vsel %vm322, %v3302, 0
        %v3315 = vsel %vm322, %v3303, 0
        %3317 = vmatprep.subr.mxu0 0.0
        %3318 = vmatpush1.msra.mxu0 %v3305
        %3319 = vmatprep.subr.mxu0 0.0
        %3320 = vmatpush1.msra.mxu0 %v3306
        %3321 = vmatprep.subr.mxu0 0.0
        %3322 = vmatpush1.msra.mxu0 %v3307
        %3323 = vmatprep.subr.mxu0 0.0
        %3324 = vmatpush1.msra.mxu0 %v3308
        %3325 = vmatprep.subr.mxu0 0.0
        %3326 = vmatpush1.msra.mxu0 %v3309
        %3327 = vmatprep.subr.mxu0 0.0
        %3328 = vmatpush1.msra.mxu0 %v3310
        %3329 = vmatprep.subr.mxu0 0.0
        %3330 = vmatpush1.msra.mxu0 0.0
        %3331 = vmatprep.subr.mxu0 0.0
        %3332 = vmatpush1.msra.mxu0 0.0
        %3333 = vmatprep.subr.mxu0 0.0
        %3334 = vmatpush1.msra.mxu0 0.0
        %3335 = vmatprep.subr.mxu0 0.0
        %3336 = vmatpush1.msra.mxu0 0.0
        %3337 = vmatprep.subr.mxu0 0.0
        %3338 = vmatpush1.msra.mxu0 0.0
        %3339 = vmatprep.subr.mxu0 0.0
        %3340 = vmatpush1.msra.mxu0 0.0
        %3341 = vmatprep.subr.mxu0 0.0
        %3342 = vmatpush1.msra.mxu0 0.0
        %3343 = vmatprep.subr.mxu0 0.0
        %3344 = vmatpush1.msra.mxu0 0.0
        %3345 = vmatprep.subr.mxu0 0.0
        %3346 = vmatpush1.msra.mxu0 0.0
        %3347 = vmatprep.subr.mxu0 0.0
        %3348 = vmatpush1.msra.mxu0 0.0
        %3349 = vmatprep.subr.mxu0 0.0
        %3350 = vmatpush1.msra.mxu0 0.0
        %3351 = vmatprep.subr.mxu0 0.0
        %3352 = vmatpush1.msra.mxu0 0.0
        %3353 = vmatprep.subr.mxu0 0.0
        %3354 = vmatpush1.msra.mxu0 0.0
        %3355 = vmatprep.subr.mxu0 0.0
        %3356 = vmatpush1.msra.mxu0 0.0
        %3357 = vmatprep.subr.mxu0 0.0
        %3358 = vmatpush1.msra.mxu0 0.0
        %3359 = vmatprep.subr.mxu0 0.0
        %3360 = vmatpush1.msra.mxu0 0.0
        %3361 = vmatprep.subr.mxu0 0.0
        %3362 = vmatpush1.msra.mxu0 0.0
        %3363 = vmatprep.subr.mxu0 0.0
        %3364 = vmatpush1.msra.mxu0 0.0
        %3365 = vmatprep.subr.mxu0 0.0
        %3366 = vmatpush1.msra.mxu0 0.0
        %3367 = vmatprep.subr.mxu0 0.0
        %3368 = vmatpush1.msra.mxu0 0.0
        %3369 = vmatprep.subr.mxu0 0.0
        %3370 = vmatpush1.msra.mxu0 0.0
        %3371 = vmatprep.subr.mxu0 0.0
        %3372 = vmatpush1.msra.mxu0 0.0
        %3373 = vmatprep.subr.mxu0 0.0
        %3374 = vmatpush1.msra.mxu0 0.0
        %3375 = vmatprep.subr.mxu0 0.0
        %3376 = vmatpush1.msra.mxu0 0.0
        %3377 = vmatprep.subr.mxu0 0.0
        %3378 = vmatpush1.msra.mxu0 0.0
        %3379 = vmatprep.subr.mxu0 0.0
        %3380 = vmatpush1.msra.mxu0 0.0
        %3381 = vmatprep.mubr.f32.mxu0 0.0
        %3382 = vmatmul.mubr.f32.gmra.mrb[0].mxu0 %v3312
        %v3383 = vpop.f32.mrb[0].mxu0
        %v3384 = vadd.f32 0.0, %v3383
        %v3385 = vpop.f32.mrb[0].mxu0
        %3386 = vmatprep.mubr.f32.mxu0 0.0
        %3387 = vmatmul.mubr.f32.gmra.mrb[0].mxu0 %v3315
        %v3388 = vpop.f32.mrb[0].mxu0
        %v3389 = vadd.f32 0.0, %v3388
        %v3390 = vpop.f32.mrb[0].mxu0
        %3391 = vdwg.mxu0
        %v3392 = vadd.f32 %v3300, %v3384
        %v3393 = vadd.f32 %v3301, %v3389
        %v3394 = vld [vmem:[%s3209 + $0x2] sm:$0xff]
        %v3395 = vld [vmem:[%s3209 + $0xa] sm:$0x7]
        %s3396 = scalar_lea.vmem %s7, 816
        %v3397 = vld [vmem:[%s3396] sm:$0xff]
        %v3398 = vld [vmem:[%s3396 + $0x8] sm:$0xff]
        %v3399 = vld [vmem:[%s3396 + $0x10] sm:$0xff]
        %v3400 = vld [vmem:[%s3396 + $0x18] sm:$0xff]
        %v3401 = vld [vmem:[%s3396 + $0x20] sm:$0xff]
        %v3402 = vld [vmem:[%s3396 + $0x28] sm:$0xff]
        %v3404 = vsel %vm322, %v3394, 0
        %v3407 = vsel %vm322, %v3395, 0
        %3409 = vmatprep.subr.mxu0 0.0
        %3410 = vmatpush1.msra.mxu0 %v3397
        %3411 = vmatprep.subr.mxu0 0.0
        %3412 = vmatpush1.msra.mxu0 %v3398
        %3413 = vmatprep.subr.mxu0 0.0
        %3414 = vmatpush1.msra.mxu0 %v3399
        %3415 = vmatprep.subr.mxu0 0.0
        %3416 = vmatpush1.msra.mxu0 %v3400
        %3417 = vmatprep.subr.mxu0 0.0
        %3418 = vmatpush1.msra.mxu0 %v3401
        %3419 = vmatprep.subr.mxu0 0.0
        %3420 = vmatpush1.msra.mxu0 %v3402
        %3421 = vmatprep.subr.mxu0 0.0
        %3422 = vmatpush1.msra.mxu0 0.0
        %3423 = vmatprep.subr.mxu0 0.0
        %3424 = vmatpush1.msra.mxu0 0.0
        %3425 = vmatprep.subr.mxu0 0.0
        %3426 = vmatpush1.msra.mxu0 0.0
        %3427 = vmatprep.subr.mxu0 0.0
        %3428 = vmatpush1.msra.mxu0 0.0
        %3429 = vmatprep.subr.mxu0 0.0
        %3430 = vmatpush1.msra.mxu0 0.0
        %3431 = vmatprep.subr.mxu0 0.0
        %3432 = vmatpush1.msra.mxu0 0.0
        %3433 = vmatprep.subr.mxu0 0.0
        %3434 = vmatpush1.msra.mxu0 0.0
        %3435 = vmatprep.subr.mxu0 0.0
        %3436 = vmatpush1.msra.mxu0 0.0
        %3437 = vmatprep.subr.mxu0 0.0
        %3438 = vmatpush1.msra.mxu0 0.0
        %3439 = vmatprep.subr.mxu0 0.0
        %3440 = vmatpush1.msra.mxu0 0.0
        %3441 = vmatprep.subr.mxu0 0.0
        %3442 = vmatpush1.msra.mxu0 0.0
        %3443 = vmatprep.subr.mxu0 0.0
        %3444 = vmatpush1.msra.mxu0 0.0
        %3445 = vmatprep.subr.mxu0 0.0
        %3446 = vmatpush1.msra.mxu0 0.0
        %3447 = vmatprep.subr.mxu0 0.0
        %3448 = vmatpush1.msra.mxu0 0.0
        %3449 = vmatprep.subr.mxu0 0.0
        %3450 = vmatpush1.msra.mxu0 0.0
        %3451 = vmatprep.subr.mxu0 0.0
        %3452 = vmatpush1.msra.mxu0 0.0
        %3453 = vmatprep.subr.mxu0 0.0
        %3454 = vmatpush1.msra.mxu0 0.0
        %3455 = vmatprep.subr.mxu0 0.0
        %3456 = vmatpush1.msra.mxu0 0.0
        %3457 = vmatprep.subr.mxu0 0.0
        %3458 = vmatpush1.msra.mxu0 0.0
        %3459 = vmatprep.subr.mxu0 0.0
        %3460 = vmatpush1.msra.mxu0 0.0
        %3461 = vmatprep.subr.mxu0 0.0
        %3462 = vmatpush1.msra.mxu0 0.0
        %3463 = vmatprep.subr.mxu0 0.0
        %3464 = vmatpush1.msra.mxu0 0.0
        %3465 = vmatprep.subr.mxu0 0.0
        %3466 = vmatpush1.msra.mxu0 0.0
        %3467 = vmatprep.subr.mxu0 0.0
        %3468 = vmatpush1.msra.mxu0 0.0
        %3469 = vmatprep.subr.mxu0 0.0
        %3470 = vmatpush1.msra.mxu0 0.0
        %3471 = vmatprep.subr.mxu0 0.0
        %3472 = vmatpush1.msra.mxu0 0.0
        %3473 = vmatprep.mubr.f32.mxu0 0.0
        %3474 = vmatmul.mubr.f32.gmra.mrb[0].mxu0 %v3404
        %v3475 = vpop.f32.mrb[0].mxu0
        %v3476 = vadd.f32 0.0, %v3475
        %v3477 = vpop.f32.mrb[0].mxu0
        %3478 = vmatprep.mubr.f32.mxu0 0.0
        %3479 = vmatmul.mubr.f32.gmra.mrb[0].mxu0 %v3407
        %v3480 = vpop.f32.mrb[0].mxu0
        %v3481 = vadd.f32 0.0, %v3480
        %v3482 = vpop.f32.mrb[0].mxu0
        %3483 = vdwg.mxu0
        %v3484 = vadd.f32 %v3392, %v3476
        %v3485 = vadd.f32 %v3393, %v3481
        %v3486 = vld [vmem:[%s3209 + $0x3] sm:$0xff]
        %v3487 = vld [vmem:[%s3209 + $0xb] sm:$0x7]
        %s3488 = scalar_lea.vmem %s7, 864
        %v3489 = vld [vmem:[%s3488] sm:$0xff]
        %v3490 = vld [vmem:[%s3488 + $0x8] sm:$0xff]
        %v3491 = vld [vmem:[%s3488 + $0x10] sm:$0xff]
        %v3492 = vld [vmem:[%s3488 + $0x18] sm:$0xff]
        %v3493 = vld [vmem:[%s3488 + $0x20] sm:$0xff]
        %v3494 = vld [vmem:[%s3488 + $0x28] sm:$0xff]
        %v3496 = vsel %vm322, %v3486, 0
        %v3499 = vsel %vm322, %v3487, 0
        %3501 = vmatprep.subr.mxu0 0.0
        %3502 = vmatpush1.msra.mxu0 %v3489
        %3503 = vmatprep.subr.mxu0 0.0
        %3504 = vmatpush1.msra.mxu0 %v3490
        %3505 = vmatprep.subr.mxu0 0.0
        %3506 = vmatpush1.msra.mxu0 %v3491
        %3507 = vmatprep.subr.mxu0 0.0
        %3508 = vmatpush1.msra.mxu0 %v3492
        %3509 = vmatprep.subr.mxu0 0.0
        %3510 = vmatpush1.msra.mxu0 %v3493
        %3511 = vmatprep.subr.mxu0 0.0
        %3512 = vmatpush1.msra.mxu0 %v3494
        %3513 = vmatprep.subr.mxu0 0.0
        %3514 = vmatpush1.msra.mxu0 0.0
        %3515 = vmatprep.subr.mxu0 0.0
        %3516 = vmatpush1.msra.mxu0 0.0
        %3517 = vmatprep.subr.mxu0 0.0
        %3518 = vmatpush1.msra.mxu0 0.0
        %3519 = vmatprep.subr.mxu0 0.0
        %3520 = vmatpush1.msra.mxu0 0.0
        %3521 = vmatprep.subr.mxu0 0.0
        %3522 = vmatpush1.msra.mxu0 0.0
        %3523 = vmatprep.subr.mxu0 0.0
        %3524 = vmatpush1.msra.mxu0 0.0
        %3525 = vmatprep.subr.mxu0 0.0
        %3526 = vmatpush1.msra.mxu0 0.0
        %3527 = vmatprep.subr.mxu0 0.0
        %3528 = vmatpush1.msra.mxu0 0.0
        %3529 = vmatprep.subr.mxu0 0.0
        %3530 = vmatpush1.msra.mxu0 0.0
        %3531 = vmatprep.subr.mxu0 0.0
        %3532 = vmatpush1.msra.mxu0 0.0
        %3533 = vmatprep.subr.mxu0 0.0
        %3534 = vmatpush1.msra.mxu0 0.0
        %3535 = vmatprep.subr.mxu0 0.0
        %3536 = vmatpush1.msra.mxu0 0.0
        %3537 = vmatprep.subr.mxu0 0.0
        %3538 = vmatpush1.msra.mxu0 0.0
        %3539 = vmatprep.subr.mxu0 0.0
        %3540 = vmatpush1.msra.mxu0 0.0
        %3541 = vmatprep.subr.mxu0 0.0
        %3542 = vmatpush1.msra.mxu0 0.0
        %3543 = vmatprep.subr.mxu0 0.0
        %3544 = vmatpush1.msra.mxu0 0.0
        %3545 = vmatprep.subr.mxu0 0.0
        %3546 = vmatpush1.msra.mxu0 0.0
        %3547 = vmatprep.subr.mxu0 0.0
        %3548 = vmatpush1.msra.mxu0 0.0
        %3549 = vmatprep.subr.mxu0 0.0
        %3550 = vmatpush1.msra.mxu0 0.0
        %3551 = vmatprep.subr.mxu0 0.0
        %3552 = vmatpush1.msra.mxu0 0.0
        %3553 = vmatprep.subr.mxu0 0.0
        %3554 = vmatpush1.msra.mxu0 0.0
        %3555 = vmatprep.subr.mxu0 0.0
        %3556 = vmatpush1.msra.mxu0 0.0
        %3557 = vmatprep.subr.mxu0 0.0
        %3558 = vmatpush1.msra.mxu0 0.0
        %3559 = vmatprep.subr.mxu0 0.0
        %3560 = vmatpush1.msra.mxu0 0.0
        %3561 = vmatprep.subr.mxu0 0.0
        %3562 = vmatpush1.msra.mxu0 0.0
        %3563 = vmatprep.subr.mxu0 0.0
        %3564 = vmatpush1.msra.mxu0 0.0
        %3565 = vmatprep.mubr.f32.mxu0 0.0
        %3566 = vmatmul.mubr.f32.gmra.mrb[0].mxu0 %v3496
        %v3567 = vpop.f32.mrb[0].mxu0
        %v3568 = vadd.f32 0.0, %v3567
        %v3569 = vpop.f32.mrb[0].mxu0
        %3570 = vmatprep.mubr.f32.mxu0 0.0
        %3571 = vmatmul.mubr.f32.gmra.mrb[0].mxu0 %v3499
        %v3572 = vpop.f32.mrb[0].mxu0
        %v3573 = vadd.f32 0.0, %v3572
        %v3574 = vpop.f32.mrb[0].mxu0
        %3575 = vdwg.mxu0
        %v3576 = vadd.f32 %v3484, %v3568
        %v3577 = vadd.f32 %v3485, %v3573
        %v3578 = vld [vmem:[%s3209 + $0x4] sm:$0xff]
        %v3579 = vld [vmem:[%s3209 + $0xc] sm:$0x7]
        %s3580 = scalar_lea.vmem %s7, 912
        %v3581 = vld [vmem:[%s3580] sm:$0xff]
        %v3582 = vld [vmem:[%s3580 + $0x8] sm:$0xff]
        %v3583 = vld [vmem:[%s3580 + $0x10] sm:$0xff]
        %v3584 = vld [vmem:[%s3580 + $0x18] sm:$0xff]
        %v3585 = vld [vmem:[%s3580 + $0x20] sm:$0xff]
        %v3586 = vld [vmem:[%s3580 + $0x28] sm:$0xff]
        %v3588 = vsel %vm322, %v3578, 0
        %v3591 = vsel %vm322, %v3579, 0
        %3593 = vmatprep.subr.mxu0 0.0
        %3594 = vmatpush1.msra.mxu0 %v3581
        %3595 = vmatprep.subr.mxu0 0.0
        %3596 = vmatpush1.msra.mxu0 %v3582
        %3597 = vmatprep.subr.mxu0 0.0
        %3598 = vmatpush1.msra.mxu0 %v3583
        %3599 = vmatprep.subr.mxu0 0.0
        %3600 = vmatpush1.msra.mxu0 %v3584
        %3601 = vmatprep.subr.mxu0 0.0
        %3602 = vmatpush1.msra.mxu0 %v3585
        %3603 = vmatprep.subr.mxu0 0.0
        %3604 = vmatpush1.msra.mxu0 %v3586
        %3605 = vmatprep.subr.mxu0 0.0
        %3606 = vmatpush1.msra.mxu0 0.0
        %3607 = vmatprep.subr.mxu0 0.0
        %3608 = vmatpush1.msra.mxu0 0.0
        %3609 = vmatprep.subr.mxu0 0.0
        %3610 = vmatpush1.msra.mxu0 0.0
        %3611 = vmatprep.subr.mxu0 0.0
        %3612 = vmatpush1.msra.mxu0 0.0
        %3613 = vmatprep.subr.mxu0 0.0
        %3614 = vmatpush1.msra.mxu0 0.0
        %3615 = vmatprep.subr.mxu0 0.0
        %3616 = vmatpush1.msra.mxu0 0.0
        %3617 = vmatprep.subr.mxu0 0.0
        %3618 = vmatpush1.msra.mxu0 0.0
        %3619 = vmatprep.subr.mxu0 0.0
        %3620 = vmatpush1.msra.mxu0 0.0
        %3621 = vmatprep.subr.mxu0 0.0
        %3622 = vmatpush1.msra.mxu0 0.0
        %3623 = vmatprep.subr.mxu0 0.0
        %3624 = vmatpush1.msra.mxu0 0.0
        %3625 = vmatprep.subr.mxu0 0.0
        %3626 = vmatpush1.msra.mxu0 0.0
        %3627 = vmatprep.subr.mxu0 0.0
        %3628 = vmatpush1.msra.mxu0 0.0
        %3629 = vmatprep.subr.mxu0 0.0
        %3630 = vmatpush1.msra.mxu0 0.0
        %3631 = vmatprep.subr.mxu0 0.0
        %3632 = vmatpush1.msra.mxu0 0.0
        %3633 = vmatprep.subr.mxu0 0.0
        %3634 = vmatpush1.msra.mxu0 0.0
        %3635 = vmatprep.subr.mxu0 0.0
        %3636 = vmatpush1.msra.mxu0 0.0
        %3637 = vmatprep.subr.mxu0 0.0
        %3638 = vmatpush1.msra.mxu0 0.0
        %3639 = vmatprep.subr.mxu0 0.0
        %3640 = vmatpush1.msra.mxu0 0.0
        %3641 = vmatprep.subr.mxu0 0.0
        %3642 = vmatpush1.msra.mxu0 0.0
        %3643 = vmatprep.subr.mxu0 0.0
        %3644 = vmatpush1.msra.mxu0 0.0
        %3645 = vmatprep.subr.mxu0 0.0
        %3646 = vmatpush1.msra.mxu0 0.0
        %3647 = vmatprep.subr.mxu0 0.0
        %3648 = vmatpush1.msra.mxu0 0.0
        %3649 = vmatprep.subr.mxu0 0.0
        %3650 = vmatpush1.msra.mxu0 0.0
        %3651 = vmatprep.subr.mxu0 0.0
        %3652 = vmatpush1.msra.mxu0 0.0
        %3653 = vmatprep.subr.mxu0 0.0
        %3654 = vmatpush1.msra.mxu0 0.0
        %3655 = vmatprep.subr.mxu0 0.0
        %3656 = vmatpush1.msra.mxu0 0.0
        %3657 = vmatprep.mubr.f32.mxu0 0.0
        %3658 = vmatmul.mubr.f32.gmra.mrb[0].mxu0 %v3588
        %v3659 = vpop.f32.mrb[0].mxu0
        %v3660 = vadd.f32 0.0, %v3659
        %v3661 = vpop.f32.mrb[0].mxu0
        %3662 = vmatprep.mubr.f32.mxu0 0.0
        %3663 = vmatmul.mubr.f32.gmra.mrb[0].mxu0 %v3591
        %v3664 = vpop.f32.mrb[0].mxu0
        %v3665 = vadd.f32 0.0, %v3664
        %v3666 = vpop.f32.mrb[0].mxu0
        %3667 = vdwg.mxu0
        %v3668 = vadd.f32 %v3576, %v3660
        %v3669 = vadd.f32 %v3577, %v3665
        %s3670 = sadd.s32 %s1819, 4
        %s3671 = smul.u32 %s3670, 16
        %s3672 = scalar_lea.vmem [#allocation3], %s3671
        %v3673 = vld [vmem:[%s3672] sm:$0xff]
        %v3674 = vld [vmem:[%s3672 + $0x8] sm:$0x7]
        %s3675 = scalar_lea.vmem %s7, 960
        %v3676 = vld [vmem:[%s3675] sm:$0xff]
        %v3677 = vld [vmem:[%s3675 + $0x8] sm:$0xff]
        %v3678 = vld [vmem:[%s3675 + $0x10] sm:$0xff]
        %v3679 = vld [vmem:[%s3675 + $0x18] sm:$0xff]
        %v3680 = vld [vmem:[%s3675 + $0x20] sm:$0xff]
        %v3681 = vld [vmem:[%s3675 + $0x28] sm:$0xff]
        %v3683 = vsel %vm322, %v3673, 0
        %v3686 = vsel %vm322, %v3674, 0
        %3688 = vmatprep.subr.mxu0 0.0
        %3689 = vmatpush1.msra.mxu0 %v3676
        %3690 = vmatprep.subr.mxu0 0.0
        %3691 = vmatpush1.msra.mxu0 %v3677
        %3692 = vmatprep.subr.mxu0 0.0
        %3693 = vmatpush1.msra.mxu0 %v3678
        %3694 = vmatprep.subr.mxu0 0.0
        %3695 = vmatpush1.msra.mxu0 %v3679
        %3696 = vmatprep.subr.mxu0 0.0
        %3697 = vmatpush1.msra.mxu0 %v3680
        %3698 = vmatprep.subr.mxu0 0.0
        %3699 = vmatpush1.msra.mxu0 %v3681
        %3700 = vmatprep.subr.mxu0 0.0
        %3701 = vmatpush1.msra.mxu0 0.0
        %3702 = vmatprep.subr.mxu0 0.0
        %3703 = vmatpush1.msra.mxu0 0.0
        %3704 = vmatprep.subr.mxu0 0.0
        %3705 = vmatpush1.msra.mxu0 0.0
        %3706 = vmatprep.subr.mxu0 0.0
        %3707 = vmatpush1.msra.mxu0 0.0
        %3708 = vmatprep.subr.mxu0 0.0
        %3709 = vmatpush1.msra.mxu0 0.0
        %3710 = vmatprep.subr.mxu0 0.0
        %3711 = vmatpush1.msra.mxu0 0.0
        %3712 = vmatprep.subr.mxu0 0.0
        %3713 = vmatpush1.msra.mxu0 0.0
        %3714 = vmatprep.subr.mxu0 0.0
        %3715 = vmatpush1.msra.mxu0 0.0
        %3716 = vmatprep.subr.mxu0 0.0
        %3717 = vmatpush1.msra.mxu0 0.0
        %3718 = vmatprep.subr.mxu0 0.0
        %3719 = vmatpush1.msra.mxu0 0.0
        %3720 = vmatprep.subr.mxu0 0.0
        %3721 = vmatpush1.msra.mxu0 0.0
        %3722 = vmatprep.subr.mxu0 0.0
        %3723 = vmatpush1.msra.mxu0 0.0
        %3724 = vmatprep.subr.mxu0 0.0
        %3725 = vmatpush1.msra.mxu0 0.0
        %3726 = vmatprep.subr.mxu0 0.0
        %3727 = vmatpush1.msra.mxu0 0.0
        %3728 = vmatprep.subr.mxu0 0.0
        %3729 = vmatpush1.msra.mxu0 0.0
        %3730 = vmatprep.subr.mxu0 0.0
        %3731 = vmatpush1.msra.mxu0 0.0
        %3732 = vmatprep.subr.mxu0 0.0
        %3733 = vmatpush1.msra.mxu0 0.0
        %3734 = vmatprep.subr.mxu0 0.0
        %3735 = vmatpush1.msra.mxu0 0.0
        %3736 = vmatprep.subr.mxu0 0.0
        %3737 = vmatpush1.msra.mxu0 0.0
        %3738 = vmatprep.subr.mxu0 0.0
        %3739 = vmatpush1.msra.mxu0 0.0
        %3740 = vmatprep.subr.mxu0 0.0
        %3741 = vmatpush1.msra.mxu0 0.0
        %3742 = vmatprep.subr.mxu0 0.0
        %3743 = vmatpush1.msra.mxu0 0.0
        %3744 = vmatprep.subr.mxu0 0.0
        %3745 = vmatpush1.msra.mxu0 0.0
        %3746 = vmatprep.subr.mxu0 0.0
        %3747 = vmatpush1.msra.mxu0 0.0
        %3748 = vmatprep.subr.mxu0 0.0
        %3749 = vmatpush1.msra.mxu0 0.0
        %3750 = vmatprep.subr.mxu0 0.0
        %3751 = vmatpush1.msra.mxu0 0.0
        %3752 = vmatprep.mubr.f32.mxu0 0.0
        %3753 = vmatmul.mubr.f32.gmra.mrb[0].mxu0 %v3683
        %v3754 = vpop.f32.mrb[0].mxu0
        %v3755 = vadd.f32 0.0, %v3754
        %v3756 = vpop.f32.mrb[0].mxu0
        %3757 = vmatprep.mubr.f32.mxu0 0.0
        %3758 = vmatmul.mubr.f32.gmra.mrb[0].mxu0 %v3686
        %v3759 = vpop.f32.mrb[0].mxu0
        %v3760 = vadd.f32 0.0, %v3759
        %v3761 = vpop.f32.mrb[0].mxu0
        %3762 = vdwg.mxu0
        %v3763 = vadd.f32 %v3668, %v3755
        %v3764 = vadd.f32 %v3669, %v3760
        %v3765 = vld [vmem:[%s3672 + $0x1] sm:$0xff]
        %v3766 = vld [vmem:[%s3672 + $0x9] sm:$0x7]
        %s3767 = scalar_lea.vmem %s7, 1008
        %v3768 = vld [vmem:[%s3767] sm:$0xff]
        %v3769 = vld [vmem:[%s3767 + $0x8] sm:$0xff]
        %v3770 = vld [vmem:[%s3767 + $0x10] sm:$0xff]
        %v3771 = vld [vmem:[%s3767 + $0x18] sm:$0xff]
        %v3772 = vld [vmem:[%s3767 + $0x20] sm:$0xff]
        %v3773 = vld [vmem:[%s3767 + $0x28] sm:$0xff]
        %v3775 = vsel %vm322, %v3765, 0
        %v3778 = vsel %vm322, %v3766, 0
        %3780 = vmatprep.subr.mxu0 0.0
        %3781 = vmatpush1.msra.mxu0 %v3768
        %3782 = vmatprep.subr.mxu0 0.0
        %3783 = vmatpush1.msra.mxu0 %v3769
        %3784 = vmatprep.subr.mxu0 0.0
        %3785 = vmatpush1.msra.mxu0 %v3770
        %3786 = vmatprep.subr.mxu0 0.0
        %3787 = vmatpush1.msra.mxu0 %v3771
        %3788 = vmatprep.subr.mxu0 0.0
        %3789 = vmatpush1.msra.mxu0 %v3772
        %3790 = vmatprep.subr.mxu0 0.0
        %3791 = vmatpush1.msra.mxu0 %v3773
        %3792 = vmatprep.subr.mxu0 0.0
        %3793 = vmatpush1.msra.mxu0 0.0
        %3794 = vmatprep.subr.mxu0 0.0
        %3795 = vmatpush1.msra.mxu0 0.0
        %3796 = vmatprep.subr.mxu0 0.0
        %3797 = vmatpush1.msra.mxu0 0.0
        %3798 = vmatprep.subr.mxu0 0.0
        %3799 = vmatpush1.msra.mxu0 0.0
        %3800 = vmatprep.subr.mxu0 0.0
        %3801 = vmatpush1.msra.mxu0 0.0
        %3802 = vmatprep.subr.mxu0 0.0
        %3803 = vmatpush1.msra.mxu0 0.0
        %3804 = vmatprep.subr.mxu0 0.0
        %3805 = vmatpush1.msra.mxu0 0.0
        %3806 = vmatprep.subr.mxu0 0.0
        %3807 = vmatpush1.msra.mxu0 0.0
        %3808 = vmatprep.subr.mxu0 0.0
        %3809 = vmatpush1.msra.mxu0 0.0
        %3810 = vmatprep.subr.mxu0 0.0
        %3811 = vmatpush1.msra.mxu0 0.0
        %3812 = vmatprep.subr.mxu0 0.0
        %3813 = vmatpush1.msra.mxu0 0.0
        %3814 = vmatprep.subr.mxu0 0.0
        %3815 = vmatpush1.msra.mxu0 0.0
        %3816 = vmatprep.subr.mxu0 0.0
        %3817 = vmatpush1.msra.mxu0 0.0
        %3818 = vmatprep.subr.mxu0 0.0
        %3819 = vmatpush1.msra.mxu0 0.0
        %3820 = vmatprep.subr.mxu0 0.0
        %3821 = vmatpush1.msra.mxu0 0.0
        %3822 = vmatprep.subr.mxu0 0.0
        %3823 = vmatpush1.msra.mxu0 0.0
        %3824 = vmatprep.subr.mxu0 0.0
        %3825 = vmatpush1.msra.mxu0 0.0
        %3826 = vmatprep.subr.mxu0 0.0
        %3827 = vmatpush1.msra.mxu0 0.0
        %3828 = vmatprep.subr.mxu0 0.0
        %3829 = vmatpush1.msra.mxu0 0.0
        %3830 = vmatprep.subr.mxu0 0.0
        %3831 = vmatpush1.msra.mxu0 0.0
        %3832 = vmatprep.subr.mxu0 0.0
        %3833 = vmatpush1.msra.mxu0 0.0
        %3834 = vmatprep.subr.mxu0 0.0
        %3835 = vmatpush1.msra.mxu0 0.0
        %3836 = vmatprep.subr.mxu0 0.0
        %3837 = vmatpush1.msra.mxu0 0.0
        %3838 = vmatprep.subr.mxu0 0.0
        %3839 = vmatpush1.msra.mxu0 0.0
        %3840 = vmatprep.subr.mxu0 0.0
        %3841 = vmatpush1.msra.mxu0 0.0
        %3842 = vmatprep.subr.mxu0 0.0
        %3843 = vmatpush1.msra.mxu0 0.0
        %3844 = vmatprep.mubr.f32.mxu0 0.0
        %3845 = vmatmul.mubr.f32.gmra.mrb[0].mxu0 %v3775
        %v3846 = vpop.f32.mrb[0].mxu0
        %v3847 = vadd.f32 0.0, %v3846
        %v3848 = vpop.f32.mrb[0].mxu0
        %3849 = vmatprep.mubr.f32.mxu0 0.0
        %3850 = vmatmul.mubr.f32.gmra.mrb[0].mxu0 %v3778
        %v3851 = vpop.f32.mrb[0].mxu0
        %v3852 = vadd.f32 0.0, %v3851
        %v3853 = vpop.f32.mrb[0].mxu0
        %3854 = vdwg.mxu0
        %v3855 = vadd.f32 %v3763, %v3847
        %v3856 = vadd.f32 %v3764, %v3852
        %v3857 = vld [vmem:[%s3672 + $0x2] sm:$0xff]
        %v3858 = vld [vmem:[%s3672 + $0xa] sm:$0x7]
        %s3859 = scalar_lea.vmem %s7, 1056
        %v3860 = vld [vmem:[%s3859] sm:$0xff]
        %v3861 = vld [vmem:[%s3859 + $0x8] sm:$0xff]
        %v3862 = vld [vmem:[%s3859 + $0x10] sm:$0xff]
        %v3863 = vld [vmem:[%s3859 + $0x18] sm:$0xff]
        %v3864 = vld [vmem:[%s3859 + $0x20] sm:$0xff]
        %v3865 = vld [vmem:[%s3859 + $0x28] sm:$0xff]
        %v3867 = vsel %vm322, %v3857, 0
        %v3870 = vsel %vm322, %v3858, 0
        %3872 = vmatprep.subr.mxu0 0.0
        %3873 = vmatpush1.msra.mxu0 %v3860
        %3874 = vmatprep.subr.mxu0 0.0
        %3875 = vmatpush1.msra.mxu0 %v3861
        %3876 = vmatprep.subr.mxu0 0.0
        %3877 = vmatpush1.msra.mxu0 %v3862
        %3878 = vmatprep.subr.mxu0 0.0
        %3879 = vmatpush1.msra.mxu0 %v3863
        %3880 = vmatprep.subr.mxu0 0.0
        %3881 = vmatpush1.msra.mxu0 %v3864
        %3882 = vmatprep.subr.mxu0 0.0
        %3883 = vmatpush1.msra.mxu0 %v3865
        %3884 = vmatprep.subr.mxu0 0.0
        %3885 = vmatpush1.msra.mxu0 0.0
        %3886 = vmatprep.subr.mxu0 0.0
        %3887 = vmatpush1.msra.mxu0 0.0
        %3888 = vmatprep.subr.mxu0 0.0
        %3889 = vmatpush1.msra.mxu0 0.0
        %3890 = vmatprep.subr.mxu0 0.0
        %3891 = vmatpush1.msra.mxu0 0.0
        %3892 = vmatprep.subr.mxu0 0.0
        %3893 = vmatpush1.msra.mxu0 0.0
        %3894 = vmatprep.subr.mxu0 0.0
        %3895 = vmatpush1.msra.mxu0 0.0
        %3896 = vmatprep.subr.mxu0 0.0
        %3897 = vmatpush1.msra.mxu0 0.0
        %3898 = vmatprep.subr.mxu0 0.0
        %3899 = vmatpush1.msra.mxu0 0.0
        %3900 = vmatprep.subr.mxu0 0.0
        %3901 = vmatpush1.msra.mxu0 0.0
        %3902 = vmatprep.subr.mxu0 0.0
        %3903 = vmatpush1.msra.mxu0 0.0
        %3904 = vmatprep.subr.mxu0 0.0
        %3905 = vmatpush1.msra.mxu0 0.0
        %3906 = vmatprep.subr.mxu0 0.0
        %3907 = vmatpush1.msra.mxu0 0.0
        %3908 = vmatprep.subr.mxu0 0.0
        %3909 = vmatpush1.msra.mxu0 0.0
        %3910 = vmatprep.subr.mxu0 0.0
        %3911 = vmatpush1.msra.mxu0 0.0
        %3912 = vmatprep.subr.mxu0 0.0
        %3913 = vmatpush1.msra.mxu0 0.0
        %3914 = vmatprep.subr.mxu0 0.0
        %3915 = vmatpush1.msra.mxu0 0.0
        %3916 = vmatprep.subr.mxu0 0.0
        %3917 = vmatpush1.msra.mxu0 0.0
        %3918 = vmatprep.subr.mxu0 0.0
        %3919 = vmatpush1.msra.mxu0 0.0
        %3920 = vmatprep.subr.mxu0 0.0
        %3921 = vmatpush1.msra.mxu0 0.0
        %3922 = vmatprep.subr.mxu0 0.0
        %3923 = vmatpush1.msra.mxu0 0.0
        %3924 = vmatprep.subr.mxu0 0.0
        %3925 = vmatpush1.msra.mxu0 0.0
        %3926 = vmatprep.subr.mxu0 0.0
        %3927 = vmatpush1.msra.mxu0 0.0
        %3928 = vmatprep.subr.mxu0 0.0
        %3929 = vmatpush1.msra.mxu0 0.0
        %3930 = vmatprep.subr.mxu0 0.0
        %3931 = vmatpush1.msra.mxu0 0.0
        %3932 = vmatprep.subr.mxu0 0.0
        %3933 = vmatpush1.msra.mxu0 0.0
        %3934 = vmatprep.subr.mxu0 0.0
        %3935 = vmatpush1.msra.mxu0 0.0
        %3936 = vmatprep.mubr.f32.mxu0 0.0
        %3937 = vmatmul.mubr.f32.gmra.mrb[0].mxu0 %v3867
        %v3938 = vpop.f32.mrb[0].mxu0
        %v3939 = vadd.f32 0.0, %v3938
        %v3940 = vpop.f32.mrb[0].mxu0
        %3941 = vmatprep.mubr.f32.mxu0 0.0
        %3942 = vmatmul.mubr.f32.gmra.mrb[0].mxu0 %v3870
        %v3943 = vpop.f32.mrb[0].mxu0
        %v3944 = vadd.f32 0.0, %v3943
        %v3945 = vpop.f32.mrb[0].mxu0
        %3946 = vdwg.mxu0
        %v3947 = vadd.f32 %v3855, %v3939
        %v3948 = vadd.f32 %v3856, %v3944
        %v3949 = vld [vmem:[%s3672 + $0x3] sm:$0xff]
        %v3950 = vld [vmem:[%s3672 + $0xb] sm:$0x7]
        %s3951 = scalar_lea.vmem %s7, 1104
        %v3952 = vld [vmem:[%s3951] sm:$0xff]
        %v3953 = vld [vmem:[%s3951 + $0x8] sm:$0xff]
        %v3954 = vld [vmem:[%s3951 + $0x10] sm:$0xff]
        %v3955 = vld [vmem:[%s3951 + $0x18] sm:$0xff]
        %v3956 = vld [vmem:[%s3951 + $0x20] sm:$0xff]
        %v3957 = vld [vmem:[%s3951 + $0x28] sm:$0xff]
        %v3959 = vsel %vm322, %v3949, 0
        %v3962 = vsel %vm322, %v3950, 0
        %3964 = vmatprep.subr.mxu0 0.0
        %3965 = vmatpush1.msra.mxu0 %v3952
        %3966 = vmatprep.subr.mxu0 0.0
        %3967 = vmatpush1.msra.mxu0 %v3953
        %3968 = vmatprep.subr.mxu0 0.0
        %3969 = vmatpush1.msra.mxu0 %v3954
        %3970 = vmatprep.subr.mxu0 0.0
        %3971 = vmatpush1.msra.mxu0 %v3955
        %3972 = vmatprep.subr.mxu0 0.0
        %3973 = vmatpush1.msra.mxu0 %v3956
        %3974 = vmatprep.subr.mxu0 0.0
        %3975 = vmatpush1.msra.mxu0 %v3957
        %3976 = vmatprep.subr.mxu0 0.0
        %3977 = vmatpush1.msra.mxu0 0.0
        %3978 = vmatprep.subr.mxu0 0.0
        %3979 = vmatpush1.msra.mxu0 0.0
        %3980 = vmatprep.subr.mxu0 0.0
        %3981 = vmatpush1.msra.mxu0 0.0
        %3982 = vmatprep.subr.mxu0 0.0
        %3983 = vmatpush1.msra.mxu0 0.0
        %3984 = vmatprep.subr.mxu0 0.0
        %3985 = vmatpush1.msra.mxu0 0.0
        %3986 = vmatprep.subr.mxu0 0.0
        %3987 = vmatpush1.msra.mxu0 0.0
        %3988 = vmatprep.subr.mxu0 0.0
        %3989 = vmatpush1.msra.mxu0 0.0
        %3990 = vmatprep.subr.mxu0 0.0
        %3991 = vmatpush1.msra.mxu0 0.0
        %3992 = vmatprep.subr.mxu0 0.0
        %3993 = vmatpush1.msra.mxu0 0.0
        %3994 = vmatprep.subr.mxu0 0.0
        %3995 = vmatpush1.msra.mxu0 0.0
        %3996 = vmatprep.subr.mxu0 0.0
        %3997 = vmatpush1.msra.mxu0 0.0
        %3998 = vmatprep.subr.mxu0 0.0
        %3999 = vmatpush1.msra.mxu0 0.0
        %4000 = vmatprep.subr.mxu0 0.0
        %4001 = vmatpush1.msra.mxu0 0.0
        %4002 = vmatprep.subr.mxu0 0.0
        %4003 = vmatpush1.msra.mxu0 0.0
        %4004 = vmatprep.subr.mxu0 0.0
        %4005 = vmatpush1.msra.mxu0 0.0
        %4006 = vmatprep.subr.mxu0 0.0
        %4007 = vmatpush1.msra.mxu0 0.0
        %4008 = vmatprep.subr.mxu0 0.0
        %4009 = vmatpush1.msra.mxu0 0.0
        %4010 = vmatprep.subr.mxu0 0.0
        %4011 = vmatpush1.msra.mxu0 0.0
        %4012 = vmatprep.subr.mxu0 0.0
        %4013 = vmatpush1.msra.mxu0 0.0
        %4014 = vmatprep.subr.mxu0 0.0
        %4015 = vmatpush1.msra.mxu0 0.0
        %4016 = vmatprep.subr.mxu0 0.0
        %4017 = vmatpush1.msra.mxu0 0.0
        %4018 = vmatprep.subr.mxu0 0.0
        %4019 = vmatpush1.msra.mxu0 0.0
        %4020 = vmatprep.subr.mxu0 0.0
        %4021 = vmatpush1.msra.mxu0 0.0
        %4022 = vmatprep.subr.mxu0 0.0
        %4023 = vmatpush1.msra.mxu0 0.0
        %4024 = vmatprep.subr.mxu0 0.0
        %4025 = vmatpush1.msra.mxu0 0.0
        %4026 = vmatprep.subr.mxu0 0.0
        %4027 = vmatpush1.msra.mxu0 0.0
        %4028 = vmatprep.mubr.f32.mxu0 0.0
        %4029 = vmatmul.mubr.f32.gmra.mrb[0].mxu0 %v3959
        %v4030 = vpop.f32.mrb[0].mxu0
        %v4031 = vadd.f32 0.0, %v4030
        %v4032 = vpop.f32.mrb[0].mxu0
        %4033 = vmatprep.mubr.f32.mxu0 0.0
        %4034 = vmatmul.mubr.f32.gmra.mrb[0].mxu0 %v3962
        %v4035 = vpop.f32.mrb[0].mxu0
        %v4036 = vadd.f32 0.0, %v4035
        %v4037 = vpop.f32.mrb[0].mxu0
        %4038 = vdwg.mxu0
        %v4039 = vadd.f32 %v3947, %v4031
        %v4040 = vadd.f32 %v3948, %v4036
        %v4041 = vld [vmem:[%s3672 + $0x4] sm:$0xff]
        %v4042 = vld [vmem:[%s3672 + $0xc] sm:$0x7]
        %s4043 = scalar_lea.vmem %s7, 1152
        %v4044 = vld [vmem:[%s4043] sm:$0xff]
        %v4045 = vld [vmem:[%s4043 + $0x8] sm:$0xff]
        %v4046 = vld [vmem:[%s4043 + $0x10] sm:$0xff]
        %v4047 = vld [vmem:[%s4043 + $0x18] sm:$0xff]
        %v4048 = vld [vmem:[%s4043 + $0x20] sm:$0xff]
        %v4049 = vld [vmem:[%s4043 + $0x28] sm:$0xff]
        %v4051 = vsel %vm322, %v4041, 0
        %v4054 = vsel %vm322, %v4042, 0
        %4056 = vmatprep.subr.mxu0 0.0
        %4057 = vmatpush1.msra.mxu0 %v4044
        %4058 = vmatprep.subr.mxu0 0.0
        %4059 = vmatpush1.msra.mxu0 %v4045
        %4060 = vmatprep.subr.mxu0 0.0
        %4061 = vmatpush1.msra.mxu0 %v4046
        %4062 = vmatprep.subr.mxu0 0.0
        %4063 = vmatpush1.msra.mxu0 %v4047
        %4064 = vmatprep.subr.mxu0 0.0
        %4065 = vmatpush1.msra.mxu0 %v4048
        %4066 = vmatprep.subr.mxu0 0.0
        %4067 = vmatpush1.msra.mxu0 %v4049
        %4068 = vmatprep.subr.mxu0 0.0
        %4069 = vmatpush1.msra.mxu0 0.0
        %4070 = vmatprep.subr.mxu0 0.0
        %4071 = vmatpush1.msra.mxu0 0.0
        %4072 = vmatprep.subr.mxu0 0.0
        %4073 = vmatpush1.msra.mxu0 0.0
        %4074 = vmatprep.subr.mxu0 0.0
        %4075 = vmatpush1.msra.mxu0 0.0
        %4076 = vmatprep.subr.mxu0 0.0
        %4077 = vmatpush1.msra.mxu0 0.0
        %4078 = vmatprep.subr.mxu0 0.0
        %4079 = vmatpush1.msra.mxu0 0.0
        %4080 = vmatprep.subr.mxu0 0.0
        %4081 = vmatpush1.msra.mxu0 0.0
        %4082 = vmatprep.subr.mxu0 0.0
        %4083 = vmatpush1.msra.mxu0 0.0
        %4084 = vmatprep.subr.mxu0 0.0
        %4085 = vmatpush1.msra.mxu0 0.0
        %4086 = vmatprep.subr.mxu0 0.0
        %4087 = vmatpush1.msra.mxu0 0.0
        %4088 = vmatprep.subr.mxu0 0.0
        %4089 = vmatpush1.msra.mxu0 0.0
        %4090 = vmatprep.subr.mxu0 0.0
        %4091 = vmatpush1.msra.mxu0 0.0
        %4092 = vmatprep.subr.mxu0 0.0
        %4093 = vmatpush1.msra.mxu0 0.0
        %4094 = vmatprep.subr.mxu0 0.0
        %4095 = vmatpush1.msra.mxu0 0.0
        %4096 = vmatprep.subr.mxu0 0.0
        %4097 = vmatpush1.msra.mxu0 0.0
        %4098 = vmatprep.subr.mxu0 0.0
        %4099 = vmatpush1.msra.mxu0 0.0
        %4100 = vmatprep.subr.mxu0 0.0
        %4101 = vmatpush1.msra.mxu0 0.0
        %4102 = vmatprep.subr.mxu0 0.0
        %4103 = vmatpush1.msra.mxu0 0.0
        %4104 = vmatprep.subr.mxu0 0.0
        %4105 = vmatpush1.msra.mxu0 0.0
        %4106 = vmatprep.subr.mxu0 0.0
        %4107 = vmatpush1.msra.mxu0 0.0
        %4108 = vmatprep.subr.mxu0 0.0
        %4109 = vmatpush1.msra.mxu0 0.0
        %4110 = vmatprep.subr.mxu0 0.0
        %4111 = vmatpush1.msra.mxu0 0.0
        %4112 = vmatprep.subr.mxu0 0.0
        %4113 = vmatpush1.msra.mxu0 0.0
        %4114 = vmatprep.subr.mxu0 0.0
        %4115 = vmatpush1.msra.mxu0 0.0
        %4116 = vmatprep.subr.mxu0 0.0
        %4117 = vmatpush1.msra.mxu0 0.0
        %4118 = vmatprep.subr.mxu0 0.0
        %4119 = vmatpush1.msra.mxu0 0.0
        %4120 = vmatprep.mubr.f32.mxu0 0.0
        %4121 = vmatmul.mubr.f32.gmra.mrb[0].mxu0 %v4051
        %v4122 = vpop.f32.mrb[0].mxu0
        %v4123 = vadd.f32 0.0, %v4122
        %v4124 = vpop.f32.mrb[0].mxu0
        %4125 = vmatprep.mubr.f32.mxu0 0.0
        %4126 = vmatmul.mubr.f32.gmra.mrb[0].mxu0 %v4054
        %v4127 = vpop.f32.mrb[0].mxu0
        %v4128 = vadd.f32 0.0, %v4127
        %v4129 = vpop.f32.mrb[0].mxu0
        %4130 = vdwg.mxu0
        %v4131 = vadd.f32 %v4039, %v4123
        %v4132 = vadd.f32 %v4040, %v4128
        %v4133 = vsub.f32 0.0, %v4131
        %v4134 = vsub.f32 0.0, %v4132
        %v4135 = vmul.f32 %v4133, 1.442695
        %v4136 = vpow.pop %v4135
        %v4137 = vmul.f32 %v4134, 1.442695
        %v4138 = vpow.pop %v4137
        %v4139 = vadd.f32 %v4136, 1.0
        %v4140 = vadd.f32 %v4138, 1.0
        %v4141 = vrcp.pop %v4139
        %v4142 = vmul.f32 1.0, %v4141
        %v4143 = vrcp.pop %v4140
        %v4144 = vmul.f32 1.0, %v4143
        %s4145 = scalar_lea.vmem %s305, %s1824
        %vm4146 = vcmask 261120
        %4147 = vst.msk [vmem:[%s4145] sm:$0xff] %vm4146, %v4142
        %vm4148 = vcmask 256000
        %4149 = vst.msk [vmem:[%s4145 + $0x8] sm:$0x7] %vm4148, %v4144
      $region71: #{tfblock_v3_forward.1} parent=51 // loop_footer
        %s1823 = sadd.s32 1, %s1819
      $region72: #{tfblock_v3_forward.1} parent=51 // loop_footer_branch
        %1818 = sbr.rel target = $region68
      $region73: #{tfblock_v3_forward.1} parent=51 // loop_exit
        _
      %p4150 = scmp.lt.s32.totalorder %s19, 1
      %s4151 = scalar_select %p4150, %s19, 1
      %s4152 = smul.addr %s4151, 18
      %s4153 = smul.addr %s4152, 8
      %s4154 = scalar_lea.vmem %s8, %s4153
      // Predicated region
      $region74: #{tfblock_v3_forward.1} parent=51 // pred_check
        %p4155 = pneg %p210
      $region75: #{tfblock_v3_forward.1} parent=51 // pred_check_branch
        %4157 = sbr.rel (%p4155) target = $region77
      $region76: #{tfblock_v3_forward.1} parent=51 // pred_region
        _
      $region77: #{tfblock_v3_forward.1} parent=51 // pred_fallthru
        _
    $region52: #{tfblock_v3_forward.1} parent=5 // pred_fallthru
      _
    %p4158 = scmp.le.s32.totalorder 2, %s14
    // Predicated region
    $region78: #{tfblock_v3_forward.1} parent=5 // pred_check
      %p4159 = pneg %p4158
    $region79: #{tfblock_v3_forward.1} parent=5 // pred_check_branch
      %4161 = sbr.rel (%p4159) target = $region81
    $region80: #{tfblock_v3_forward.1} parent=5 // pred_region
      %s4162 = ssub.s32 %s14, 2
      // Predicated region
      $region82: #{tfblock_v3_forward.1} parent=80 // pred_check
        %p4163 = pneg %p216
      $region83: #{tfblock_v3_forward.1} parent=80 // pred_check_branch
        %4165 = sbr.rel (%p4163) target = $region85
      $region84: #{tfblock_v3_forward.1} parent=80 // pred_region
        %p4166 = scmp.lt.s32.totalorder %s20, 1
        %s4167 = scalar_select %p4166, %s20, 1
        %s4168 = smul.addr %s4167, 18
        %s4169 = smul.addr %s4168, 8
        %s4170 = scalar_lea.vmem %s8, %s4169
      $region85: #{tfblock_v3_forward.1} parent=80 // pred_fallthru
        _
    $region81: #{tfblock_v3_forward.1} parent=5 // pred_fallthru
      _
  $region6: #{tfblock_v3_forward.1} parent=0 // loop_footer
    %s18 = sadd.s32 1, %s14
  $region7: #{tfblock_v3_forward.1} parent=0 // loop_footer_branch
    %13 = sbr.rel target = $region3
  $region8: #{tfblock_v3_forward.1} parent=0 // loop_exit
    _

</llo_original>
